<compile_context>
chip_gen: v7x
topology: tpu7x:2x2x1
jax: 0.10.0
libtpu: 0.0.40
codegen_flags: <defaults>
</compile_context>

<pallas_src>
import functools

import jax
import jax.numpy as jnp
from jax.experimental import pallas as pl
from jax.experimental.pallas import tpu as pltpu

LARGE_SIZE = 32 * 32 + 16 * 16 + 8 * 8          # 1344
LAYER_SIZES = [800, 512, 256, 64]
OUT_CLASSES = 10
_DIMS = [LARGE_SIZE] + LAYER_SIZES + [OUT_CLASSES]

DEFAULT_BATCH_TILE = 256   # multiple of 256: keeps v6e's 2x256x256 MXU full


def _mlp_kernel(x_ref, w0_ref, w1_ref, w2_ref, w3_ref, w4_ref, out_ref):
    """Fused MLP forward for one batch tile: 5x (matmul + ReLU) then a
    numerically stable log-softmax over the last dim.

    Weights are full VMEM-resident blocks (constant index_map), so every
    matmul hits the MXU back-to-back with no HBM round-trips for activations.
    """
    h = x_ref[...].astype(jnp.float32)
    for w_ref in (w0_ref, w1_ref, w2_ref, w3_ref, w4_ref):
        w = w_ref[...]
        # Cast activations to the (possibly reduced-precision) weight dtype
        # for the MXU; accumulate in f32.
        h = jnp.dot(h.astype(w.dtype), w, preferred_element_type=jnp.float32)
        h = jnp.maximum(h, 0.0)                                   # ReLU

    # LogSoftmax(dim=1), in f32.
    m = jnp.max(h, axis=-1, keepdims=True)
    s = h - m
    lse = jnp.log(jnp.sum(jnp.exp(s), axis=-1, keepdims=True))
    out_ref[...] = (s - lse).astype(out_ref.dtype)


def prep_weights(torch_layout_weights, param_dtype=jnp.float32):
    """One-time weight prep, hoisted out of the serving path.

    Transposes torch-layout [out, in] -> [in, out] (so the kernel does h @ Wt)
    and optionally casts to a reduced dtype (e.g. bf16) for the mem-bound
    small-batch regime.
    """
    return tuple(jnp.asarray(w).astype(param_dtype).T
                 for w in torch_layout_weights)


@functools.partial(jax.jit, static_argnames=("batch_tile",))
def large_forward(x, wts_t, *, batch_tile=DEFAULT_BATCH_TILE):
    """x: [B, 1344].  wts_t: pre-transposed [in, out] weights (prep_weights)."""
    batch = x.shape[0]
    tb = min(batch_tile, batch)            # single block when batch is small
    grid = (pl.cdiv(batch, tb),)

    # --- VMEM budget: resident weights (x2 for buffer bookkeeping),
    #     double-buffered x/out tiles, live activations, small margin. ---
    w_bytes = sum(int(w.size) * w.dtype.itemsize for w in wts_t)
    x_tile_bytes = tb * LARGE_SIZE * x.dtype.itemsize
    act_bytes = tb * sum(LAYER_SIZES + [OUT_CLASSES]) * 4
    out_tile_bytes = tb * OUT_CLASSES * 4
    vmem_budget = int(2 * w_bytes + 2 * x_tile_bytes + act_bytes
                      + 2 * out_tile_bytes + (4 << 20))
    vmem_budget = min(vmem_budget, 56 << 20)   # stay inside v7x's 64 MiB VMEM

    # --- Scheduler hints. ---
    flops = 2 * batch * sum(a * b for a, b in zip(_DIMS[:-1], _DIMS[1:]))
    bytes_accessed = (w_bytes
                      + int(x.size) * x.dtype.itemsize
                      + batch * OUT_CLASSES * 4)
    cost = pl.CostEstimate(flops=flops,
                           transcendentals=batch * OUT_CLASSES,
                           bytes_accessed=bytes_accessed)

    in_specs = [pl.BlockSpec((tb, LARGE_SIZE), lambda i: (i, 0))]
    # Weights: full-array blocks, constant index_map -> fetched once and kept
    # VMEM-resident across all batch tiles.
    in_specs += [pl.BlockSpec(w.shape, lambda i: (0, 0)) for w in wts_t]
    out_spec = pl.BlockSpec((tb, OUT_CLASSES), lambda i: (i, 0))

    return pl.pallas_call(
        _mlp_kernel,
        out_shape=jax.ShapeDtypeStruct((batch, OUT_CLASSES), jnp.float32),
        grid=grid,
        in_specs=in_specs,
        out_specs=out_spec,
        compiler_params=pltpu.CompilerParams(
            dimension_semantics=("parallel",),   # batch axis -> megacore-shardable
            vmem_limit_bytes=vmem_budget),
        cost_estimate=cost,
    )(x, *wts_t)


def init_weights(key):
    """Deterministic init matching torch.nn.Linear default scale:
    U(-1/sqrt(fan_in), 1/sqrt(fan_in)); bias=False so weights only.
    Returned in torch layout [out_features, in_features]."""
    weights = []
    for fan_in, fan_out in zip(_DIMS[:-1], _DIMS[1:]):
        key, sub = jax.random.split(key)
        bound = 1.0 / jnp.sqrt(fan_in)
        weights.append(
            jax.random.uniform(sub, (fan_out, fan_in), jnp.float32, -bound, bound)
        )
    return weights


def reference_forward(x, weights):
    """Pure-JAX reference mirroring the PyTorch forward exactly."""
    h = x
    for w in weights:
        h = jnp.maximum(h @ w.T, 0.0)
    return jax.nn.log_softmax(h, axis=1)


if __name__ == "__main__":
    key = jax.random.PRNGKey(0)
    key, xkey = jax.random.split(key)

    weights = init_weights(key)          # torch layout [out, in]
    wts_t = prep_weights(weights)        # one-time transpose -> [in, out]

    # Small batch: single tile (tb == batch).
    batch = 8
    x = jax.random.normal(xkey, (batch, LARGE_SIZE), jnp.float32)
    out = jax.block_until_ready(large_forward(x, wts_t))
    ref = reference_forward(x, weights)
    assert out.shape == (batch, OUT_CLASSES), out.shape
    assert jnp.allclose(out, ref, atol=1e-4, rtol=1e-4), (
        float(jnp.max(jnp.abs(out - ref))))

    # Larger batch with a ragged last tile: exercises the batch grid +
    # VMEM-resident weight reuse path.
    key, xkey2 = jax.random.split(key)
    batch2 = 160
    x2 = jax.random.normal(xkey2, (batch2, LARGE_SIZE), jnp.float32)
    out2 = jax.block_until_ready(large_forward(x2, wts_t, batch_tile=64))
    ref2 = reference_forward(x2, weights)
    assert out2.shape == (batch2, OUT_CLASSES), out2.shape
    assert jnp.allclose(out2, ref2, atol=1e-4, rtol=1e-4), (
        float(jnp.max(jnp.abs(out2 - ref2))))

    # TODO(synk): for v7x, optionally store W0 in fp8 (65% of weight bytes) to
    # further cut the weight-DMA-bound small-batch latency.

    print("KERNEL_OK")
</pallas_src>

<mosaic_0001>
module attributes {stable_mosaic.version = 11 : i64} {
  func.func @_mlp_kernel(%arg0: i32, %arg1: memref<8x1344xf32, #tpu.memory_space<vmem>>, %arg2: memref<1344x800xf32, #tpu.memory_space<vmem>>, %arg3: memref<800x512xf32, #tpu.memory_space<vmem>>, %arg4: memref<512x256xf32, #tpu.memory_space<vmem>>, %arg5: memref<256x64xf32, #tpu.memory_space<vmem>>, %arg6: memref<64x10xf32, #tpu.memory_space<vmem>>, %arg7: memref<8x10xf32, #tpu.memory_space<vmem>>) attributes {dimension_semantics = [#tpu.dimension_semantics<parallel>], iteration_bounds = array<i64: 1>, scalar_prefetch = 0 : i64, scratch_operands = 0 : i64, tpu.core_type = #tpu.core_type<tc>, window_params = [{transform_indices = @transform_0, window_bounds = array<i64: 8, 1344>}, {pipeline_mode = #tpu.pipeline_mode<synchronous>, transform_indices = @transform_1, window_bounds = array<i64: 1344, 800>}, {pipeline_mode = #tpu.pipeline_mode<synchronous>, transform_indices = @transform_2, window_bounds = array<i64: 800, 512>}, {pipeline_mode = #tpu.pipeline_mode<synchronous>, transform_indices = @transform_3, window_bounds = array<i64: 512, 256>}, {pipeline_mode = #tpu.pipeline_mode<synchronous>, transform_indices = @transform_4, window_bounds = array<i64: 256, 64>}, {pipeline_mode = #tpu.pipeline_mode<synchronous>, transform_indices = @transform_5, window_bounds = array<i64: 64, 10>}, {transform_indices = @transform_6, window_bounds = array<i64: 8, 10>}]} {
    %c0 = arith.constant 0 : index
    %c0_0 = arith.constant 0 : index
    %0 = vector.load %arg1[%c0, %c0_0] : memref<8x1344xf32, #tpu.memory_space<vmem>>, vector<8x1344xf32>
    %c0_1 = arith.constant 0 : index
    %c0_2 = arith.constant 0 : index
    %1 = vector.load %arg2[%c0_1, %c0_2] : memref<1344x800xf32, #tpu.memory_space<vmem>>, vector<1344x800xf32>
    %cst = arith.constant dense<0.000000e+00> : vector<8x800xf32>
    %2 = tpu.matmul %0, %1, %cst {dimension_numbers = #tpu.dot_dimension_numbers<[1], [0], [0], [1], [0, 0, 1, 1], [], []>} : vector<8x1344xf32>, vector<1344x800xf32>, vector<8x800xf32> -> vector<8x800xf32>
    %cst_3 = arith.constant 0.000000e+00 : f32
    %3 = vector.broadcast %cst_3 : f32 to vector<8x800xf32>
    %4 = arith.maximumf %2, %3 : vector<8x800xf32>
    %c0_4 = arith.constant 0 : index
    %c0_5 = arith.constant 0 : index
    %5 = vector.load %arg3[%c0_4, %c0_5] : memref<800x512xf32, #tpu.memory_space<vmem>>, vector<800x512xf32>
    %cst_6 = arith.constant dense<0.000000e+00> : vector<8x512xf32>
    %6 = tpu.matmul %4, %5, %cst_6 {dimension_numbers = #tpu.dot_dimension_numbers<[1], [0], [0], [1], [0, 0, 1, 1], [], []>} : vector<8x800xf32>, vector<800x512xf32>, vector<8x512xf32> -> vector<8x512xf32>
    %cst_7 = arith.constant 0.000000e+00 : f32
    %7 = vector.broadcast %cst_7 : f32 to vector<8x512xf32>
    %8 = arith.maximumf %6, %7 : vector<8x512xf32>
    %c0_8 = arith.constant 0 : index
    %c0_9 = arith.constant 0 : index
    %9 = vector.load %arg4[%c0_8, %c0_9] : memref<512x256xf32, #tpu.memory_space<vmem>>, vector<512x256xf32>
    %cst_10 = arith.constant dense<0.000000e+00> : vector<8x256xf32>
    %10 = tpu.matmul %8, %9, %cst_10 {dimension_numbers = #tpu.dot_dimension_numbers<[1], [0], [0], [1], [0, 0, 1, 1], [], []>} : vector<8x512xf32>, vector<512x256xf32>, vector<8x256xf32> -> vector<8x256xf32>
    %cst_11 = arith.constant 0.000000e+00 : f32
    %11 = vector.broadcast %cst_11 : f32 to vector<8x256xf32>
    %12 = arith.maximumf %10, %11 : vector<8x256xf32>
    %c0_12 = arith.constant 0 : index
    %c0_13 = arith.constant 0 : index
    %13 = vector.load %arg5[%c0_12, %c0_13] : memref<256x64xf32, #tpu.memory_space<vmem>>, vector<256x64xf32>
    %cst_14 = arith.constant dense<0.000000e+00> : vector<8x64xf32>
    %14 = tpu.matmul %12, %13, %cst_14 {dimension_numbers = #tpu.dot_dimension_numbers<[1], [0], [0], [1], [0, 0, 1, 1], [], []>} : vector<8x256xf32>, vector<256x64xf32>, vector<8x64xf32> -> vector<8x64xf32>
    %cst_15 = arith.constant 0.000000e+00 : f32
    %15 = vector.broadcast %cst_15 : f32 to vector<8x64xf32>
    %16 = arith.maximumf %14, %15 : vector<8x64xf32>
    %c0_16 = arith.constant 0 : index
    %c0_17 = arith.constant 0 : index
    %17 = vector.load %arg6[%c0_16, %c0_17] : memref<64x10xf32, #tpu.memory_space<vmem>>, vector<64x10xf32>
    %cst_18 = arith.constant dense<0.000000e+00> : vector<8x10xf32>
    %18 = tpu.matmul %16, %17, %cst_18 {dimension_numbers = #tpu.dot_dimension_numbers<[1], [0], [0], [1], [0, 0, 1, 1], [], []>} : vector<8x64xf32>, vector<64x10xf32>, vector<8x10xf32> -> vector<8x10xf32>
    %cst_19 = arith.constant 0.000000e+00 : f32
    %19 = vector.broadcast %cst_19 : f32 to vector<8x10xf32>
    %20 = arith.maximumf %18, %19 : vector<8x10xf32>
    %cst_20 = arith.constant dense<0xFF800000> : vector<8xf32>
    %21 = vector.multi_reduction <maximumf>, %20, %cst_20 [1] : vector<8x10xf32> to vector<8xf32>
    %22 = vector.shape_cast %21 : vector<8xf32> to vector<8x1xf32>
    %23 = vector.broadcast %22 : vector<8x1xf32> to vector<8x10xf32>
    %24 = arith.subf %20, %23 : vector<8x10xf32>
    %25 = math.exp %24 : vector<8x10xf32>
    %cst_21 = arith.constant dense<0.000000e+00> : vector<8xf32>
    %26 = vector.multi_reduction <add>, %25, %cst_21 [1] : vector<8x10xf32> to vector<8xf32>
    %27 = vector.shape_cast %26 : vector<8xf32> to vector<8x1xf32>
    %28 = math.log %27 : vector<8x1xf32>
    %29 = vector.broadcast %28 : vector<8x1xf32> to vector<8x10xf32>
    %30 = arith.subf %24, %29 : vector<8x10xf32>
    %c0_22 = arith.constant 0 : index
    %c0_23 = arith.constant 0 : index
    %31 = vector.load %arg7[%c0_22, %c0_23] : memref<8x10xf32, #tpu.memory_space<vmem>>, vector<8x10xf32>
    tpu.vector_store %arg7[%c0_22, %c0_23], %30 {strides = array<i32>} : memref<8x10xf32, #tpu.memory_space<vmem>>, vector<8x10xf32>,
    return
  }
  func.func @transform_0(%arg0: i32) -> (i32, i32) {
    %c0_i32 = arith.constant 0 : i32
    %c0_i32_0 = arith.constant 0 : i32
    return %arg0, %c0_i32 : i32, i32
  }
  func.func @transform_1(%arg0: i32) -> (i32, i32) {
    %c0_i32 = arith.constant 0 : i32
    %c0_i32_0 = arith.constant 0 : i32
    %c0_i32_1 = arith.constant 0 : i32
    return %c0_i32, %c0_i32_0 : i32, i32
  }
  func.func @transform_2(%arg0: i32) -> (i32, i32) {
    %c0_i32 = arith.constant 0 : i32
    %c0_i32_0 = arith.constant 0 : i32
    %c0_i32_1 = arith.constant 0 : i32
    return %c0_i32, %c0_i32_0 : i32, i32
  }
  func.func @transform_3(%arg0: i32) -> (i32, i32) {
    %c0_i32 = arith.constant 0 : i32
    %c0_i32_0 = arith.constant 0 : i32
    %c0_i32_1 = arith.constant 0 : i32
    return %c0_i32, %c0_i32_0 : i32, i32
  }
  func.func @transform_4(%arg0: i32) -> (i32, i32) {
    %c0_i32 = arith.constant 0 : i32
    %c0_i32_0 = arith.constant 0 : i32
    %c0_i32_1 = arith.constant 0 : i32
    return %c0_i32, %c0_i32_0 : i32, i32
  }
  func.func @transform_5(%arg0: i32) -> (i32, i32) {
    %c0_i32 = arith.constant 0 : i32
    %c0_i32_0 = arith.constant 0 : i32
    %c0_i32_1 = arith.constant 0 : i32
    return %c0_i32, %c0_i32_0 : i32, i32
  }
  func.func @transform_6(%arg0: i32) -> (i32, i32) {
    %c0_i32 = arith.constant 0 : i32
    %c0_i32_0 = arith.constant 0 : i32
    return %arg0, %c0_i32 : i32, i32
  }
}

</mosaic_0001>

<llo_original>
// kernel: large_forward.1
$region0: #{large_forward.1}
  #allocation0 [shape = 'u32[]', space=smem, size = 0x4, offset = 0x4, fixed_abs, tag = 'smem constant byte address 0x4 - core index']
  #allocation1 [shape = 'u32[144,128]{1,0:T(1,128)}', space=vmem, size = 0x12000, scoped, tag = 'internal scratch']
  %s0 = inlined_call_operand.vmem [shape: f32[8,1344], index: 0, kind: input, shape index: {}]
  %s1 = inlined_call_operand.vmem [shape: f32[1344,800], index: 1, kind: input, shape index: {}]
  %s2 = inlined_call_operand.vmem [shape: f32[800,512], index: 2, kind: input, shape index: {}]
  %s3 = inlined_call_operand.vmem [shape: f32[512,256], index: 3, kind: input, shape index: {}]
  %s4 = inlined_call_operand.vmem [shape: f32[256,64], index: 4, kind: input, shape index: {}]
  %s5 = inlined_call_operand.vmem [shape: f32[64,10], index: 5, kind: input, shape index: {}]
  %s6 = inlined_call_operand.hbm [shape: f32[8,10], index: 6, kind: output, shape index: {}]
  %s7 = sld [smem:[#allocation0]]
  $region34: #{large_forward.1} parent=0
    _
  %s9 = ssub.s32 1, %s7
  %s10 = scalar_select 0, %s9, %s7
  $region1: #{large_forward.1} parent=0
    #allocation2 [shape = 'u8[4096]{0}', space=vmem, size = 0x1000, scoped, tag = 'output window, operand 0, single buffered']
    #allocation3 [shape = 's32[1]{0}', space=sflag, size = 0x4, scoped, tag = 'scoped memory for large_forward.1']
    %11 = vsyncpa [#allocation3], 0
    // Predicated region
    $region2: #{large_forward.1} parent=1 // pred_check
      _
    $region3: #{large_forward.1} parent=1 // pred_check_branch
      %13 = sbr.rel (0) target = $region5
    $region4: #{large_forward.1} parent=1 // pred_region
      _
    $region5: #{large_forward.1} parent=1 // pred_fallthru
      _
    // Predicated region
    $region6: #{large_forward.1} parent=1 // pred_check
      _
    $region7: #{large_forward.1} parent=1 // pred_check_branch
      %15 = sbr.rel (0) target = $region9
    $region8: #{large_forward.1} parent=1 // pred_region
      _
    $region9: #{large_forward.1} parent=1 // pred_fallthru
      _
    // Predicated region
    $region10: #{large_forward.1} parent=1 // pred_check
      _
    $region11: #{large_forward.1} parent=1 // pred_check_branch
      %17 = sbr.rel (0) target = $region13
    $region12: #{large_forward.1} parent=1 // pred_region
      _
    $region13: #{large_forward.1} parent=1 // pred_fallthru
      _
    // Predicated region
    $region14: #{large_forward.1} parent=1 // pred_check
      _
    $region15: #{large_forward.1} parent=1 // pred_check_branch
      %19 = sbr.rel (0) target = $region17
    $region16: #{large_forward.1} parent=1 // pred_region
      _
    $region17: #{large_forward.1} parent=1 // pred_fallthru
      _
    // Predicated region
    $region18: #{large_forward.1} parent=1 // pred_check
      _
    $region19: #{large_forward.1} parent=1 // pred_check_branch
      %21 = sbr.rel (0) target = $region21
    $region20: #{large_forward.1} parent=1 // pred_region
      _
    $region21: #{large_forward.1} parent=1 // pred_fallthru
      _
    // Predicated region
    $region22: #{large_forward.1} parent=1 // pred_check
      _
    $region23: #{large_forward.1} parent=1 // pred_check_branch
      %23 = sbr.rel (0) target = $region25
    $region24: #{large_forward.1} parent=1 // pred_region
      _
    $region25: #{large_forward.1} parent=1 // pred_fallthru
      _
    %v24 = vld [vmem:[%s0] sm:$0xff]
    %v25 = vld [vmem:[%s0 + $0x8] sm:$0xff]
    %v26 = vld [vmem:[%s0 + $0x10] sm:$0xff]
    %v27 = vld [vmem:[%s0 + $0x18] sm:$0xff]
    %v28 = vld [vmem:[%s0 + $0x20] sm:$0xff]
    %v29 = vld [vmem:[%s0 + $0x28] sm:$0xff]
    %v30 = vld [vmem:[%s0 + $0x30] sm:$0xff]
    %v31 = vld [vmem:[%s0 + $0x38] sm:$0xff]
    %v32 = vld [vmem:[%s0 + $0x40] sm:$0xff]
    %v33 = vld [vmem:[%s0 + $0x48] sm:$0xff]
    %v34 = vld [vmem:[%s0 + $0x50] sm:$0xff]
    %v35 = vld [vmem:[%s1] sm:$0xff]
    %v36 = vld [vmem:[%s1 + $0x8] sm:$0xff]
    %v37 = vld [vmem:[%s1 + $0x10] sm:$0xff]
    %v38 = vld [vmem:[%s1 + $0x18] sm:$0xff]
    %v39 = vld [vmem:[%s1 + $0x20] sm:$0xff]
    %v40 = vld [vmem:[%s1 + $0x28] sm:$0xff]
    %v41 = vld [vmem:[%s1 + $0x30] sm:$0xff]
    %v42 = vld [vmem:[%s1 + $0x38] sm:$0xff]
    %v43 = vld [vmem:[%s1 + $0x40] sm:$0xff]
    %v44 = vld [vmem:[%s1 + $0x48] sm:$0xff]
    %v45 = vld [vmem:[%s1 + $0x50] sm:$0xff]
    %v46 = vld [vmem:[%s1 + $0x58] sm:$0xff]
    %v47 = vld [vmem:[%s1 + $0x60] sm:$0xff]
    %v48 = vld [vmem:[%s1 + $0x68] sm:$0xff]
    %v49 = vld [vmem:[%s1 + $0x70] sm:$0xff]
    %v50 = vld [vmem:[%s1 + $0x78] sm:$0xff]
    %v51 = vld [vmem:[%s1 + $0x80] sm:$0xff]
    %v52 = vld [vmem:[%s1 + $0x88] sm:$0xff]
    %v53 = vld [vmem:[%s1 + $0x90] sm:$0xff]
    %v54 = vld [vmem:[%s1 + $0x98] sm:$0xff]
    %v55 = vld [vmem:[%s1 + $0xa0] sm:$0xff]
    %v56 = vld [vmem:[%s1 + $0xa8] sm:$0xff]
    %v57 = vld [vmem:[%s1 + $0xb0] sm:$0xff]
    %v58 = vld [vmem:[%s1 + $0xb8] sm:$0xff]
    %v59 = vld [vmem:[%s1 + $0xc0] sm:$0xff]
    %v60 = vld [vmem:[%s1 + $0xc8] sm:$0xff]
    %v61 = vld [vmem:[%s1 + $0xd0] sm:$0xff]
    %v62 = vld [vmem:[%s1 + $0xd8] sm:$0xff]
    %v63 = vld [vmem:[%s1 + $0xe0] sm:$0xff]
    %v64 = vld [vmem:[%s1 + $0xe8] sm:$0xff]
    %v65 = vld [vmem:[%s1 + $0xf0] sm:$0xff]
    %v66 = vld [vmem:[%s1 + $0xf8] sm:$0xff]
    %v67 = vld [vmem:[%s1 + $0x100] sm:$0xff]
    %v68 = vld [vmem:[%s1 + $0x108] sm:$0xff]
    %v69 = vld [vmem:[%s1 + $0x110] sm:$0xff]
    %v70 = vld [vmem:[%s1 + $0x118] sm:$0xff]
    %v71 = vld [vmem:[%s1 + $0x120] sm:$0xff]
    %v72 = vld [vmem:[%s1 + $0x128] sm:$0xff]
    %v73 = vld [vmem:[%s1 + $0x130] sm:$0xff]
    %v74 = vld [vmem:[%s1 + $0x138] sm:$0xff]
    %v75 = vld [vmem:[%s1 + $0x140] sm:$0xff]
    %v76 = vld [vmem:[%s1 + $0x148] sm:$0xff]
    %v77 = vld [vmem:[%s1 + $0x150] sm:$0xff]
    %v78 = vld [vmem:[%s1 + $0x158] sm:$0xff]
    %v79 = vld [vmem:[%s1 + $0x160] sm:$0xff]
    %v80 = vld [vmem:[%s1 + $0x168] sm:$0xff]
    %v81 = vld [vmem:[%s1 + $0x170] sm:$0xff]
    %v82 = vld [vmem:[%s1 + $0x178] sm:$0xff]
    %v83 = vld [vmem:[%s1 + $0x180] sm:$0xff]
    %v84 = vld [vmem:[%s1 + $0x188] sm:$0xff]
    %v85 = vld [vmem:[%s1 + $0x190] sm:$0xff]
    %v86 = vld [vmem:[%s1 + $0x198] sm:$0xff]
    %v87 = vld [vmem:[%s1 + $0x1a0] sm:$0xff]
    %v88 = vld [vmem:[%s1 + $0x1a8] sm:$0xff]
    %v89 = vld [vmem:[%s1 + $0x1b0] sm:$0xff]
    %v90 = vld [vmem:[%s1 + $0x1b8] sm:$0xff]
    %v91 = vld [vmem:[%s1 + $0x1c0] sm:$0xff]
    %v92 = vld [vmem:[%s1 + $0x1c8] sm:$0xff]
    %v93 = vld [vmem:[%s1 + $0x1d0] sm:$0xff]
    %v94 = vld [vmem:[%s1 + $0x1d8] sm:$0xff]
    %v95 = vld [vmem:[%s1 + $0x1e0] sm:$0xff]
    %v96 = vld [vmem:[%s1 + $0x1e8] sm:$0xff]
    %v97 = vld [vmem:[%s1 + $0x1f0] sm:$0xff]
    %v98 = vld [vmem:[%s1 + $0x1f8] sm:$0xff]
    %v99 = vld [vmem:[%s1 + $0x200] sm:$0xff]
    %v100 = vld [vmem:[%s1 + $0x208] sm:$0xff]
    %v101 = vld [vmem:[%s1 + $0x210] sm:$0xff]
    %v102 = vld [vmem:[%s1 + $0x218] sm:$0xff]
    %v103 = vld [vmem:[%s1 + $0x220] sm:$0xff]
    %v104 = vld [vmem:[%s1 + $0x228] sm:$0xff]
    %v105 = vld [vmem:[%s1 + $0x230] sm:$0xff]
    %v106 = vld [vmem:[%s1 + $0x238] sm:$0xff]
    %v107 = vld [vmem:[%s1 + $0x240] sm:$0xff]
    %v108 = vld [vmem:[%s1 + $0x248] sm:$0xff]
    %v109 = vld [vmem:[%s1 + $0x250] sm:$0xff]
    %v110 = vld [vmem:[%s1 + $0x258] sm:$0xff]
    %v111 = vld [vmem:[%s1 + $0x260] sm:$0xff]
    %v112 = vld [vmem:[%s1 + $0x268] sm:$0xff]
    %v113 = vld [vmem:[%s1 + $0x270] sm:$0xff]
    %v114 = vld [vmem:[%s1 + $0x278] sm:$0xff]
    %v115 = vld [vmem:[%s1 + $0x280] sm:$0xff]
    %v116 = vld [vmem:[%s1 + $0x288] sm:$0xff]
    %v117 = vld [vmem:[%s1 + $0x290] sm:$0xff]
    %v118 = vld [vmem:[%s1 + $0x298] sm:$0xff]
    %v119 = vld [vmem:[%s1 + $0x2a0] sm:$0xff]
    %v120 = vld [vmem:[%s1 + $0x2a8] sm:$0xff]
    %v121 = vld [vmem:[%s1 + $0x2b0] sm:$0xff]
    %v122 = vld [vmem:[%s1 + $0x2b8] sm:$0xff]
    %v123 = vld [vmem:[%s1 + $0x2c0] sm:$0xff]
    %v124 = vld [vmem:[%s1 + $0x2c8] sm:$0xff]
    %v125 = vld [vmem:[%s1 + $0x2d0] sm:$0xff]
    %v126 = vld [vmem:[%s1 + $0x2d8] sm:$0xff]
    %v127 = vld [vmem:[%s1 + $0x2e0] sm:$0xff]
    %v128 = vld [vmem:[%s1 + $0x2e8] sm:$0xff]
    %v129 = vld [vmem:[%s1 + $0x2f0] sm:$0xff]
    %v130 = vld [vmem:[%s1 + $0x2f8] sm:$0xff]
    %v131 = vld [vmem:[%s1 + $0x300] sm:$0xff]
    %v132 = vld [vmem:[%s1 + $0x308] sm:$0xff]
    %v133 = vld [vmem:[%s1 + $0x310] sm:$0xff]
    %v134 = vld [vmem:[%s1 + $0x318] sm:$0xff]
    %v135 = vld [vmem:[%s1 + $0x320] sm:$0xff]
    %v136 = vld [vmem:[%s1 + $0x328] sm:$0xff]
    %v137 = vld [vmem:[%s1 + $0x330] sm:$0xff]
    %v138 = vld [vmem:[%s1 + $0x338] sm:$0xff]
    %v139 = vld [vmem:[%s1 + $0x340] sm:$0xff]
    %v140 = vld [vmem:[%s1 + $0x348] sm:$0xff]
    %v141 = vld [vmem:[%s1 + $0x350] sm:$0xff]
    %v142 = vld [vmem:[%s1 + $0x358] sm:$0xff]
    %v143 = vld [vmem:[%s1 + $0x360] sm:$0xff]
    %v144 = vld [vmem:[%s1 + $0x368] sm:$0xff]
    %v145 = vld [vmem:[%s1 + $0x370] sm:$0xff]
    %v146 = vld [vmem:[%s1 + $0x378] sm:$0xff]
    %v147 = vld [vmem:[%s1 + $0x380] sm:$0xff]
    %v148 = vld [vmem:[%s1 + $0x388] sm:$0xff]
    %v149 = vld [vmem:[%s1 + $0x390] sm:$0xff]
    %v150 = vld [vmem:[%s1 + $0x398] sm:$0xff]
    %v151 = vld [vmem:[%s1 + $0x3a0] sm:$0xff]
    %v152 = vld [vmem:[%s1 + $0x3a8] sm:$0xff]
    %v153 = vld [vmem:[%s1 + $0x3b0] sm:$0xff]
    %v154 = vld [vmem:[%s1 + $0x3b8] sm:$0xff]
    %v155 = vld [vmem:[%s1 + $0x3c0] sm:$0xff]
    %v156 = vld [vmem:[%s1 + $0x3c8] sm:$0xff]
    %v157 = vld [vmem:[%s1 + $0x3d0] sm:$0xff]
    %v158 = vld [vmem:[%s1 + $0x3d8] sm:$0xff]
    %v159 = vld [vmem:[%s1 + $0x3e0] sm:$0xff]
    %v160 = vld [vmem:[%s1 + $0x3e8] sm:$0xff]
    %v161 = vld [vmem:[%s1 + $0x3f0] sm:$0xff]
    %v162 = vld [vmem:[%s1 + $0x3f8] sm:$0xff]
    %v163 = vld [vmem:[%s1 + $0x400] sm:$0xff]
    %v164 = vld [vmem:[%s1 + $0x408] sm:$0xff]
    %v165 = vld [vmem:[%s1 + $0x410] sm:$0xff]
    %v166 = vld [vmem:[%s1 + $0x418] sm:$0xff]
    %v167 = vld [vmem:[%s1 + $0x420] sm:$0xff]
    %v168 = vld [vmem:[%s1 + $0x428] sm:$0xff]
    %v169 = vld [vmem:[%s1 + $0x430] sm:$0xff]
    %v170 = vld [vmem:[%s1 + $0x438] sm:$0xff]
    %v171 = vld [vmem:[%s1 + $0x440] sm:$0xff]
    %v172 = vld [vmem:[%s1 + $0x448] sm:$0xff]
    %v173 = vld [vmem:[%s1 + $0x450] sm:$0xff]
    %v174 = vld [vmem:[%s1 + $0x458] sm:$0xff]
    %v175 = vld [vmem:[%s1 + $0x460] sm:$0xff]
    %v176 = vld [vmem:[%s1 + $0x468] sm:$0xff]
    %v177 = vld [vmem:[%s1 + $0x470] sm:$0xff]
    %v178 = vld [vmem:[%s1 + $0x478] sm:$0xff]
    %v179 = vld [vmem:[%s1 + $0x480] sm:$0xff]
    %v180 = vld [vmem:[%s1 + $0x488] sm:$0xff]
    %v181 = vld [vmem:[%s1 + $0x490] sm:$0xff]
    %v182 = vld [vmem:[%s1 + $0x498] sm:$0xff]
    %v183 = vld [vmem:[%s1 + $0x4a0] sm:$0xff]
    %v184 = vld [vmem:[%s1 + $0x4a8] sm:$0xff]
    %v185 = vld [vmem:[%s1 + $0x4b0] sm:$0xff]
    %v186 = vld [vmem:[%s1 + $0x4b8] sm:$0xff]
    %v187 = vld [vmem:[%s1 + $0x4c0] sm:$0xff]
    %v188 = vld [vmem:[%s1 + $0x4c8] sm:$0xff]
    %v189 = vld [vmem:[%s1 + $0x4d0] sm:$0xff]
    %v190 = vld [vmem:[%s1 + $0x4d8] sm:$0xff]
    %v191 = vld [vmem:[%s1 + $0x4e0] sm:$0xff]
    %v192 = vld [vmem:[%s1 + $0x4e8] sm:$0xff]
    %v193 = vld [vmem:[%s1 + $0x4f0] sm:$0xff]
    %v194 = vld [vmem:[%s1 + $0x4f8] sm:$0xff]
    %v195 = vld [vmem:[%s1 + $0x500] sm:$0xff]
    %v196 = vld [vmem:[%s1 + $0x508] sm:$0xff]
    %v197 = vld [vmem:[%s1 + $0x510] sm:$0xff]
    %v198 = vld [vmem:[%s1 + $0x518] sm:$0xff]
    %v199 = vld [vmem:[%s1 + $0x520] sm:$0xff]
    %v200 = vld [vmem:[%s1 + $0x528] sm:$0xff]
    %v201 = vld [vmem:[%s1 + $0x530] sm:$0xff]
    %v202 = vld [vmem:[%s1 + $0x538] sm:$0xff]
    %v203 = vld [vmem:[%s1 + $0x540] sm:$0xff]
    %v204 = vld [vmem:[%s1 + $0x548] sm:$0xff]
    %v205 = vld [vmem:[%s1 + $0x550] sm:$0xff]
    %v206 = vld [vmem:[%s1 + $0x558] sm:$0xff]
    %v207 = vld [vmem:[%s1 + $0x560] sm:$0xff]
    %v208 = vld [vmem:[%s1 + $0x568] sm:$0xff]
    %v209 = vld [vmem:[%s1 + $0x570] sm:$0xff]
    %v210 = vld [vmem:[%s1 + $0x578] sm:$0xff]
    %v211 = vld [vmem:[%s1 + $0x580] sm:$0xff]
    %v212 = vld [vmem:[%s1 + $0x588] sm:$0xff]
    %v213 = vld [vmem:[%s1 + $0x590] sm:$0xff]
    %v214 = vld [vmem:[%s1 + $0x598] sm:$0xff]
    %v215 = vld [vmem:[%s1 + $0x5a0] sm:$0xff]
    %v216 = vld [vmem:[%s1 + $0x5a8] sm:$0xff]
    %v217 = vld [vmem:[%s1 + $0x5b0] sm:$0xff]
    %v218 = vld [vmem:[%s1 + $0x5b8] sm:$0xff]
    %v219 = vld [vmem:[%s1 + $0x5c0] sm:$0xff]
    %v220 = vld [vmem:[%s1 + $0x5c8] sm:$0xff]
    %v221 = vld [vmem:[%s1 + $0x5d0] sm:$0xff]
    %v222 = vld [vmem:[%s1 + $0x5d8] sm:$0xff]
    %v223 = vld [vmem:[%s1 + $0x5e0] sm:$0xff]
    %v224 = vld [vmem:[%s1 + $0x5e8] sm:$0xff]
    %v225 = vld [vmem:[%s1 + $0x5f0] sm:$0xff]
    %v226 = vld [vmem:[%s1 + $0x5f8] sm:$0xff]
    %v227 = vld [vmem:[%s1 + $0x600] sm:$0xff]
    %v228 = vld [vmem:[%s1 + $0x608] sm:$0xff]
    %v229 = vld [vmem:[%s1 + $0x610] sm:$0xff]
    %v230 = vld [vmem:[%s1 + $0x618] sm:$0xff]
    %v231 = vld [vmem:[%s1 + $0x620] sm:$0xff]
    %v232 = vld [vmem:[%s1 + $0x628] sm:$0xff]
    %v233 = vld [vmem:[%s1 + $0x630] sm:$0xff]
    %v234 = vld [vmem:[%s1 + $0x638] sm:$0xff]
    %v235 = vld [vmem:[%s1 + $0x640] sm:$0xff]
    %v236 = vld [vmem:[%s1 + $0x648] sm:$0xff]
    %v237 = vld [vmem:[%s1 + $0x650] sm:$0xff]
    %v238 = vld [vmem:[%s1 + $0x658] sm:$0xff]
    %v239 = vld [vmem:[%s1 + $0x660] sm:$0xff]
    %v240 = vld [vmem:[%s1 + $0x668] sm:$0xff]
    %v241 = vld [vmem:[%s1 + $0x670] sm:$0xff]
    %v242 = vld [vmem:[%s1 + $0x678] sm:$0xff]
    %v243 = vld [vmem:[%s1 + $0x680] sm:$0xff]
    %v244 = vld [vmem:[%s1 + $0x688] sm:$0xff]
    %v245 = vld [vmem:[%s1 + $0x690] sm:$0xff]
    %v246 = vld [vmem:[%s1 + $0x698] sm:$0xff]
    %v247 = vld [vmem:[%s1 + $0x6a0] sm:$0xff]
    %v248 = vld [vmem:[%s1 + $0x6a8] sm:$0xff]
    %v249 = vld [vmem:[%s1 + $0x6b0] sm:$0xff]
    %v250 = vld [vmem:[%s1 + $0x6b8] sm:$0xff]
    %v251 = vld [vmem:[%s1 + $0x6c0] sm:$0xff]
    %v252 = vld [vmem:[%s1 + $0x6c8] sm:$0xff]
    %v253 = vld [vmem:[%s1 + $0x6d0] sm:$0xff]
    %v254 = vld [vmem:[%s1 + $0x6d8] sm:$0xff]
    %v255 = vld [vmem:[%s1 + $0x6e0] sm:$0xff]
    %v256 = vld [vmem:[%s1 + $0x6e8] sm:$0xff]
    %v257 = vld [vmem:[%s1 + $0x6f0] sm:$0xff]
    %v258 = vld [vmem:[%s1 + $0x6f8] sm:$0xff]
    %v259 = vld [vmem:[%s1 + $0x700] sm:$0xff]
    %v260 = vld [vmem:[%s1 + $0x708] sm:$0xff]
    %v261 = vld [vmem:[%s1 + $0x710] sm:$0xff]
    %v262 = vld [vmem:[%s1 + $0x718] sm:$0xff]
    %v263 = vld [vmem:[%s1 + $0x720] sm:$0xff]
    %v264 = vld [vmem:[%s1 + $0x728] sm:$0xff]
    %v265 = vld [vmem:[%s1 + $0x730] sm:$0xff]
    %v266 = vld [vmem:[%s1 + $0x738] sm:$0xff]
    %v267 = vld [vmem:[%s1 + $0x740] sm:$0xff]
    %v268 = vld [vmem:[%s1 + $0x748] sm:$0xff]
    %v269 = vld [vmem:[%s1 + $0x750] sm:$0xff]
    %v270 = vld [vmem:[%s1 + $0x758] sm:$0xff]
    %v271 = vld [vmem:[%s1 + $0x760] sm:$0xff]
    %v272 = vld [vmem:[%s1 + $0x768] sm:$0xff]
    %v273 = vld [vmem:[%s1 + $0x770] sm:$0xff]
    %v274 = vld [vmem:[%s1 + $0x778] sm:$0xff]
    %v275 = vld [vmem:[%s1 + $0x780] sm:$0xff]
    %v276 = vld [vmem:[%s1 + $0x788] sm:$0xff]
    %v277 = vld [vmem:[%s1 + $0x790] sm:$0xff]
    %v278 = vld [vmem:[%s1 + $0x798] sm:$0xff]
    %v279 = vld [vmem:[%s1 + $0x7a0] sm:$0xff]
    %v280 = vld [vmem:[%s1 + $0x7a8] sm:$0xff]
    %v281 = vld [vmem:[%s1 + $0x7b0] sm:$0xff]
    %v282 = vld [vmem:[%s1 + $0x7b8] sm:$0xff]
    %v283 = vld [vmem:[%s1 + $0x7c0] sm:$0xff]
    %v284 = vld [vmem:[%s1 + $0x7c8] sm:$0xff]
    %v285 = vld [vmem:[%s1 + $0x7d0] sm:$0xff]
    %v286 = vld [vmem:[%s1 + $0x7d8] sm:$0xff]
    %v287 = vld [vmem:[%s1 + $0x7e0] sm:$0xff]
    %v288 = vld [vmem:[%s1 + $0x7e8] sm:$0xff]
    %v289 = vld [vmem:[%s1 + $0x7f0] sm:$0xff]
    %v290 = vld [vmem:[%s1 + $0x7f8] sm:$0xff]
    %v291 = vld [vmem:[%s1 + $0x800] sm:$0xff]
    %v292 = vld [vmem:[%s1 + $0x808] sm:$0xff]
    %v293 = vld [vmem:[%s1 + $0x810] sm:$0xff]
    %v294 = vld [vmem:[%s1 + $0x818] sm:$0xff]
    %v295 = vld [vmem:[%s1 + $0x820] sm:$0xff]
    %v296 = vld [vmem:[%s1 + $0x828] sm:$0xff]
    %v297 = vld [vmem:[%s1 + $0x830] sm:$0xff]
    %v298 = vld [vmem:[%s1 + $0x838] sm:$0xff]
    %v299 = vld [vmem:[%s1 + $0x840] sm:$0xff]
    %v300 = vld [vmem:[%s1 + $0x848] sm:$0xff]
    %v301 = vld [vmem:[%s1 + $0x850] sm:$0xff]
    %v302 = vld [vmem:[%s1 + $0x858] sm:$0xff]
    %v303 = vld [vmem:[%s1 + $0x860] sm:$0xff]
    %v304 = vld [vmem:[%s1 + $0x868] sm:$0xff]
    %v305 = vld [vmem:[%s1 + $0x870] sm:$0xff]
    %v306 = vld [vmem:[%s1 + $0x878] sm:$0xff]
    %v307 = vld [vmem:[%s1 + $0x880] sm:$0xff]
    %v308 = vld [vmem:[%s1 + $0x888] sm:$0xff]
    %v309 = vld [vmem:[%s1 + $0x890] sm:$0xff]
    %v310 = vld [vmem:[%s1 + $0x898] sm:$0xff]
    %v311 = vld [vmem:[%s1 + $0x8a0] sm:$0xff]
    %v312 = vld [vmem:[%s1 + $0x8a8] sm:$0xff]
    %v313 = vld [vmem:[%s1 + $0x8b0] sm:$0xff]
    %v314 = vld [vmem:[%s1 + $0x8b8] sm:$0xff]
    %v315 = vld [vmem:[%s1 + $0x8c0] sm:$0xff]
    %v316 = vld [vmem:[%s1 + $0x8c8] sm:$0xff]
    %v317 = vld [vmem:[%s1 + $0x8d0] sm:$0xff]
    %v318 = vld [vmem:[%s1 + $0x8d8] sm:$0xff]
    %v319 = vld [vmem:[%s1 + $0x8e0] sm:$0xff]
    %v320 = vld [vmem:[%s1 + $0x8e8] sm:$0xff]
    %v321 = vld [vmem:[%s1 + $0x8f0] sm:$0xff]
    %v322 = vld [vmem:[%s1 + $0x8f8] sm:$0xff]
    %v323 = vld [vmem:[%s1 + $0x900] sm:$0xff]
    %v324 = vld [vmem:[%s1 + $0x908] sm:$0xff]
    %v325 = vld [vmem:[%s1 + $0x910] sm:$0xff]
    %v326 = vld [vmem:[%s1 + $0x918] sm:$0xff]
    %v327 = vld [vmem:[%s1 + $0x920] sm:$0xff]
    %v328 = vld [vmem:[%s1 + $0x928] sm:$0xff]
    %v329 = vld [vmem:[%s1 + $0x930] sm:$0xff]
    %v330 = vld [vmem:[%s1 + $0x938] sm:$0xff]
    %v331 = vld [vmem:[%s1 + $0x940] sm:$0xff]
    %v332 = vld [vmem:[%s1 + $0x948] sm:$0xff]
    %v333 = vld [vmem:[%s1 + $0x950] sm:$0xff]
    %v334 = vld [vmem:[%s1 + $0x958] sm:$0xff]
    %v335 = vld [vmem:[%s1 + $0x960] sm:$0xff]
    %v336 = vld [vmem:[%s1 + $0x968] sm:$0xff]
    %v337 = vld [vmem:[%s1 + $0x970] sm:$0xff]
    %v338 = vld [vmem:[%s1 + $0x978] sm:$0xff]
    %v339 = vld [vmem:[%s1 + $0x980] sm:$0xff]
    %v340 = vld [vmem:[%s1 + $0x988] sm:$0xff]
    %v341 = vld [vmem:[%s1 + $0x990] sm:$0xff]
    %v342 = vld [vmem:[%s1 + $0x998] sm:$0xff]
    %v343 = vld [vmem:[%s1 + $0x9a0] sm:$0xff]
    %v344 = vld [vmem:[%s1 + $0x9a8] sm:$0xff]
    %v345 = vld [vmem:[%s1 + $0x9b0] sm:$0xff]
    %v346 = vld [vmem:[%s1 + $0x9b8] sm:$0xff]
    %v347 = vld [vmem:[%s1 + $0x9c0] sm:$0xff]
    %v348 = vld [vmem:[%s1 + $0x9c8] sm:$0xff]
    %v349 = vld [vmem:[%s1 + $0x9d0] sm:$0xff]
    %v350 = vld [vmem:[%s1 + $0x9d8] sm:$0xff]
    %v351 = vld [vmem:[%s1 + $0x9e0] sm:$0xff]
    %v352 = vld [vmem:[%s1 + $0x9e8] sm:$0xff]
    %v353 = vld [vmem:[%s1 + $0x9f0] sm:$0xff]
    %v354 = vld [vmem:[%s1 + $0x9f8] sm:$0xff]
    %v355 = vld [vmem:[%s1 + $0xa00] sm:$0xff]
    %v356 = vld [vmem:[%s1 + $0xa08] sm:$0xff]
    %v357 = vld [vmem:[%s1 + $0xa10] sm:$0xff]
    %v358 = vld [vmem:[%s1 + $0xa18] sm:$0xff]
    %v359 = vld [vmem:[%s1 + $0xa20] sm:$0xff]
    %v360 = vld [vmem:[%s1 + $0xa28] sm:$0xff]
    %v361 = vld [vmem:[%s1 + $0xa30] sm:$0xff]
    %v362 = vld [vmem:[%s1 + $0xa38] sm:$0xff]
    %v363 = vld [vmem:[%s1 + $0xa40] sm:$0xff]
    %v364 = vld [vmem:[%s1 + $0xa48] sm:$0xff]
    %v365 = vld [vmem:[%s1 + $0xa50] sm:$0xff]
    %v366 = vld [vmem:[%s1 + $0xa58] sm:$0xff]
    %v367 = vld [vmem:[%s1 + $0xa60] sm:$0xff]
    %v368 = vld [vmem:[%s1 + $0xa68] sm:$0xff]
    %v369 = vld [vmem:[%s1 + $0xa70] sm:$0xff]
    %v370 = vld [vmem:[%s1 + $0xa78] sm:$0xff]
    %v371 = vld [vmem:[%s1 + $0xa80] sm:$0xff]
    %v372 = vld [vmem:[%s1 + $0xa88] sm:$0xff]
    %v373 = vld [vmem:[%s1 + $0xa90] sm:$0xff]
    %v374 = vld [vmem:[%s1 + $0xa98] sm:$0xff]
    %v375 = vld [vmem:[%s1 + $0xaa0] sm:$0xff]
    %v376 = vld [vmem:[%s1 + $0xaa8] sm:$0xff]
    %v377 = vld [vmem:[%s1 + $0xab0] sm:$0xff]
    %v378 = vld [vmem:[%s1 + $0xab8] sm:$0xff]
    %v379 = vld [vmem:[%s1 + $0xac0] sm:$0xff]
    %v380 = vld [vmem:[%s1 + $0xac8] sm:$0xff]
    %v381 = vld [vmem:[%s1 + $0xad0] sm:$0xff]
    %v382 = vld [vmem:[%s1 + $0xad8] sm:$0xff]
    %v383 = vld [vmem:[%s1 + $0xae0] sm:$0xff]
    %v384 = vld [vmem:[%s1 + $0xae8] sm:$0xff]
    %v385 = vld [vmem:[%s1 + $0xaf0] sm:$0xff]
    %v386 = vld [vmem:[%s1 + $0xaf8] sm:$0xff]
    %v387 = vld [vmem:[%s1 + $0xb00] sm:$0xff]
    %v388 = vld [vmem:[%s1 + $0xb08] sm:$0xff]
    %v389 = vld [vmem:[%s1 + $0xb10] sm:$0xff]
    %v390 = vld [vmem:[%s1 + $0xb18] sm:$0xff]
    %v391 = vld [vmem:[%s1 + $0xb20] sm:$0xff]
    %v392 = vld [vmem:[%s1 + $0xb28] sm:$0xff]
    %v393 = vld [vmem:[%s1 + $0xb30] sm:$0xff]
    %v394 = vld [vmem:[%s1 + $0xb38] sm:$0xff]
    %v395 = vld [vmem:[%s1 + $0xb40] sm:$0xff]
    %v396 = vld [vmem:[%s1 + $0xb48] sm:$0xff]
    %v397 = vld [vmem:[%s1 + $0xb50] sm:$0xff]
    %v398 = vld [vmem:[%s1 + $0xb58] sm:$0xff]
    %v399 = vld [vmem:[%s1 + $0xb60] sm:$0xff]
    %v400 = vld [vmem:[%s1 + $0xb68] sm:$0xff]
    %v401 = vld [vmem:[%s1 + $0xb70] sm:$0xff]
    %v402 = vld [vmem:[%s1 + $0xb78] sm:$0xff]
    %v403 = vld [vmem:[%s1 + $0xb80] sm:$0xff]
    %v404 = vld [vmem:[%s1 + $0xb88] sm:$0xff]
    %v405 = vld [vmem:[%s1 + $0xb90] sm:$0xff]
    %v406 = vld [vmem:[%s1 + $0xb98] sm:$0xff]
    %v407 = vld [vmem:[%s1 + $0xba0] sm:$0xff]
    %v408 = vld [vmem:[%s1 + $0xba8] sm:$0xff]
    %v409 = vld [vmem:[%s1 + $0xbb0] sm:$0xff]
    %v410 = vld [vmem:[%s1 + $0xbb8] sm:$0xff]
    %v411 = vld [vmem:[%s1 + $0xbc0] sm:$0xff]
    %v412 = vld [vmem:[%s1 + $0xbc8] sm:$0xff]
    %v413 = vld [vmem:[%s1 + $0xbd0] sm:$0xff]
    %v414 = vld [vmem:[%s1 + $0xbd8] sm:$0xff]
    %v415 = vld [vmem:[%s1 + $0xbe0] sm:$0xff]
    %v416 = vld [vmem:[%s1 + $0xbe8] sm:$0xff]
    %v417 = vld [vmem:[%s1 + $0xbf0] sm:$0xff]
    %v418 = vld [vmem:[%s1 + $0xbf8] sm:$0xff]
    %v419 = vld [vmem:[%s1 + $0xc00] sm:$0xff]
    %v420 = vld [vmem:[%s1 + $0xc08] sm:$0xff]
    %v421 = vld [vmem:[%s1 + $0xc10] sm:$0xff]
    %v422 = vld [vmem:[%s1 + $0xc18] sm:$0xff]
    %v423 = vld [vmem:[%s1 + $0xc20] sm:$0xff]
    %v424 = vld [vmem:[%s1 + $0xc28] sm:$0xff]
    %v425 = vld [vmem:[%s1 + $0xc30] sm:$0xff]
    %v426 = vld [vmem:[%s1 + $0xc38] sm:$0xff]
    %v427 = vld [vmem:[%s1 + $0xc40] sm:$0xff]
    %v428 = vld [vmem:[%s1 + $0xc48] sm:$0xff]
    %v429 = vld [vmem:[%s1 + $0xc50] sm:$0xff]
    %v430 = vld [vmem:[%s1 + $0xc58] sm:$0xff]
    %v431 = vld [vmem:[%s1 + $0xc60] sm:$0xff]
    %v432 = vld [vmem:[%s1 + $0xc68] sm:$0xff]
    %v433 = vld [vmem:[%s1 + $0xc70] sm:$0xff]
    %v434 = vld [vmem:[%s1 + $0xc78] sm:$0xff]
    %v435 = vld [vmem:[%s1 + $0xc80] sm:$0xff]
    %v436 = vld [vmem:[%s1 + $0xc88] sm:$0xff]
    %v437 = vld [vmem:[%s1 + $0xc90] sm:$0xff]
    %v438 = vld [vmem:[%s1 + $0xc98] sm:$0xff]
    %v439 = vld [vmem:[%s1 + $0xca0] sm:$0xff]
    %v440 = vld [vmem:[%s1 + $0xca8] sm:$0xff]
    %v441 = vld [vmem:[%s1 + $0xcb0] sm:$0xff]
    %v442 = vld [vmem:[%s1 + $0xcb8] sm:$0xff]
    %v443 = vld [vmem:[%s1 + $0xcc0] sm:$0xff]
    %v444 = vld [vmem:[%s1 + $0xcc8] sm:$0xff]
    %v445 = vld [vmem:[%s1 + $0xcd0] sm:$0xff]
    %v446 = vld [vmem:[%s1 + $0xcd8] sm:$0xff]
    %v447 = vld [vmem:[%s1 + $0xce0] sm:$0xff]
    %v448 = vld [vmem:[%s1 + $0xce8] sm:$0xff]
    %v449 = vld [vmem:[%s1 + $0xcf0] sm:$0xff]
    %v450 = vld [vmem:[%s1 + $0xcf8] sm:$0xff]
    %v451 = vld [vmem:[%s1 + $0xd00] sm:$0xff]
    %v452 = vld [vmem:[%s1 + $0xd08] sm:$0xff]
    %v453 = vld [vmem:[%s1 + $0xd10] sm:$0xff]
    %v454 = vld [vmem:[%s1 + $0xd18] sm:$0xff]
    %v455 = vld [vmem:[%s1 + $0xd20] sm:$0xff]
    %v456 = vld [vmem:[%s1 + $0xd28] sm:$0xff]
    %v457 = vld [vmem:[%s1 + $0xd30] sm:$0xff]
    %v458 = vld [vmem:[%s1 + $0xd38] sm:$0xff]
    %v459 = vld [vmem:[%s1 + $0xd40] sm:$0xff]
    %v460 = vld [vmem:[%s1 + $0xd48] sm:$0xff]
    %v461 = vld [vmem:[%s1 + $0xd50] sm:$0xff]
    %v462 = vld [vmem:[%s1 + $0xd58] sm:$0xff]
    %v463 = vld [vmem:[%s1 + $0xd60] sm:$0xff]
    %v464 = vld [vmem:[%s1 + $0xd68] sm:$0xff]
    %v465 = vld [vmem:[%s1 + $0xd70] sm:$0xff]
    %v466 = vld [vmem:[%s1 + $0xd78] sm:$0xff]
    %v467 = vld [vmem:[%s1 + $0xd80] sm:$0xff]
    %v468 = vld [vmem:[%s1 + $0xd88] sm:$0xff]
    %v469 = vld [vmem:[%s1 + $0xd90] sm:$0xff]
    %v470 = vld [vmem:[%s1 + $0xd98] sm:$0xff]
    %v471 = vld [vmem:[%s1 + $0xda0] sm:$0xff]
    %v472 = vld [vmem:[%s1 + $0xda8] sm:$0xff]
    %v473 = vld [vmem:[%s1 + $0xdb0] sm:$0xff]
    %v474 = vld [vmem:[%s1 + $0xdb8] sm:$0xff]
    %v475 = vld [vmem:[%s1 + $0xdc0] sm:$0xff]
    %v476 = vld [vmem:[%s1 + $0xdc8] sm:$0xff]
    %v477 = vld [vmem:[%s1 + $0xdd0] sm:$0xff]
    %v478 = vld [vmem:[%s1 + $0xdd8] sm:$0xff]
    %v479 = vld [vmem:[%s1 + $0xde0] sm:$0xff]
    %v480 = vld [vmem:[%s1 + $0xde8] sm:$0xff]
    %v481 = vld [vmem:[%s1 + $0xdf0] sm:$0xff]
    %v482 = vld [vmem:[%s1 + $0xdf8] sm:$0xff]
    %v483 = vld [vmem:[%s1 + $0xe00] sm:$0xff]
    %v484 = vld [vmem:[%s1 + $0xe08] sm:$0xff]
    %v485 = vld [vmem:[%s1 + $0xe10] sm:$0xff]
    %v486 = vld [vmem:[%s1 + $0xe18] sm:$0xff]
    %v487 = vld [vmem:[%s1 + $0xe20] sm:$0xff]
    %v488 = vld [vmem:[%s1 + $0xe28] sm:$0xff]
    %v489 = vld [vmem:[%s1 + $0xe30] sm:$0xff]
    %v490 = vld [vmem:[%s1 + $0xe38] sm:$0xff]
    %v491 = vld [vmem:[%s1 + $0xe40] sm:$0xff]
    %v492 = vld [vmem:[%s1 + $0xe48] sm:$0xff]
    %v493 = vld [vmem:[%s1 + $0xe50] sm:$0xff]
    %v494 = vld [vmem:[%s1 + $0xe58] sm:$0xff]
    %v495 = vld [vmem:[%s1 + $0xe60] sm:$0xff]
    %v496 = vld [vmem:[%s1 + $0xe68] sm:$0xff]
    %v497 = vld [vmem:[%s1 + $0xe70] sm:$0xff]
    %v498 = vld [vmem:[%s1 + $0xe78] sm:$0xff]
    %v499 = vld [vmem:[%s1 + $0xe80] sm:$0xff]
    %v500 = vld [vmem:[%s1 + $0xe88] sm:$0xff]
    %v501 = vld [vmem:[%s1 + $0xe90] sm:$0xff]
    %v502 = vld [vmem:[%s1 + $0xe98] sm:$0xff]
    %v503 = vld [vmem:[%s1 + $0xea0] sm:$0xff]
    %v504 = vld [vmem:[%s1 + $0xea8] sm:$0xff]
    %v505 = vld [vmem:[%s1 + $0xeb0] sm:$0xff]
    %v506 = vld [vmem:[%s1 + $0xeb8] sm:$0xff]
    %v507 = vld [vmem:[%s1 + $0xec0] sm:$0xff]
    %v508 = vld [vmem:[%s1 + $0xec8] sm:$0xff]
    %v509 = vld [vmem:[%s1 + $0xed0] sm:$0xff]
    %v510 = vld [vmem:[%s1 + $0xed8] sm:$0xff]
    %v511 = vld [vmem:[%s1 + $0xee0] sm:$0xff]
    %v512 = vld [vmem:[%s1 + $0xee8] sm:$0xff]
    %v513 = vld [vmem:[%s1 + $0xef0] sm:$0xff]
    %v514 = vld [vmem:[%s1 + $0xef8] sm:$0xff]
    %v515 = vld [vmem:[%s1 + $0xf00] sm:$0xff]
    %v516 = vld [vmem:[%s1 + $0xf08] sm:$0xff]
    %v517 = vld [vmem:[%s1 + $0xf10] sm:$0xff]
    %v518 = vld [vmem:[%s1 + $0xf18] sm:$0xff]
    %v519 = vld [vmem:[%s1 + $0xf20] sm:$0xff]
    %v520 = vld [vmem:[%s1 + $0xf28] sm:$0xff]
    %v521 = vld [vmem:[%s1 + $0xf30] sm:$0xff]
    %v522 = vld [vmem:[%s1 + $0xf38] sm:$0xff]
    %v523 = vld [vmem:[%s1 + $0xf40] sm:$0xff]
    %v524 = vld [vmem:[%s1 + $0xf48] sm:$0xff]
    %v525 = vld [vmem:[%s1 + $0xf50] sm:$0xff]
    %v526 = vld [vmem:[%s1 + $0xf58] sm:$0xff]
    %v527 = vld [vmem:[%s1 + $0xf60] sm:$0xff]
    %v528 = vld [vmem:[%s1 + $0xf68] sm:$0xff]
    %v529 = vld [vmem:[%s1 + $0xf70] sm:$0xff]
    %v530 = vld [vmem:[%s1 + $0xf78] sm:$0xff]
    %v531 = vld [vmem:[%s1 + $0xf80] sm:$0xff]
    %v532 = vld [vmem:[%s1 + $0xf88] sm:$0xff]
    %v533 = vld [vmem:[%s1 + $0xf90] sm:$0xff]
    %v534 = vld [vmem:[%s1 + $0xf98] sm:$0xff]
    %v535 = vld [vmem:[%s1 + $0xfa0] sm:$0xff]
    %v536 = vld [vmem:[%s1 + $0xfa8] sm:$0xff]
    %v537 = vld [vmem:[%s1 + $0xfb0] sm:$0xff]
    %v538 = vld [vmem:[%s1 + $0xfb8] sm:$0xff]
    %v539 = vld [vmem:[%s1 + $0xfc0] sm:$0xff]
    %v540 = vld [vmem:[%s1 + $0xfc8] sm:$0xff]
    %v541 = vld [vmem:[%s1 + $0xfd0] sm:$0xff]
    %v542 = vld [vmem:[%s1 + $0xfd8] sm:$0xff]
    %v543 = vld [vmem:[%s1 + $0xfe0] sm:$0xff]
    %v544 = vld [vmem:[%s1 + $0xfe8] sm:$0xff]
    %v545 = vld [vmem:[%s1 + $0xff0] sm:$0xff]
    %v546 = vld [vmem:[%s1 + $0xff8] sm:$0xff]
    %v547 = vld [vmem:[%s1 + $0x1000] sm:$0xff]
    %v548 = vld [vmem:[%s1 + $0x1008] sm:$0xff]
    %v549 = vld [vmem:[%s1 + $0x1010] sm:$0xff]
    %v550 = vld [vmem:[%s1 + $0x1018] sm:$0xff]
    %v551 = vld [vmem:[%s1 + $0x1020] sm:$0xff]
    %v552 = vld [vmem:[%s1 + $0x1028] sm:$0xff]
    %v553 = vld [vmem:[%s1 + $0x1030] sm:$0xff]
    %v554 = vld [vmem:[%s1 + $0x1038] sm:$0xff]
    %v555 = vld [vmem:[%s1 + $0x1040] sm:$0xff]
    %v556 = vld [vmem:[%s1 + $0x1048] sm:$0xff]
    %v557 = vld [vmem:[%s1 + $0x1050] sm:$0xff]
    %v558 = vld [vmem:[%s1 + $0x1058] sm:$0xff]
    %v559 = vld [vmem:[%s1 + $0x1060] sm:$0xff]
    %v560 = vld [vmem:[%s1 + $0x1068] sm:$0xff]
    %v561 = vld [vmem:[%s1 + $0x1070] sm:$0xff]
    %v562 = vld [vmem:[%s1 + $0x1078] sm:$0xff]
    %v563 = vld [vmem:[%s1 + $0x1080] sm:$0xff]
    %v564 = vld [vmem:[%s1 + $0x1088] sm:$0xff]
    %v565 = vld [vmem:[%s1 + $0x1090] sm:$0xff]
    %v566 = vld [vmem:[%s1 + $0x1098] sm:$0xff]
    %v567 = vld [vmem:[%s1 + $0x10a0] sm:$0xff]
    %v568 = vld [vmem:[%s1 + $0x10a8] sm:$0xff]
    %v569 = vld [vmem:[%s1 + $0x10b0] sm:$0xff]
    %v570 = vld [vmem:[%s1 + $0x10b8] sm:$0xff]
    %v571 = vld [vmem:[%s1 + $0x10c0] sm:$0xff]
    %v572 = vld [vmem:[%s1 + $0x10c8] sm:$0xff]
    %v573 = vld [vmem:[%s1 + $0x10d0] sm:$0xff]
    %v574 = vld [vmem:[%s1 + $0x10d8] sm:$0xff]
    %v575 = vld [vmem:[%s1 + $0x10e0] sm:$0xff]
    %v576 = vld [vmem:[%s1 + $0x10e8] sm:$0xff]
    %v577 = vld [vmem:[%s1 + $0x10f0] sm:$0xff]
    %v578 = vld [vmem:[%s1 + $0x10f8] sm:$0xff]
    %v579 = vld [vmem:[%s1 + $0x1100] sm:$0xff]
    %v580 = vld [vmem:[%s1 + $0x1108] sm:$0xff]
    %v581 = vld [vmem:[%s1 + $0x1110] sm:$0xff]
    %v582 = vld [vmem:[%s1 + $0x1118] sm:$0xff]
    %v583 = vld [vmem:[%s1 + $0x1120] sm:$0xff]
    %v584 = vld [vmem:[%s1 + $0x1128] sm:$0xff]
    %v585 = vld [vmem:[%s1 + $0x1130] sm:$0xff]
    %v586 = vld [vmem:[%s1 + $0x1138] sm:$0xff]
    %v587 = vld [vmem:[%s1 + $0x1140] sm:$0xff]
    %v588 = vld [vmem:[%s1 + $0x1148] sm:$0xff]
    %v589 = vld [vmem:[%s1 + $0x1150] sm:$0xff]
    %v590 = vld [vmem:[%s1 + $0x1158] sm:$0xff]
    %v591 = vld [vmem:[%s1 + $0x1160] sm:$0xff]
    %v592 = vld [vmem:[%s1 + $0x1168] sm:$0xff]
    %v593 = vld [vmem:[%s1 + $0x1170] sm:$0xff]
    %v594 = vld [vmem:[%s1 + $0x1178] sm:$0xff]
    %v595 = vld [vmem:[%s1 + $0x1180] sm:$0xff]
    %v596 = vld [vmem:[%s1 + $0x1188] sm:$0xff]
    %v597 = vld [vmem:[%s1 + $0x1190] sm:$0xff]
    %v598 = vld [vmem:[%s1 + $0x1198] sm:$0xff]
    %v599 = vld [vmem:[%s1 + $0x11a0] sm:$0xff]
    %v600 = vld [vmem:[%s1 + $0x11a8] sm:$0xff]
    %v601 = vld [vmem:[%s1 + $0x11b0] sm:$0xff]
    %v602 = vld [vmem:[%s1 + $0x11b8] sm:$0xff]
    %v603 = vld [vmem:[%s1 + $0x11c0] sm:$0xff]
    %v604 = vld [vmem:[%s1 + $0x11c8] sm:$0xff]
    %v605 = vld [vmem:[%s1 + $0x11d0] sm:$0xff]
    %v606 = vld [vmem:[%s1 + $0x11d8] sm:$0xff]
    %v607 = vld [vmem:[%s1 + $0x11e0] sm:$0xff]
    %v608 = vld [vmem:[%s1 + $0x11e8] sm:$0xff]
    %v609 = vld [vmem:[%s1 + $0x11f0] sm:$0xff]
    %v610 = vld [vmem:[%s1 + $0x11f8] sm:$0xff]
    %v611 = vld [vmem:[%s1 + $0x1200] sm:$0xff]
    %v612 = vld [vmem:[%s1 + $0x1208] sm:$0xff]
    %v613 = vld [vmem:[%s1 + $0x1210] sm:$0xff]
    %v614 = vld [vmem:[%s1 + $0x1218] sm:$0xff]
    %v615 = vld [vmem:[%s1 + $0x1220] sm:$0xff]
    %v616 = vld [vmem:[%s1 + $0x1228] sm:$0xff]
    %v617 = vld [vmem:[%s1 + $0x1230] sm:$0xff]
    %v618 = vld [vmem:[%s1 + $0x1238] sm:$0xff]
    %v619 = vld [vmem:[%s1 + $0x1240] sm:$0xff]
    %v620 = vld [vmem:[%s1 + $0x1248] sm:$0xff]
    %v621 = vld [vmem:[%s1 + $0x1250] sm:$0xff]
    %v622 = vld [vmem:[%s1 + $0x1258] sm:$0xff]
    %v623 = vld [vmem:[%s1 + $0x1260] sm:$0xff]
    %v624 = vld [vmem:[%s1 + $0x1268] sm:$0xff]
    %v625 = vld [vmem:[%s1 + $0x1270] sm:$0xff]
    %v626 = vld [vmem:[%s1 + $0x1278] sm:$0xff]
    %v627 = vld [vmem:[%s1 + $0x1280] sm:$0xff]
    %v628 = vld [vmem:[%s1 + $0x1288] sm:$0xff]
    %v629 = vld [vmem:[%s1 + $0x1290] sm:$0xff]
    %v630 = vld [vmem:[%s1 + $0x1298] sm:$0xff]
    %v631 = vld [vmem:[%s1 + $0x12a0] sm:$0xff]
    %v632 = vld [vmem:[%s1 + $0x12a8] sm:$0xff]
    %v633 = vld [vmem:[%s1 + $0x12b0] sm:$0xff]
    %v634 = vld [vmem:[%s1 + $0x12b8] sm:$0xff]
    %v635 = vld [vmem:[%s1 + $0x12c0] sm:$0xff]
    %v636 = vld [vmem:[%s1 + $0x12c8] sm:$0xff]
    %v637 = vld [vmem:[%s1 + $0x12d0] sm:$0xff]
    %v638 = vld [vmem:[%s1 + $0x12d8] sm:$0xff]
    %v639 = vld [vmem:[%s1 + $0x12e0] sm:$0xff]
    %v640 = vld [vmem:[%s1 + $0x12e8] sm:$0xff]
    %v641 = vld [vmem:[%s1 + $0x12f0] sm:$0xff]
    %v642 = vld [vmem:[%s1 + $0x12f8] sm:$0xff]
    %v643 = vld [vmem:[%s1 + $0x1300] sm:$0xff]
    %v644 = vld [vmem:[%s1 + $0x1308] sm:$0xff]
    %v645 = vld [vmem:[%s1 + $0x1310] sm:$0xff]
    %v646 = vld [vmem:[%s1 + $0x1318] sm:$0xff]
    %v647 = vld [vmem:[%s1 + $0x1320] sm:$0xff]
    %v648 = vld [vmem:[%s1 + $0x1328] sm:$0xff]
    %v649 = vld [vmem:[%s1 + $0x1330] sm:$0xff]
    %v650 = vld [vmem:[%s1 + $0x1338] sm:$0xff]
    %v651 = vld [vmem:[%s1 + $0x1340] sm:$0xff]
    %v652 = vld [vmem:[%s1 + $0x1348] sm:$0xff]
    %v653 = vld [vmem:[%s1 + $0x1350] sm:$0xff]
    %v654 = vld [vmem:[%s1 + $0x1358] sm:$0xff]
    %v655 = vld [vmem:[%s1 + $0x1360] sm:$0xff]
    %v656 = vld [vmem:[%s1 + $0x1368] sm:$0xff]
    %v657 = vld [vmem:[%s1 + $0x1370] sm:$0xff]
    %v658 = vld [vmem:[%s1 + $0x1378] sm:$0xff]
    %v659 = vld [vmem:[%s1 + $0x1380] sm:$0xff]
    %v660 = vld [vmem:[%s1 + $0x1388] sm:$0xff]
    %v661 = vld [vmem:[%s1 + $0x1390] sm:$0xff]
    %v662 = vld [vmem:[%s1 + $0x1398] sm:$0xff]
    %v663 = vld [vmem:[%s1 + $0x13a0] sm:$0xff]
    %v664 = vld [vmem:[%s1 + $0x13a8] sm:$0xff]
    %v665 = vld [vmem:[%s1 + $0x13b0] sm:$0xff]
    %v666 = vld [vmem:[%s1 + $0x13b8] sm:$0xff]
    %v667 = vld [vmem:[%s1 + $0x13c0] sm:$0xff]
    %v668 = vld [vmem:[%s1 + $0x13c8] sm:$0xff]
    %v669 = vld [vmem:[%s1 + $0x13d0] sm:$0xff]
    %v670 = vld [vmem:[%s1 + $0x13d8] sm:$0xff]
    %v671 = vld [vmem:[%s1 + $0x13e0] sm:$0xff]
    %v672 = vld [vmem:[%s1 + $0x13e8] sm:$0xff]
    %v673 = vld [vmem:[%s1 + $0x13f0] sm:$0xff]
    %v674 = vld [vmem:[%s1 + $0x13f8] sm:$0xff]
    %v675 = vld [vmem:[%s1 + $0x1400] sm:$0xff]
    %v676 = vld [vmem:[%s1 + $0x1408] sm:$0xff]
    %v677 = vld [vmem:[%s1 + $0x1410] sm:$0xff]
    %v678 = vld [vmem:[%s1 + $0x1418] sm:$0xff]
    %v679 = vld [vmem:[%s1 + $0x1420] sm:$0xff]
    %v680 = vld [vmem:[%s1 + $0x1428] sm:$0xff]
    %v681 = vld [vmem:[%s1 + $0x1430] sm:$0xff]
    %v682 = vld [vmem:[%s1 + $0x1438] sm:$0xff]
    %v683 = vld [vmem:[%s1 + $0x1440] sm:$0xff]
    %v684 = vld [vmem:[%s1 + $0x1448] sm:$0xff]
    %v685 = vld [vmem:[%s1 + $0x1450] sm:$0xff]
    %v686 = vld [vmem:[%s1 + $0x1458] sm:$0xff]
    %v687 = vld [vmem:[%s1 + $0x1460] sm:$0xff]
    %v688 = vld [vmem:[%s1 + $0x1468] sm:$0xff]
    %v689 = vld [vmem:[%s1 + $0x1470] sm:$0xff]
    %v690 = vld [vmem:[%s1 + $0x1478] sm:$0xff]
    %v691 = vld [vmem:[%s1 + $0x1480] sm:$0xff]
    %v692 = vld [vmem:[%s1 + $0x1488] sm:$0xff]
    %v693 = vld [vmem:[%s1 + $0x1490] sm:$0xff]
    %v694 = vld [vmem:[%s1 + $0x1498] sm:$0xff]
    %v695 = vld [vmem:[%s1 + $0x14a0] sm:$0xff]
    %v696 = vld [vmem:[%s1 + $0x14a8] sm:$0xff]
    %v697 = vld [vmem:[%s1 + $0x14b0] sm:$0xff]
    %v698 = vld [vmem:[%s1 + $0x14b8] sm:$0xff]
    %v699 = vld [vmem:[%s1 + $0x14c0] sm:$0xff]
    %v700 = vld [vmem:[%s1 + $0x14c8] sm:$0xff]
    %v701 = vld [vmem:[%s1 + $0x14d0] sm:$0xff]
    %v702 = vld [vmem:[%s1 + $0x14d8] sm:$0xff]
    %v703 = vld [vmem:[%s1 + $0x14e0] sm:$0xff]
    %v704 = vld [vmem:[%s1 + $0x14e8] sm:$0xff]
    %v705 = vld [vmem:[%s1 + $0x14f0] sm:$0xff]
    %v706 = vld [vmem:[%s1 + $0x14f8] sm:$0xff]
    %v707 = vld [vmem:[%s1 + $0x1500] sm:$0xff]
    %v708 = vld [vmem:[%s1 + $0x1508] sm:$0xff]
    %v709 = vld [vmem:[%s1 + $0x1510] sm:$0xff]
    %v710 = vld [vmem:[%s1 + $0x1518] sm:$0xff]
    %v711 = vld [vmem:[%s1 + $0x1520] sm:$0xff]
    %v712 = vld [vmem:[%s1 + $0x1528] sm:$0xff]
    %v713 = vld [vmem:[%s1 + $0x1530] sm:$0xff]
    %v714 = vld [vmem:[%s1 + $0x1538] sm:$0xff]
    %v715 = vld [vmem:[%s1 + $0x1540] sm:$0xff]
    %v716 = vld [vmem:[%s1 + $0x1548] sm:$0xff]
    %v717 = vld [vmem:[%s1 + $0x1550] sm:$0xff]
    %v718 = vld [vmem:[%s1 + $0x1558] sm:$0xff]
    %v719 = vld [vmem:[%s1 + $0x1560] sm:$0xff]
    %v720 = vld [vmem:[%s1 + $0x1568] sm:$0xff]
    %v721 = vld [vmem:[%s1 + $0x1570] sm:$0xff]
    %v722 = vld [vmem:[%s1 + $0x1578] sm:$0xff]
    %v723 = vld [vmem:[%s1 + $0x1580] sm:$0xff]
    %v724 = vld [vmem:[%s1 + $0x1588] sm:$0xff]
    %v725 = vld [vmem:[%s1 + $0x1590] sm:$0xff]
    %v726 = vld [vmem:[%s1 + $0x1598] sm:$0xff]
    %v727 = vld [vmem:[%s1 + $0x15a0] sm:$0xff]
    %v728 = vld [vmem:[%s1 + $0x15a8] sm:$0xff]
    %v729 = vld [vmem:[%s1 + $0x15b0] sm:$0xff]
    %v730 = vld [vmem:[%s1 + $0x15b8] sm:$0xff]
    %v731 = vld [vmem:[%s1 + $0x15c0] sm:$0xff]
    %v732 = vld [vmem:[%s1 + $0x15c8] sm:$0xff]
    %v733 = vld [vmem:[%s1 + $0x15d0] sm:$0xff]
    %v734 = vld [vmem:[%s1 + $0x15d8] sm:$0xff]
    %v735 = vld [vmem:[%s1 + $0x15e0] sm:$0xff]
    %v736 = vld [vmem:[%s1 + $0x15e8] sm:$0xff]
    %v737 = vld [vmem:[%s1 + $0x15f0] sm:$0xff]
    %v738 = vld [vmem:[%s1 + $0x15f8] sm:$0xff]
    %v739 = vld [vmem:[%s1 + $0x1600] sm:$0xff]
    %v740 = vld [vmem:[%s1 + $0x1608] sm:$0xff]
    %v741 = vld [vmem:[%s1 + $0x1610] sm:$0xff]
    %v742 = vld [vmem:[%s1 + $0x1618] sm:$0xff]
    %v743 = vld [vmem:[%s1 + $0x1620] sm:$0xff]
    %v744 = vld [vmem:[%s1 + $0x1628] sm:$0xff]
    %v745 = vld [vmem:[%s1 + $0x1630] sm:$0xff]
    %v746 = vld [vmem:[%s1 + $0x1638] sm:$0xff]
    %v747 = vld [vmem:[%s1 + $0x1640] sm:$0xff]
    %v748 = vld [vmem:[%s1 + $0x1648] sm:$0xff]
    %v749 = vld [vmem:[%s1 + $0x1650] sm:$0xff]
    %v750 = vld [vmem:[%s1 + $0x1658] sm:$0xff]
    %v751 = vld [vmem:[%s1 + $0x1660] sm:$0xff]
    %v752 = vld [vmem:[%s1 + $0x1668] sm:$0xff]
    %v753 = vld [vmem:[%s1 + $0x1670] sm:$0xff]
    %v754 = vld [vmem:[%s1 + $0x1678] sm:$0xff]
    %v755 = vld [vmem:[%s1 + $0x1680] sm:$0xff]
    %v756 = vld [vmem:[%s1 + $0x1688] sm:$0xff]
    %v757 = vld [vmem:[%s1 + $0x1690] sm:$0xff]
    %v758 = vld [vmem:[%s1 + $0x1698] sm:$0xff]
    %v759 = vld [vmem:[%s1 + $0x16a0] sm:$0xff]
    %v760 = vld [vmem:[%s1 + $0x16a8] sm:$0xff]
    %v761 = vld [vmem:[%s1 + $0x16b0] sm:$0xff]
    %v762 = vld [vmem:[%s1 + $0x16b8] sm:$0xff]
    %v763 = vld [vmem:[%s1 + $0x16c0] sm:$0xff]
    %v764 = vld [vmem:[%s1 + $0x16c8] sm:$0xff]
    %v765 = vld [vmem:[%s1 + $0x16d0] sm:$0xff]
    %v766 = vld [vmem:[%s1 + $0x16d8] sm:$0xff]
    %v767 = vld [vmem:[%s1 + $0x16e0] sm:$0xff]
    %v768 = vld [vmem:[%s1 + $0x16e8] sm:$0xff]
    %v769 = vld [vmem:[%s1 + $0x16f0] sm:$0xff]
    %v770 = vld [vmem:[%s1 + $0x16f8] sm:$0xff]
    %v771 = vld [vmem:[%s1 + $0x1700] sm:$0xff]
    %v772 = vld [vmem:[%s1 + $0x1708] sm:$0xff]
    %v773 = vld [vmem:[%s1 + $0x1710] sm:$0xff]
    %v774 = vld [vmem:[%s1 + $0x1718] sm:$0xff]
    %v775 = vld [vmem:[%s1 + $0x1720] sm:$0xff]
    %v776 = vld [vmem:[%s1 + $0x1728] sm:$0xff]
    %v777 = vld [vmem:[%s1 + $0x1730] sm:$0xff]
    %v778 = vld [vmem:[%s1 + $0x1738] sm:$0xff]
    %v779 = vld [vmem:[%s1 + $0x1740] sm:$0xff]
    %v780 = vld [vmem:[%s1 + $0x1748] sm:$0xff]
    %v781 = vld [vmem:[%s1 + $0x1750] sm:$0xff]
    %v782 = vld [vmem:[%s1 + $0x1758] sm:$0xff]
    %v783 = vld [vmem:[%s1 + $0x1760] sm:$0xff]
    %v784 = vld [vmem:[%s1 + $0x1768] sm:$0xff]
    %v785 = vld [vmem:[%s1 + $0x1770] sm:$0xff]
    %v786 = vld [vmem:[%s1 + $0x1778] sm:$0xff]
    %v787 = vld [vmem:[%s1 + $0x1780] sm:$0xff]
    %v788 = vld [vmem:[%s1 + $0x1788] sm:$0xff]
    %v789 = vld [vmem:[%s1 + $0x1790] sm:$0xff]
    %v790 = vld [vmem:[%s1 + $0x1798] sm:$0xff]
    %v791 = vld [vmem:[%s1 + $0x17a0] sm:$0xff]
    %v792 = vld [vmem:[%s1 + $0x17a8] sm:$0xff]
    %v793 = vld [vmem:[%s1 + $0x17b0] sm:$0xff]
    %v794 = vld [vmem:[%s1 + $0x17b8] sm:$0xff]
    %v795 = vld [vmem:[%s1 + $0x17c0] sm:$0xff]
    %v796 = vld [vmem:[%s1 + $0x17c8] sm:$0xff]
    %v797 = vld [vmem:[%s1 + $0x17d0] sm:$0xff]
    %v798 = vld [vmem:[%s1 + $0x17d8] sm:$0xff]
    %v799 = vld [vmem:[%s1 + $0x17e0] sm:$0xff]
    %v800 = vld [vmem:[%s1 + $0x17e8] sm:$0xff]
    %v801 = vld [vmem:[%s1 + $0x17f0] sm:$0xff]
    %v802 = vld [vmem:[%s1 + $0x17f8] sm:$0xff]
    %v803 = vld [vmem:[%s1 + $0x1800] sm:$0xff]
    %v804 = vld [vmem:[%s1 + $0x1808] sm:$0xff]
    %v805 = vld [vmem:[%s1 + $0x1810] sm:$0xff]
    %v806 = vld [vmem:[%s1 + $0x1818] sm:$0xff]
    %v807 = vld [vmem:[%s1 + $0x1820] sm:$0xff]
    %v808 = vld [vmem:[%s1 + $0x1828] sm:$0xff]
    %v809 = vld [vmem:[%s1 + $0x1830] sm:$0xff]
    %v810 = vld [vmem:[%s1 + $0x1838] sm:$0xff]
    %v811 = vld [vmem:[%s1 + $0x1840] sm:$0xff]
    %v812 = vld [vmem:[%s1 + $0x1848] sm:$0xff]
    %v813 = vld [vmem:[%s1 + $0x1850] sm:$0xff]
    %v814 = vld [vmem:[%s1 + $0x1858] sm:$0xff]
    %v815 = vld [vmem:[%s1 + $0x1860] sm:$0xff]
    %v816 = vld [vmem:[%s1 + $0x1868] sm:$0xff]
    %v817 = vld [vmem:[%s1 + $0x1870] sm:$0xff]
    %v818 = vld [vmem:[%s1 + $0x1878] sm:$0xff]
    %v819 = vld [vmem:[%s1 + $0x1880] sm:$0xff]
    %v820 = vld [vmem:[%s1 + $0x1888] sm:$0xff]
    %v821 = vld [vmem:[%s1 + $0x1890] sm:$0xff]
    %v822 = vld [vmem:[%s1 + $0x1898] sm:$0xff]
    %v823 = vld [vmem:[%s1 + $0x18a0] sm:$0xff]
    %v824 = vld [vmem:[%s1 + $0x18a8] sm:$0xff]
    %v825 = vld [vmem:[%s1 + $0x18b0] sm:$0xff]
    %v826 = vld [vmem:[%s1 + $0x18b8] sm:$0xff]
    %v827 = vld [vmem:[%s1 + $0x18c0] sm:$0xff]
    %v828 = vld [vmem:[%s1 + $0x18c8] sm:$0xff]
    %v829 = vld [vmem:[%s1 + $0x18d0] sm:$0xff]
    %v830 = vld [vmem:[%s1 + $0x18d8] sm:$0xff]
    %v831 = vld [vmem:[%s1 + $0x18e0] sm:$0xff]
    %v832 = vld [vmem:[%s1 + $0x18e8] sm:$0xff]
    %v833 = vld [vmem:[%s1 + $0x18f0] sm:$0xff]
    %v834 = vld [vmem:[%s1 + $0x18f8] sm:$0xff]
    %v835 = vld [vmem:[%s1 + $0x1900] sm:$0xff]
    %v836 = vld [vmem:[%s1 + $0x1908] sm:$0xff]
    %v837 = vld [vmem:[%s1 + $0x1910] sm:$0xff]
    %v838 = vld [vmem:[%s1 + $0x1918] sm:$0xff]
    %v839 = vld [vmem:[%s1 + $0x1920] sm:$0xff]
    %v840 = vld [vmem:[%s1 + $0x1928] sm:$0xff]
    %v841 = vld [vmem:[%s1 + $0x1930] sm:$0xff]
    %v842 = vld [vmem:[%s1 + $0x1938] sm:$0xff]
    %v843 = vld [vmem:[%s1 + $0x1940] sm:$0xff]
    %v844 = vld [vmem:[%s1 + $0x1948] sm:$0xff]
    %v845 = vld [vmem:[%s1 + $0x1950] sm:$0xff]
    %v846 = vld [vmem:[%s1 + $0x1958] sm:$0xff]
    %v847 = vld [vmem:[%s1 + $0x1960] sm:$0xff]
    %v848 = vld [vmem:[%s1 + $0x1968] sm:$0xff]
    %v849 = vld [vmem:[%s1 + $0x1970] sm:$0xff]
    %v850 = vld [vmem:[%s1 + $0x1978] sm:$0xff]
    %v851 = vld [vmem:[%s1 + $0x1980] sm:$0xff]
    %v852 = vld [vmem:[%s1 + $0x1988] sm:$0xff]
    %v853 = vld [vmem:[%s1 + $0x1990] sm:$0xff]
    %v854 = vld [vmem:[%s1 + $0x1998] sm:$0xff]
    %v855 = vld [vmem:[%s1 + $0x19a0] sm:$0xff]
    %v856 = vld [vmem:[%s1 + $0x19a8] sm:$0xff]
    %v857 = vld [vmem:[%s1 + $0x19b0] sm:$0xff]
    %v858 = vld [vmem:[%s1 + $0x19b8] sm:$0xff]
    %v859 = vld [vmem:[%s1 + $0x19c0] sm:$0xff]
    %v860 = vld [vmem:[%s1 + $0x19c8] sm:$0xff]
    %v861 = vld [vmem:[%s1 + $0x19d0] sm:$0xff]
    %v862 = vld [vmem:[%s1 + $0x19d8] sm:$0xff]
    %v863 = vld [vmem:[%s1 + $0x19e0] sm:$0xff]
    %v864 = vld [vmem:[%s1 + $0x19e8] sm:$0xff]
    %v865 = vld [vmem:[%s1 + $0x19f0] sm:$0xff]
    %v866 = vld [vmem:[%s1 + $0x19f8] sm:$0xff]
    %v867 = vld [vmem:[%s1 + $0x1a00] sm:$0xff]
    %v868 = vld [vmem:[%s1 + $0x1a08] sm:$0xff]
    %v869 = vld [vmem:[%s1 + $0x1a10] sm:$0xff]
    %v870 = vld [vmem:[%s1 + $0x1a18] sm:$0xff]
    %v871 = vld [vmem:[%s1 + $0x1a20] sm:$0xff]
    %v872 = vld [vmem:[%s1 + $0x1a28] sm:$0xff]
    %v873 = vld [vmem:[%s1 + $0x1a30] sm:$0xff]
    %v874 = vld [vmem:[%s1 + $0x1a38] sm:$0xff]
    %v875 = vld [vmem:[%s1 + $0x1a40] sm:$0xff]
    %v876 = vld [vmem:[%s1 + $0x1a48] sm:$0xff]
    %v877 = vld [vmem:[%s1 + $0x1a50] sm:$0xff]
    %v878 = vld [vmem:[%s1 + $0x1a58] sm:$0xff]
    %v879 = vld [vmem:[%s1 + $0x1a60] sm:$0xff]
    %v880 = vld [vmem:[%s1 + $0x1a68] sm:$0xff]
    %v881 = vld [vmem:[%s1 + $0x1a70] sm:$0xff]
    %v882 = vld [vmem:[%s1 + $0x1a78] sm:$0xff]
    %v883 = vld [vmem:[%s1 + $0x1a80] sm:$0xff]
    %v884 = vld [vmem:[%s1 + $0x1a88] sm:$0xff]
    %v885 = vld [vmem:[%s1 + $0x1a90] sm:$0xff]
    %v886 = vld [vmem:[%s1 + $0x1a98] sm:$0xff]
    %v887 = vld [vmem:[%s1 + $0x1aa0] sm:$0xff]
    %v888 = vld [vmem:[%s1 + $0x1aa8] sm:$0xff]
    %v889 = vld [vmem:[%s1 + $0x1ab0] sm:$0xff]
    %v890 = vld [vmem:[%s1 + $0x1ab8] sm:$0xff]
    %v891 = vld [vmem:[%s1 + $0x1ac0] sm:$0xff]
    %v892 = vld [vmem:[%s1 + $0x1ac8] sm:$0xff]
    %v893 = vld [vmem:[%s1 + $0x1ad0] sm:$0xff]
    %v894 = vld [vmem:[%s1 + $0x1ad8] sm:$0xff]
    %v895 = vld [vmem:[%s1 + $0x1ae0] sm:$0xff]
    %v896 = vld [vmem:[%s1 + $0x1ae8] sm:$0xff]
    %v897 = vld [vmem:[%s1 + $0x1af0] sm:$0xff]
    %v898 = vld [vmem:[%s1 + $0x1af8] sm:$0xff]
    %v899 = vld [vmem:[%s1 + $0x1b00] sm:$0xff]
    %v900 = vld [vmem:[%s1 + $0x1b08] sm:$0xff]
    %v901 = vld [vmem:[%s1 + $0x1b10] sm:$0xff]
    %v902 = vld [vmem:[%s1 + $0x1b18] sm:$0xff]
    %v903 = vld [vmem:[%s1 + $0x1b20] sm:$0xff]
    %v904 = vld [vmem:[%s1 + $0x1b28] sm:$0xff]
    %v905 = vld [vmem:[%s1 + $0x1b30] sm:$0xff]
    %v906 = vld [vmem:[%s1 + $0x1b38] sm:$0xff]
    %v907 = vld [vmem:[%s1 + $0x1b40] sm:$0xff]
    %v908 = vld [vmem:[%s1 + $0x1b48] sm:$0xff]
    %v909 = vld [vmem:[%s1 + $0x1b50] sm:$0xff]
    %v910 = vld [vmem:[%s1 + $0x1b58] sm:$0xff]
    %v911 = vld [vmem:[%s1 + $0x1b60] sm:$0xff]
    %v912 = vld [vmem:[%s1 + $0x1b68] sm:$0xff]
    %v913 = vld [vmem:[%s1 + $0x1b70] sm:$0xff]
    %v914 = vld [vmem:[%s1 + $0x1b78] sm:$0xff]
    %v915 = vld [vmem:[%s1 + $0x1b80] sm:$0xff]
    %v916 = vld [vmem:[%s1 + $0x1b88] sm:$0xff]
    %v917 = vld [vmem:[%s1 + $0x1b90] sm:$0xff]
    %v918 = vld [vmem:[%s1 + $0x1b98] sm:$0xff]
    %v919 = vld [vmem:[%s1 + $0x1ba0] sm:$0xff]
    %v920 = vld [vmem:[%s1 + $0x1ba8] sm:$0xff]
    %v921 = vld [vmem:[%s1 + $0x1bb0] sm:$0xff]
    %v922 = vld [vmem:[%s1 + $0x1bb8] sm:$0xff]
    %v923 = vld [vmem:[%s1 + $0x1bc0] sm:$0xff]
    %v924 = vld [vmem:[%s1 + $0x1bc8] sm:$0xff]
    %v925 = vld [vmem:[%s1 + $0x1bd0] sm:$0xff]
    %v926 = vld [vmem:[%s1 + $0x1bd8] sm:$0xff]
    %v927 = vld [vmem:[%s1 + $0x1be0] sm:$0xff]
    %v928 = vld [vmem:[%s1 + $0x1be8] sm:$0xff]
    %v929 = vld [vmem:[%s1 + $0x1bf0] sm:$0xff]
    %v930 = vld [vmem:[%s1 + $0x1bf8] sm:$0xff]
    %v931 = vld [vmem:[%s1 + $0x1c00] sm:$0xff]
    %v932 = vld [vmem:[%s1 + $0x1c08] sm:$0xff]
    %v933 = vld [vmem:[%s1 + $0x1c10] sm:$0xff]
    %v934 = vld [vmem:[%s1 + $0x1c18] sm:$0xff]
    %v935 = vld [vmem:[%s1 + $0x1c20] sm:$0xff]
    %v936 = vld [vmem:[%s1 + $0x1c28] sm:$0xff]
    %v937 = vld [vmem:[%s1 + $0x1c30] sm:$0xff]
    %v938 = vld [vmem:[%s1 + $0x1c38] sm:$0xff]
    %v939 = vld [vmem:[%s1 + $0x1c40] sm:$0xff]
    %v940 = vld [vmem:[%s1 + $0x1c48] sm:$0xff]
    %v941 = vld [vmem:[%s1 + $0x1c50] sm:$0xff]
    %v942 = vld [vmem:[%s1 + $0x1c58] sm:$0xff]
    %v943 = vld [vmem:[%s1 + $0x1c60] sm:$0xff]
    %v944 = vld [vmem:[%s1 + $0x1c68] sm:$0xff]
    %v945 = vld [vmem:[%s1 + $0x1c70] sm:$0xff]
    %v946 = vld [vmem:[%s1 + $0x1c78] sm:$0xff]
    %v947 = vld [vmem:[%s1 + $0x1c80] sm:$0xff]
    %v948 = vld [vmem:[%s1 + $0x1c88] sm:$0xff]
    %v949 = vld [vmem:[%s1 + $0x1c90] sm:$0xff]
    %v950 = vld [vmem:[%s1 + $0x1c98] sm:$0xff]
    %v951 = vld [vmem:[%s1 + $0x1ca0] sm:$0xff]
    %v952 = vld [vmem:[%s1 + $0x1ca8] sm:$0xff]
    %v953 = vld [vmem:[%s1 + $0x1cb0] sm:$0xff]
    %v954 = vld [vmem:[%s1 + $0x1cb8] sm:$0xff]
    %v955 = vld [vmem:[%s1 + $0x1cc0] sm:$0xff]
    %v956 = vld [vmem:[%s1 + $0x1cc8] sm:$0xff]
    %v957 = vld [vmem:[%s1 + $0x1cd0] sm:$0xff]
    %v958 = vld [vmem:[%s1 + $0x1cd8] sm:$0xff]
    %v959 = vld [vmem:[%s1 + $0x1ce0] sm:$0xff]
    %v960 = vld [vmem:[%s1 + $0x1ce8] sm:$0xff]
    %v961 = vld [vmem:[%s1 + $0x1cf0] sm:$0xff]
    %v962 = vld [vmem:[%s1 + $0x1cf8] sm:$0xff]
    %v963 = vld [vmem:[%s1 + $0x1d00] sm:$0xff]
    %v964 = vld [vmem:[%s1 + $0x1d08] sm:$0xff]
    %v965 = vld [vmem:[%s1 + $0x1d10] sm:$0xff]
    %v966 = vld [vmem:[%s1 + $0x1d18] sm:$0xff]
    %v967 = vld [vmem:[%s1 + $0x1d20] sm:$0xff]
    %v968 = vld [vmem:[%s1 + $0x1d28] sm:$0xff]
    %v969 = vld [vmem:[%s1 + $0x1d30] sm:$0xff]
    %v970 = vld [vmem:[%s1 + $0x1d38] sm:$0xff]
    %v971 = vld [vmem:[%s1 + $0x1d40] sm:$0xff]
    %v972 = vld [vmem:[%s1 + $0x1d48] sm:$0xff]
    %v973 = vld [vmem:[%s1 + $0x1d50] sm:$0xff]
    %v974 = vld [vmem:[%s1 + $0x1d58] sm:$0xff]
    %v975 = vld [vmem:[%s1 + $0x1d60] sm:$0xff]
    %v976 = vld [vmem:[%s1 + $0x1d68] sm:$0xff]
    %v977 = vld [vmem:[%s1 + $0x1d70] sm:$0xff]
    %v978 = vld [vmem:[%s1 + $0x1d78] sm:$0xff]
    %v979 = vld [vmem:[%s1 + $0x1d80] sm:$0xff]
    %v980 = vld [vmem:[%s1 + $0x1d88] sm:$0xff]
    %v981 = vld [vmem:[%s1 + $0x1d90] sm:$0xff]
    %v982 = vld [vmem:[%s1 + $0x1d98] sm:$0xff]
    %v983 = vld [vmem:[%s1 + $0x1da0] sm:$0xff]
    %v984 = vld [vmem:[%s1 + $0x1da8] sm:$0xff]
    %v985 = vld [vmem:[%s1 + $0x1db0] sm:$0xff]
    %v986 = vld [vmem:[%s1 + $0x1db8] sm:$0xff]
    %v987 = vld [vmem:[%s1 + $0x1dc0] sm:$0xff]
    %v988 = vld [vmem:[%s1 + $0x1dc8] sm:$0xff]
    %v989 = vld [vmem:[%s1 + $0x1dd0] sm:$0xff]
    %v990 = vld [vmem:[%s1 + $0x1dd8] sm:$0xff]
    %v991 = vld [vmem:[%s1 + $0x1de0] sm:$0xff]
    %v992 = vld [vmem:[%s1 + $0x1de8] sm:$0xff]
    %v993 = vld [vmem:[%s1 + $0x1df0] sm:$0xff]
    %v994 = vld [vmem:[%s1 + $0x1df8] sm:$0xff]
    %v995 = vld [vmem:[%s1 + $0x1e00] sm:$0xff]
    %v996 = vld [vmem:[%s1 + $0x1e08] sm:$0xff]
    %v997 = vld [vmem:[%s1 + $0x1e10] sm:$0xff]
    %v998 = vld [vmem:[%s1 + $0x1e18] sm:$0xff]
    %v999 = vld [vmem:[%s1 + $0x1e20] sm:$0xff]
    %v1000 = vld [vmem:[%s1 + $0x1e28] sm:$0xff]
    %v1001 = vld [vmem:[%s1 + $0x1e30] sm:$0xff]
    %v1002 = vld [vmem:[%s1 + $0x1e38] sm:$0xff]
    %v1003 = vld [vmem:[%s1 + $0x1e40] sm:$0xff]
    %v1004 = vld [vmem:[%s1 + $0x1e48] sm:$0xff]
    %v1005 = vld [vmem:[%s1 + $0x1e50] sm:$0xff]
    %v1006 = vld [vmem:[%s1 + $0x1e58] sm:$0xff]
    %v1007 = vld [vmem:[%s1 + $0x1e60] sm:$0xff]
    %v1008 = vld [vmem:[%s1 + $0x1e68] sm:$0xff]
    %v1009 = vld [vmem:[%s1 + $0x1e70] sm:$0xff]
    %v1010 = vld [vmem:[%s1 + $0x1e78] sm:$0xff]
    %v1011 = vld [vmem:[%s1 + $0x1e80] sm:$0xff]
    %v1012 = vld [vmem:[%s1 + $0x1e88] sm:$0xff]
    %v1013 = vld [vmem:[%s1 + $0x1e90] sm:$0xff]
    %v1014 = vld [vmem:[%s1 + $0x1e98] sm:$0xff]
    %v1015 = vld [vmem:[%s1 + $0x1ea0] sm:$0xff]
    %v1016 = vld [vmem:[%s1 + $0x1ea8] sm:$0xff]
    %v1017 = vld [vmem:[%s1 + $0x1eb0] sm:$0xff]
    %v1018 = vld [vmem:[%s1 + $0x1eb8] sm:$0xff]
    %v1019 = vld [vmem:[%s1 + $0x1ec0] sm:$0xff]
    %v1020 = vld [vmem:[%s1 + $0x1ec8] sm:$0xff]
    %v1021 = vld [vmem:[%s1 + $0x1ed0] sm:$0xff]
    %v1022 = vld [vmem:[%s1 + $0x1ed8] sm:$0xff]
    %v1023 = vld [vmem:[%s1 + $0x1ee0] sm:$0xff]
    %v1024 = vld [vmem:[%s1 + $0x1ee8] sm:$0xff]
    %v1025 = vld [vmem:[%s1 + $0x1ef0] sm:$0xff]
    %v1026 = vld [vmem:[%s1 + $0x1ef8] sm:$0xff]
    %v1027 = vld [vmem:[%s1 + $0x1f00] sm:$0xff]
    %v1028 = vld [vmem:[%s1 + $0x1f08] sm:$0xff]
    %v1029 = vld [vmem:[%s1 + $0x1f10] sm:$0xff]
    %v1030 = vld [vmem:[%s1 + $0x1f18] sm:$0xff]
    %v1031 = vld [vmem:[%s1 + $0x1f20] sm:$0xff]
    %v1032 = vld [vmem:[%s1 + $0x1f28] sm:$0xff]
    %v1033 = vld [vmem:[%s1 + $0x1f30] sm:$0xff]
    %v1034 = vld [vmem:[%s1 + $0x1f38] sm:$0xff]
    %v1035 = vld [vmem:[%s1 + $0x1f40] sm:$0xff]
    %v1036 = vld [vmem:[%s1 + $0x1f48] sm:$0xff]
    %v1037 = vld [vmem:[%s1 + $0x1f50] sm:$0xff]
    %v1038 = vld [vmem:[%s1 + $0x1f58] sm:$0xff]
    %v1039 = vld [vmem:[%s1 + $0x1f60] sm:$0xff]
    %v1040 = vld [vmem:[%s1 + $0x1f68] sm:$0xff]
    %v1041 = vld [vmem:[%s1 + $0x1f70] sm:$0xff]
    %v1042 = vld [vmem:[%s1 + $0x1f78] sm:$0xff]
    %v1043 = vld [vmem:[%s1 + $0x1f80] sm:$0xff]
    %v1044 = vld [vmem:[%s1 + $0x1f88] sm:$0xff]
    %v1045 = vld [vmem:[%s1 + $0x1f90] sm:$0xff]
    %v1046 = vld [vmem:[%s1 + $0x1f98] sm:$0xff]
    %v1047 = vld [vmem:[%s1 + $0x1fa0] sm:$0xff]
    %v1048 = vld [vmem:[%s1 + $0x1fa8] sm:$0xff]
    %v1049 = vld [vmem:[%s1 + $0x1fb0] sm:$0xff]
    %v1050 = vld [vmem:[%s1 + $0x1fb8] sm:$0xff]
    %v1051 = vld [vmem:[%s1 + $0x1fc0] sm:$0xff]
    %v1052 = vld [vmem:[%s1 + $0x1fc8] sm:$0xff]
    %v1053 = vld [vmem:[%s1 + $0x1fd0] sm:$0xff]
    %v1054 = vld [vmem:[%s1 + $0x1fd8] sm:$0xff]
    %v1055 = vld [vmem:[%s1 + $0x1fe0] sm:$0xff]
    %v1056 = vld [vmem:[%s1 + $0x1fe8] sm:$0xff]
    %v1057 = vld [vmem:[%s1 + $0x1ff0] sm:$0xff]
    %v1058 = vld [vmem:[%s1 + $0x1ff8] sm:$0xff]
    %v1059 = vld [vmem:[%s1 + $0x2000] sm:$0xff]
    %v1060 = vld [vmem:[%s1 + $0x2008] sm:$0xff]
    %v1061 = vld [vmem:[%s1 + $0x2010] sm:$0xff]
    %v1062 = vld [vmem:[%s1 + $0x2018] sm:$0xff]
    %v1063 = vld [vmem:[%s1 + $0x2020] sm:$0xff]
    %v1064 = vld [vmem:[%s1 + $0x2028] sm:$0xff]
    %v1065 = vld [vmem:[%s1 + $0x2030] sm:$0xff]
    %v1066 = vld [vmem:[%s1 + $0x2038] sm:$0xff]
    %v1067 = vld [vmem:[%s1 + $0x2040] sm:$0xff]
    %v1068 = vld [vmem:[%s1 + $0x2048] sm:$0xff]
    %v1069 = vld [vmem:[%s1 + $0x2050] sm:$0xff]
    %v1070 = vld [vmem:[%s1 + $0x2058] sm:$0xff]
    %v1071 = vld [vmem:[%s1 + $0x2060] sm:$0xff]
    %v1072 = vld [vmem:[%s1 + $0x2068] sm:$0xff]
    %v1073 = vld [vmem:[%s1 + $0x2070] sm:$0xff]
    %v1074 = vld [vmem:[%s1 + $0x2078] sm:$0xff]
    %v1075 = vld [vmem:[%s1 + $0x2080] sm:$0xff]
    %v1076 = vld [vmem:[%s1 + $0x2088] sm:$0xff]
    %v1077 = vld [vmem:[%s1 + $0x2090] sm:$0xff]
    %v1078 = vld [vmem:[%s1 + $0x2098] sm:$0xff]
    %v1079 = vld [vmem:[%s1 + $0x20a0] sm:$0xff]
    %v1080 = vld [vmem:[%s1 + $0x20a8] sm:$0xff]
    %v1081 = vld [vmem:[%s1 + $0x20b0] sm:$0xff]
    %v1082 = vld [vmem:[%s1 + $0x20b8] sm:$0xff]
    %v1083 = vld [vmem:[%s1 + $0x20c0] sm:$0xff]
    %v1084 = vld [vmem:[%s1 + $0x20c8] sm:$0xff]
    %v1085 = vld [vmem:[%s1 + $0x20d0] sm:$0xff]
    %v1086 = vld [vmem:[%s1 + $0x20d8] sm:$0xff]
    %v1087 = vld [vmem:[%s1 + $0x20e0] sm:$0xff]
    %v1088 = vld [vmem:[%s1 + $0x20e8] sm:$0xff]
    %v1089 = vld [vmem:[%s1 + $0x20f0] sm:$0xff]
    %v1090 = vld [vmem:[%s1 + $0x20f8] sm:$0xff]
    %v1091 = vld [vmem:[%s1 + $0x2100] sm:$0xff]
    %v1092 = vld [vmem:[%s1 + $0x2108] sm:$0xff]
    %v1093 = vld [vmem:[%s1 + $0x2110] sm:$0xff]
    %v1094 = vld [vmem:[%s1 + $0x2118] sm:$0xff]
    %v1095 = vld [vmem:[%s1 + $0x2120] sm:$0xff]
    %v1096 = vld [vmem:[%s1 + $0x2128] sm:$0xff]
    %v1097 = vld [vmem:[%s1 + $0x2130] sm:$0xff]
    %v1098 = vld [vmem:[%s1 + $0x2138] sm:$0xff]
    %v1099 = vld [vmem:[%s1 + $0x2140] sm:$0xff]
    %v1100 = vld [vmem:[%s1 + $0x2148] sm:$0xff]
    %v1101 = vld [vmem:[%s1 + $0x2150] sm:$0xff]
    %v1102 = vld [vmem:[%s1 + $0x2158] sm:$0xff]
    %v1103 = vld [vmem:[%s1 + $0x2160] sm:$0xff]
    %v1104 = vld [vmem:[%s1 + $0x2168] sm:$0xff]
    %v1105 = vld [vmem:[%s1 + $0x2170] sm:$0xff]
    %v1106 = vld [vmem:[%s1 + $0x2178] sm:$0xff]
    %v1107 = vld [vmem:[%s1 + $0x2180] sm:$0xff]
    %v1108 = vld [vmem:[%s1 + $0x2188] sm:$0xff]
    %v1109 = vld [vmem:[%s1 + $0x2190] sm:$0xff]
    %v1110 = vld [vmem:[%s1 + $0x2198] sm:$0xff]
    %v1111 = vld [vmem:[%s1 + $0x21a0] sm:$0xff]
    %v1112 = vld [vmem:[%s1 + $0x21a8] sm:$0xff]
    %v1113 = vld [vmem:[%s1 + $0x21b0] sm:$0xff]
    %v1114 = vld [vmem:[%s1 + $0x21b8] sm:$0xff]
    %v1115 = vld [vmem:[%s1 + $0x21c0] sm:$0xff]
    %v1116 = vld [vmem:[%s1 + $0x21c8] sm:$0xff]
    %v1117 = vld [vmem:[%s1 + $0x21d0] sm:$0xff]
    %v1118 = vld [vmem:[%s1 + $0x21d8] sm:$0xff]
    %v1119 = vld [vmem:[%s1 + $0x21e0] sm:$0xff]
    %v1120 = vld [vmem:[%s1 + $0x21e8] sm:$0xff]
    %v1121 = vld [vmem:[%s1 + $0x21f0] sm:$0xff]
    %v1122 = vld [vmem:[%s1 + $0x21f8] sm:$0xff]
    %v1123 = vld [vmem:[%s1 + $0x2200] sm:$0xff]
    %v1124 = vld [vmem:[%s1 + $0x2208] sm:$0xff]
    %v1125 = vld [vmem:[%s1 + $0x2210] sm:$0xff]
    %v1126 = vld [vmem:[%s1 + $0x2218] sm:$0xff]
    %v1127 = vld [vmem:[%s1 + $0x2220] sm:$0xff]
    %v1128 = vld [vmem:[%s1 + $0x2228] sm:$0xff]
    %v1129 = vld [vmem:[%s1 + $0x2230] sm:$0xff]
    %v1130 = vld [vmem:[%s1 + $0x2238] sm:$0xff]
    %v1131 = vld [vmem:[%s1 + $0x2240] sm:$0xff]
    %v1132 = vld [vmem:[%s1 + $0x2248] sm:$0xff]
    %v1133 = vld [vmem:[%s1 + $0x2250] sm:$0xff]
    %v1134 = vld [vmem:[%s1 + $0x2258] sm:$0xff]
    %v1135 = vld [vmem:[%s1 + $0x2260] sm:$0xff]
    %v1136 = vld [vmem:[%s1 + $0x2268] sm:$0xff]
    %v1137 = vld [vmem:[%s1 + $0x2270] sm:$0xff]
    %v1138 = vld [vmem:[%s1 + $0x2278] sm:$0xff]
    %v1139 = vld [vmem:[%s1 + $0x2280] sm:$0xff]
    %v1140 = vld [vmem:[%s1 + $0x2288] sm:$0xff]
    %v1141 = vld [vmem:[%s1 + $0x2290] sm:$0xff]
    %v1142 = vld [vmem:[%s1 + $0x2298] sm:$0xff]
    %v1143 = vld [vmem:[%s1 + $0x22a0] sm:$0xff]
    %v1144 = vld [vmem:[%s1 + $0x22a8] sm:$0xff]
    %v1145 = vld [vmem:[%s1 + $0x22b0] sm:$0xff]
    %v1146 = vld [vmem:[%s1 + $0x22b8] sm:$0xff]
    %v1147 = vld [vmem:[%s1 + $0x22c0] sm:$0xff]
    %v1148 = vld [vmem:[%s1 + $0x22c8] sm:$0xff]
    %v1149 = vld [vmem:[%s1 + $0x22d0] sm:$0xff]
    %v1150 = vld [vmem:[%s1 + $0x22d8] sm:$0xff]
    %v1151 = vld [vmem:[%s1 + $0x22e0] sm:$0xff]
    %v1152 = vld [vmem:[%s1 + $0x22e8] sm:$0xff]
    %v1153 = vld [vmem:[%s1 + $0x22f0] sm:$0xff]
    %v1154 = vld [vmem:[%s1 + $0x22f8] sm:$0xff]
    %v1155 = vld [vmem:[%s1 + $0x2300] sm:$0xff]
    %v1156 = vld [vmem:[%s1 + $0x2308] sm:$0xff]
    %v1157 = vld [vmem:[%s1 + $0x2310] sm:$0xff]
    %v1158 = vld [vmem:[%s1 + $0x2318] sm:$0xff]
    %v1159 = vld [vmem:[%s1 + $0x2320] sm:$0xff]
    %v1160 = vld [vmem:[%s1 + $0x2328] sm:$0xff]
    %v1161 = vld [vmem:[%s1 + $0x2330] sm:$0xff]
    %v1162 = vld [vmem:[%s1 + $0x2338] sm:$0xff]
    %v1163 = vld [vmem:[%s1 + $0x2340] sm:$0xff]
    %v1164 = vld [vmem:[%s1 + $0x2348] sm:$0xff]
    %v1165 = vld [vmem:[%s1 + $0x2350] sm:$0xff]
    %v1166 = vld [vmem:[%s1 + $0x2358] sm:$0xff]
    %v1167 = vld [vmem:[%s1 + $0x2360] sm:$0xff]
    %v1168 = vld [vmem:[%s1 + $0x2368] sm:$0xff]
    %v1169 = vld [vmem:[%s1 + $0x2370] sm:$0xff]
    %v1170 = vld [vmem:[%s1 + $0x2378] sm:$0xff]
    %v1171 = vld [vmem:[%s1 + $0x2380] sm:$0xff]
    %v1172 = vld [vmem:[%s1 + $0x2388] sm:$0xff]
    %v1173 = vld [vmem:[%s1 + $0x2390] sm:$0xff]
    %v1174 = vld [vmem:[%s1 + $0x2398] sm:$0xff]
    %v1175 = vld [vmem:[%s1 + $0x23a0] sm:$0xff]
    %v1176 = vld [vmem:[%s1 + $0x23a8] sm:$0xff]
    %v1177 = vld [vmem:[%s1 + $0x23b0] sm:$0xff]
    %v1178 = vld [vmem:[%s1 + $0x23b8] sm:$0xff]
    %v1179 = vld [vmem:[%s1 + $0x23c0] sm:$0xff]
    %v1180 = vld [vmem:[%s1 + $0x23c8] sm:$0xff]
    %v1181 = vld [vmem:[%s1 + $0x23d0] sm:$0xff]
    %v1182 = vld [vmem:[%s1 + $0x23d8] sm:$0xff]
    %v1183 = vld [vmem:[%s1 + $0x23e0] sm:$0xff]
    %v1184 = vld [vmem:[%s1 + $0x23e8] sm:$0xff]
    %v1185 = vld [vmem:[%s1 + $0x23f0] sm:$0xff]
    %v1186 = vld [vmem:[%s1 + $0x23f8] sm:$0xff]
    %v1187 = vld [vmem:[%s1 + $0x2400] sm:$0xff]
    %v1188 = vld [vmem:[%s1 + $0x2408] sm:$0xff]
    %v1189 = vld [vmem:[%s1 + $0x2410] sm:$0xff]
    %v1190 = vld [vmem:[%s1 + $0x2418] sm:$0xff]
    %v1191 = vld [vmem:[%s1 + $0x2420] sm:$0xff]
    %v1192 = vld [vmem:[%s1 + $0x2428] sm:$0xff]
    %v1193 = vld [vmem:[%s1 + $0x2430] sm:$0xff]
    %v1194 = vld [vmem:[%s1 + $0x2438] sm:$0xff]
    %v1195 = vld [vmem:[%s1 + $0x2440] sm:$0xff]
    %v1196 = vld [vmem:[%s1 + $0x2448] sm:$0xff]
    %v1197 = vld [vmem:[%s1 + $0x2450] sm:$0xff]
    %v1198 = vld [vmem:[%s1 + $0x2458] sm:$0xff]
    %v1199 = vld [vmem:[%s1 + $0x2460] sm:$0xff]
    %v1200 = vld [vmem:[%s1 + $0x2468] sm:$0xff]
    %v1201 = vld [vmem:[%s1 + $0x2470] sm:$0xff]
    %v1202 = vld [vmem:[%s1 + $0x2478] sm:$0xff]
    %v1203 = vld [vmem:[%s1 + $0x2480] sm:$0xff]
    %v1204 = vld [vmem:[%s1 + $0x2488] sm:$0xff]
    %v1205 = vld [vmem:[%s1 + $0x2490] sm:$0xff]
    %v1206 = vld [vmem:[%s1 + $0x2498] sm:$0xff]
    %v1207 = vld [vmem:[%s1 + $0x24a0] sm:$0xff]
    %v1208 = vld [vmem:[%s1 + $0x24a8] sm:$0xff]
    %v1209 = vld [vmem:[%s1 + $0x24b0] sm:$0xff]
    %v1210 = vld [vmem:[%s1 + $0x24b8] sm:$0xff]
    %vm1211 = vcmask 523264
    %v1213 = vsel %vm1211, %v34, 0
    %1215 = vmatprep.subr.mxu0 %v36
    %1216 = vmatpush1.msra.mxu0 %v35
    %1217 = vmatprep.subr.mxu0 %v43
    %1218 = vmatpush1.msra.mxu0 %v42
    %1219 = vmatprep.subr.mxu0 %v50
    %1220 = vmatpush1.msra.mxu0 %v49
    %1221 = vmatprep.subr.mxu0 %v57
    %1222 = vmatpush1.msra.mxu0 %v56
    %1223 = vmatprep.subr.mxu0 %v64
    %1224 = vmatpush1.msra.mxu0 %v63
    %1225 = vmatprep.subr.mxu0 %v71
    %1226 = vmatpush1.msra.mxu0 %v70
    %1227 = vmatprep.subr.mxu0 %v78
    %1228 = vmatpush1.msra.mxu0 %v77
    %1229 = vmatprep.subr.mxu0 %v85
    %1230 = vmatpush1.msra.mxu0 %v84
    %1231 = vmatprep.subr.mxu0 %v92
    %1232 = vmatpush1.msra.mxu0 %v91
    %1233 = vmatprep.subr.mxu0 %v99
    %1234 = vmatpush1.msra.mxu0 %v98
    %1235 = vmatprep.subr.mxu0 %v106
    %1236 = vmatpush1.msra.mxu0 %v105
    %1237 = vmatprep.subr.mxu0 %v113
    %1238 = vmatpush1.msra.mxu0 %v112
    %1239 = vmatprep.subr.mxu0 %v120
    %1240 = vmatpush1.msra.mxu0 %v119
    %1241 = vmatprep.subr.mxu0 %v127
    %1242 = vmatpush1.msra.mxu0 %v126
    %1243 = vmatprep.subr.mxu0 %v134
    %1244 = vmatpush1.msra.mxu0 %v133
    %1245 = vmatprep.subr.mxu0 %v141
    %1246 = vmatpush1.msra.mxu0 %v140
    %1247 = vmatprep.subr.mxu0 %v148
    %1248 = vmatpush1.msra.mxu0 %v147
    %1249 = vmatprep.subr.mxu0 %v155
    %1250 = vmatpush1.msra.mxu0 %v154
    %1251 = vmatprep.subr.mxu0 %v162
    %1252 = vmatpush1.msra.mxu0 %v161
    %1253 = vmatprep.subr.mxu0 %v169
    %1254 = vmatpush1.msra.mxu0 %v168
    %1255 = vmatprep.subr.mxu0 %v176
    %1256 = vmatpush1.msra.mxu0 %v175
    %1257 = vmatprep.subr.mxu0 %v183
    %1258 = vmatpush1.msra.mxu0 %v182
    %1259 = vmatprep.subr.mxu0 %v190
    %1260 = vmatpush1.msra.mxu0 %v189
    %1261 = vmatprep.subr.mxu0 %v197
    %1262 = vmatpush1.msra.mxu0 %v196
    %1263 = vmatprep.subr.mxu0 %v204
    %1264 = vmatpush1.msra.mxu0 %v203
    %1265 = vmatprep.subr.mxu0 %v211
    %1266 = vmatpush1.msra.mxu0 %v210
    %1267 = vmatprep.subr.mxu0 %v218
    %1268 = vmatpush1.msra.mxu0 %v217
    %1269 = vmatprep.subr.mxu0 %v225
    %1270 = vmatpush1.msra.mxu0 %v224
    %1271 = vmatprep.subr.mxu0 %v232
    %1272 = vmatpush1.msra.mxu0 %v231
    %1273 = vmatprep.subr.mxu0 %v239
    %1274 = vmatpush1.msra.mxu0 %v238
    %1275 = vmatprep.subr.mxu0 %v246
    %1276 = vmatpush1.msra.mxu0 %v245
    %1277 = vmatprep.subr.mxu0 %v253
    %1278 = vmatpush1.msra.mxu0 %v252
    %1279 = vmatprep.mubr.f32.mxu0 %v25
    %1280 = vmatmul.mubr.f32.gmra.mrb[0].mxu0 %v24
    %v1281 = vpop.f32.mrb[0].mxu0
    %v1282 = vadd.f32 0.0, %v1281
    %v1283 = vpop.f32.mrb[0].mxu0
    %v1284 = vadd.f32 0.0, %v1283
    %1285 = vdwg.mxu0
    %1286 = vmatprep.subr.mxu0 %v260
    %1287 = vmatpush1.msra.mxu0 %v259
    %1288 = vmatprep.subr.mxu0 %v267
    %1289 = vmatpush1.msra.mxu0 %v266
    %1290 = vmatprep.subr.mxu0 %v274
    %1291 = vmatpush1.msra.mxu0 %v273
    %1292 = vmatprep.subr.mxu0 %v281
    %1293 = vmatpush1.msra.mxu0 %v280
    %1294 = vmatprep.subr.mxu0 %v288
    %1295 = vmatpush1.msra.mxu0 %v287
    %1296 = vmatprep.subr.mxu0 %v295
    %1297 = vmatpush1.msra.mxu0 %v294
    %1298 = vmatprep.subr.mxu0 %v302
    %1299 = vmatpush1.msra.mxu0 %v301
    %1300 = vmatprep.subr.mxu0 %v309
    %1301 = vmatpush1.msra.mxu0 %v308
    %1302 = vmatprep.subr.mxu0 %v316
    %1303 = vmatpush1.msra.mxu0 %v315
    %1304 = vmatprep.subr.mxu0 %v323
    %1305 = vmatpush1.msra.mxu0 %v322
    %1306 = vmatprep.subr.mxu0 %v330
    %1307 = vmatpush1.msra.mxu0 %v329
    %1308 = vmatprep.subr.mxu0 %v337
    %1309 = vmatpush1.msra.mxu0 %v336
    %1310 = vmatprep.subr.mxu0 %v344
    %1311 = vmatpush1.msra.mxu0 %v343
    %1312 = vmatprep.subr.mxu0 %v351
    %1313 = vmatpush1.msra.mxu0 %v350
    %1314 = vmatprep.subr.mxu0 %v358
    %1315 = vmatpush1.msra.mxu0 %v357
    %1316 = vmatprep.subr.mxu0 %v365
    %1317 = vmatpush1.msra.mxu0 %v364
    %1318 = vmatprep.subr.mxu0 %v372
    %1319 = vmatpush1.msra.mxu0 %v371
    %1320 = vmatprep.subr.mxu0 %v379
    %1321 = vmatpush1.msra.mxu0 %v378
    %1322 = vmatprep.subr.mxu0 %v386
    %1323 = vmatpush1.msra.mxu0 %v385
    %1324 = vmatprep.subr.mxu0 %v393
    %1325 = vmatpush1.msra.mxu0 %v392
    %1326 = vmatprep.subr.mxu0 %v400
    %1327 = vmatpush1.msra.mxu0 %v399
    %1328 = vmatprep.subr.mxu0 %v407
    %1329 = vmatpush1.msra.mxu0 %v406
    %1330 = vmatprep.subr.mxu0 %v414
    %1331 = vmatpush1.msra.mxu0 %v413
    %1332 = vmatprep.subr.mxu0 %v421
    %1333 = vmatpush1.msra.mxu0 %v420
    %1334 = vmatprep.subr.mxu0 %v428
    %1335 = vmatpush1.msra.mxu0 %v427
    %1336 = vmatprep.subr.mxu0 %v435
    %1337 = vmatpush1.msra.mxu0 %v434
    %1338 = vmatprep.subr.mxu0 %v442
    %1339 = vmatpush1.msra.mxu0 %v441
    %1340 = vmatprep.subr.mxu0 %v449
    %1341 = vmatpush1.msra.mxu0 %v448
    %1342 = vmatprep.subr.mxu0 %v456
    %1343 = vmatpush1.msra.mxu0 %v455
    %1344 = vmatprep.subr.mxu0 %v463
    %1345 = vmatpush1.msra.mxu0 %v462
    %1346 = vmatprep.subr.mxu0 %v470
    %1347 = vmatpush1.msra.mxu0 %v469
    %1348 = vmatprep.subr.mxu0 %v477
    %1349 = vmatpush1.msra.mxu0 %v476
    %1350 = vmatprep.mubr.f32.mxu0 %v27
    %1351 = vmatmul.mubr.f32.gmra.mrb[0].mxu0 %v26
    %v1352 = vpop.f32.mrb[0].mxu0
    %v1353 = vadd.f32 %v1282, %v1352
    %v1354 = vpop.f32.mrb[0].mxu0
    %v1355 = vadd.f32 %v1284, %v1354
    %1356 = vdwg.mxu0
    %1357 = vmatprep.subr.mxu0 %v484
    %1358 = vmatpush1.msra.mxu0 %v483
    %1359 = vmatprep.subr.mxu0 %v491
    %1360 = vmatpush1.msra.mxu0 %v490
    %1361 = vmatprep.subr.mxu0 %v498
    %1362 = vmatpush1.msra.mxu0 %v497
    %1363 = vmatprep.subr.mxu0 %v505
    %1364 = vmatpush1.msra.mxu0 %v504
    %1365 = vmatprep.subr.mxu0 %v512
    %1366 = vmatpush1.msra.mxu0 %v511
    %1367 = vmatprep.subr.mxu0 %v519
    %1368 = vmatpush1.msra.mxu0 %v518
    %1369 = vmatprep.subr.mxu0 %v526
    %1370 = vmatpush1.msra.mxu0 %v525
    %1371 = vmatprep.subr.mxu0 %v533
    %1372 = vmatpush1.msra.mxu0 %v532
    %1373 = vmatprep.subr.mxu0 %v540
    %1374 = vmatpush1.msra.mxu0 %v539
    %1375 = vmatprep.subr.mxu0 %v547
    %1376 = vmatpush1.msra.mxu0 %v546
    %1377 = vmatprep.subr.mxu0 %v554
    %1378 = vmatpush1.msra.mxu0 %v553
    %1379 = vmatprep.subr.mxu0 %v561
    %1380 = vmatpush1.msra.mxu0 %v560
    %1381 = vmatprep.subr.mxu0 %v568
    %1382 = vmatpush1.msra.mxu0 %v567
    %1383 = vmatprep.subr.mxu0 %v575
    %1384 = vmatpush1.msra.mxu0 %v574
    %1385 = vmatprep.subr.mxu0 %v582
    %1386 = vmatpush1.msra.mxu0 %v581
    %1387 = vmatprep.subr.mxu0 %v589
    %1388 = vmatpush1.msra.mxu0 %v588
    %1389 = vmatprep.subr.mxu0 %v596
    %1390 = vmatpush1.msra.mxu0 %v595
    %1391 = vmatprep.subr.mxu0 %v603
    %1392 = vmatpush1.msra.mxu0 %v602
    %1393 = vmatprep.subr.mxu0 %v610
    %1394 = vmatpush1.msra.mxu0 %v609
    %1395 = vmatprep.subr.mxu0 %v617
    %1396 = vmatpush1.msra.mxu0 %v616
    %1397 = vmatprep.subr.mxu0 %v624
    %1398 = vmatpush1.msra.mxu0 %v623
    %1399 = vmatprep.subr.mxu0 %v631
    %1400 = vmatpush1.msra.mxu0 %v630
    %1401 = vmatprep.subr.mxu0 %v638
    %1402 = vmatpush1.msra.mxu0 %v637
    %1403 = vmatprep.subr.mxu0 %v645
    %1404 = vmatpush1.msra.mxu0 %v644
    %1405 = vmatprep.subr.mxu0 %v652
    %1406 = vmatpush1.msra.mxu0 %v651
    %1407 = vmatprep.subr.mxu0 %v659
    %1408 = vmatpush1.msra.mxu0 %v658
    %1409 = vmatprep.subr.mxu0 %v666
    %1410 = vmatpush1.msra.mxu0 %v665
    %1411 = vmatprep.subr.mxu0 %v673
    %1412 = vmatpush1.msra.mxu0 %v672
    %1413 = vmatprep.subr.mxu0 %v680
    %1414 = vmatpush1.msra.mxu0 %v679
    %1415 = vmatprep.subr.mxu0 %v687
    %1416 = vmatpush1.msra.mxu0 %v686
    %1417 = vmatprep.subr.mxu0 %v694
    %1418 = vmatpush1.msra.mxu0 %v693
    %1419 = vmatprep.subr.mxu0 %v701
    %1420 = vmatpush1.msra.mxu0 %v700
    %1421 = vmatprep.mubr.f32.mxu0 %v29
    %1422 = vmatmul.mubr.f32.gmra.mrb[0].mxu0 %v28
    %v1423 = vpop.f32.mrb[0].mxu0
    %v1424 = vadd.f32 %v1353, %v1423
    %v1425 = vpop.f32.mrb[0].mxu0
    %v1426 = vadd.f32 %v1355, %v1425
    %1427 = vdwg.mxu0
    %1428 = vmatprep.subr.mxu0 %v708
    %1429 = vmatpush1.msra.mxu0 %v707
    %1430 = vmatprep.subr.mxu0 %v715
    %1431 = vmatpush1.msra.mxu0 %v714
    %1432 = vmatprep.subr.mxu0 %v722
    %1433 = vmatpush1.msra.mxu0 %v721
    %1434 = vmatprep.subr.mxu0 %v729
    %1435 = vmatpush1.msra.mxu0 %v728
    %1436 = vmatprep.subr.mxu0 %v736
    %1437 = vmatpush1.msra.mxu0 %v735
    %1438 = vmatprep.subr.mxu0 %v743
    %1439 = vmatpush1.msra.mxu0 %v742
    %1440 = vmatprep.subr.mxu0 %v750
    %1441 = vmatpush1.msra.mxu0 %v749
    %1442 = vmatprep.subr.mxu0 %v757
    %1443 = vmatpush1.msra.mxu0 %v756
    %1444 = vmatprep.subr.mxu0 %v764
    %1445 = vmatpush1.msra.mxu0 %v763
    %1446 = vmatprep.subr.mxu0 %v771
    %1447 = vmatpush1.msra.mxu0 %v770
    %1448 = vmatprep.subr.mxu0 %v778
    %1449 = vmatpush1.msra.mxu0 %v777
    %1450 = vmatprep.subr.mxu0 %v785
    %1451 = vmatpush1.msra.mxu0 %v784
    %1452 = vmatprep.subr.mxu0 %v792
    %1453 = vmatpush1.msra.mxu0 %v791
    %1454 = vmatprep.subr.mxu0 %v799
    %1455 = vmatpush1.msra.mxu0 %v798
    %1456 = vmatprep.subr.mxu0 %v806
    %1457 = vmatpush1.msra.mxu0 %v805
    %1458 = vmatprep.subr.mxu0 %v813
    %1459 = vmatpush1.msra.mxu0 %v812
    %1460 = vmatprep.subr.mxu0 %v820
    %1461 = vmatpush1.msra.mxu0 %v819
    %1462 = vmatprep.subr.mxu0 %v827
    %1463 = vmatpush1.msra.mxu0 %v826
    %1464 = vmatprep.subr.mxu0 %v834
    %1465 = vmatpush1.msra.mxu0 %v833
    %1466 = vmatprep.subr.mxu0 %v841
    %1467 = vmatpush1.msra.mxu0 %v840
    %1468 = vmatprep.subr.mxu0 %v848
    %1469 = vmatpush1.msra.mxu0 %v847
    %1470 = vmatprep.subr.mxu0 %v855
    %1471 = vmatpush1.msra.mxu0 %v854
    %1472 = vmatprep.subr.mxu0 %v862
    %1473 = vmatpush1.msra.mxu0 %v861
    %1474 = vmatprep.subr.mxu0 %v869
    %1475 = vmatpush1.msra.mxu0 %v868
    %1476 = vmatprep.subr.mxu0 %v876
    %1477 = vmatpush1.msra.mxu0 %v875
    %1478 = vmatprep.subr.mxu0 %v883
    %1479 = vmatpush1.msra.mxu0 %v882
    %1480 = vmatprep.subr.mxu0 %v890
    %1481 = vmatpush1.msra.mxu0 %v889
    %1482 = vmatprep.subr.mxu0 %v897
    %1483 = vmatpush1.msra.mxu0 %v896
    %1484 = vmatprep.subr.mxu0 %v904
    %1485 = vmatpush1.msra.mxu0 %v903
    %1486 = vmatprep.subr.mxu0 %v911
    %1487 = vmatpush1.msra.mxu0 %v910
    %1488 = vmatprep.subr.mxu0 %v918
    %1489 = vmatpush1.msra.mxu0 %v917
    %1490 = vmatprep.subr.mxu0 %v925
    %1491 = vmatpush1.msra.mxu0 %v924
    %1492 = vmatprep.mubr.f32.mxu0 %v31
    %1493 = vmatmul.mubr.f32.gmra.mrb[0].mxu0 %v30
    %v1494 = vpop.f32.mrb[0].mxu0
    %v1495 = vadd.f32 %v1424, %v1494
    %v1496 = vpop.f32.mrb[0].mxu0
    %v1497 = vadd.f32 %v1426, %v1496
    %1498 = vdwg.mxu0
    %1499 = vmatprep.subr.mxu0 %v932
    %1500 = vmatpush1.msra.mxu0 %v931
    %1501 = vmatprep.subr.mxu0 %v939
    %1502 = vmatpush1.msra.mxu0 %v938
    %1503 = vmatprep.subr.mxu0 %v946
    %1504 = vmatpush1.msra.mxu0 %v945
    %1505 = vmatprep.subr.mxu0 %v953
    %1506 = vmatpush1.msra.mxu0 %v952
    %1507 = vmatprep.subr.mxu0 %v960
    %1508 = vmatpush1.msra.mxu0 %v959
    %1509 = vmatprep.subr.mxu0 %v967
    %1510 = vmatpush1.msra.mxu0 %v966
    %1511 = vmatprep.subr.mxu0 %v974
    %1512 = vmatpush1.msra.mxu0 %v973
    %1513 = vmatprep.subr.mxu0 %v981
    %1514 = vmatpush1.msra.mxu0 %v980
    %1515 = vmatprep.subr.mxu0 %v988
    %1516 = vmatpush1.msra.mxu0 %v987
    %1517 = vmatprep.subr.mxu0 %v995
    %1518 = vmatpush1.msra.mxu0 %v994
    %1519 = vmatprep.subr.mxu0 %v1002
    %1520 = vmatpush1.msra.mxu0 %v1001
    %1521 = vmatprep.subr.mxu0 %v1009
    %1522 = vmatpush1.msra.mxu0 %v1008
    %1523 = vmatprep.subr.mxu0 %v1016
    %1524 = vmatpush1.msra.mxu0 %v1015
    %1525 = vmatprep.subr.mxu0 %v1023
    %1526 = vmatpush1.msra.mxu0 %v1022
    %1527 = vmatprep.subr.mxu0 %v1030
    %1528 = vmatpush1.msra.mxu0 %v1029
    %1529 = vmatprep.subr.mxu0 %v1037
    %1530 = vmatpush1.msra.mxu0 %v1036
    %1531 = vmatprep.subr.mxu0 %v1044
    %1532 = vmatpush1.msra.mxu0 %v1043
    %1533 = vmatprep.subr.mxu0 %v1051
    %1534 = vmatpush1.msra.mxu0 %v1050
    %1535 = vmatprep.subr.mxu0 %v1058
    %1536 = vmatpush1.msra.mxu0 %v1057
    %1537 = vmatprep.subr.mxu0 %v1065
    %1538 = vmatpush1.msra.mxu0 %v1064
    %1539 = vmatprep.subr.mxu0 %v1072
    %1540 = vmatpush1.msra.mxu0 %v1071
    %1541 = vmatprep.subr.mxu0 %v1079
    %1542 = vmatpush1.msra.mxu0 %v1078
    %1543 = vmatprep.subr.mxu0 %v1086
    %1544 = vmatpush1.msra.mxu0 %v1085
    %1545 = vmatprep.subr.mxu0 %v1093
    %1546 = vmatpush1.msra.mxu0 %v1092
    %1547 = vmatprep.subr.mxu0 %v1100
    %1548 = vmatpush1.msra.mxu0 %v1099
    %1549 = vmatprep.subr.mxu0 %v1107
    %1550 = vmatpush1.msra.mxu0 %v1106
    %1551 = vmatprep.subr.mxu0 %v1114
    %1552 = vmatpush1.msra.mxu0 %v1113
    %1553 = vmatprep.subr.mxu0 %v1121
    %1554 = vmatpush1.msra.mxu0 %v1120
    %1555 = vmatprep.subr.mxu0 %v1128
    %1556 = vmatpush1.msra.mxu0 %v1127
    %1557 = vmatprep.subr.mxu0 %v1135
    %1558 = vmatpush1.msra.mxu0 %v1134
    %1559 = vmatprep.subr.mxu0 %v1142
    %1560 = vmatpush1.msra.mxu0 %v1141
    %1561 = vmatprep.subr.mxu0 %v1149
    %1562 = vmatpush1.msra.mxu0 %v1148
    %1563 = vmatprep.mubr.f32.mxu0 %v33
    %1564 = vmatmul.mubr.f32.gmra.mrb[0].mxu0 %v32
    %v1565 = vpop.f32.mrb[0].mxu0
    %v1566 = vadd.f32 %v1495, %v1565
    %v1567 = vpop.f32.mrb[0].mxu0
    %v1568 = vadd.f32 %v1497, %v1567
    %1569 = vdwg.mxu0
    %1570 = vmatprep.subr.mxu0 %v1156
    %1571 = vmatpush1.msra.mxu0 %v1155
    %1572 = vmatprep.subr.mxu0 %v1163
    %1573 = vmatpush1.msra.mxu0 %v1162
    %1574 = vmatprep.subr.mxu0 %v1170
    %1575 = vmatpush1.msra.mxu0 %v1169
    %1576 = vmatprep.subr.mxu0 %v1177
    %1577 = vmatpush1.msra.mxu0 %v1176
    %1578 = vmatprep.subr.mxu0 %v1184
    %1579 = vmatpush1.msra.mxu0 %v1183
    %1580 = vmatprep.subr.mxu0 %v1191
    %1581 = vmatpush1.msra.mxu0 %v1190
    %1582 = vmatprep.subr.mxu0 %v1198
    %1583 = vmatpush1.msra.mxu0 %v1197
    %1584 = vmatprep.subr.mxu0 %v1205
    %1585 = vmatpush1.msra.mxu0 %v1204
    %1586 = vmatprep.subr.mxu0 0.0
    %1587 = vmatpush1.msra.mxu0 0.0
    %1588 = vmatprep.subr.mxu0 0.0
    %1589 = vmatpush1.msra.mxu0 0.0
    %1590 = vmatprep.subr.mxu0 0.0
    %1591 = vmatpush1.msra.mxu0 0.0
    %1592 = vmatprep.subr.mxu0 0.0
    %1593 = vmatpush1.msra.mxu0 0.0
    %1594 = vmatprep.subr.mxu0 0.0
    %1595 = vmatpush1.msra.mxu0 0.0
    %1596 = vmatprep.subr.mxu0 0.0
    %1597 = vmatpush1.msra.mxu0 0.0
    %1598 = vmatprep.subr.mxu0 0.0
    %1599 = vmatpush1.msra.mxu0 0.0
    %1600 = vmatprep.subr.mxu0 0.0
    %1601 = vmatpush1.msra.mxu0 0.0
    %1602 = vmatprep.subr.mxu0 0.0
    %1603 = vmatpush1.msra.mxu0 0.0
    %1604 = vmatprep.subr.mxu0 0.0
    %1605 = vmatpush1.msra.mxu0 0.0
    %1606 = vmatprep.subr.mxu0 0.0
    %1607 = vmatpush1.msra.mxu0 0.0
    %1608 = vmatprep.subr.mxu0 0.0
    %1609 = vmatpush1.msra.mxu0 0.0
    %1610 = vmatprep.subr.mxu0 0.0
    %1611 = vmatpush1.msra.mxu0 0.0
    %1612 = vmatprep.subr.mxu0 0.0
    %1613 = vmatpush1.msra.mxu0 0.0
    %1614 = vmatprep.subr.mxu0 0.0
    %1615 = vmatpush1.msra.mxu0 0.0
    %1616 = vmatprep.subr.mxu0 0.0
    %1617 = vmatpush1.msra.mxu0 0.0
    %1618 = vmatprep.subr.mxu0 0.0
    %1619 = vmatpush1.msra.mxu0 0.0
    %1620 = vmatprep.subr.mxu0 0.0
    %1621 = vmatpush1.msra.mxu0 0.0
    %1622 = vmatprep.subr.mxu0 0.0
    %1623 = vmatpush1.msra.mxu0 0.0
    %1624 = vmatprep.subr.mxu0 0.0
    %1625 = vmatpush1.msra.mxu0 0.0
    %1626 = vmatprep.subr.mxu0 0.0
    %1627 = vmatpush1.msra.mxu0 0.0
    %1628 = vmatprep.subr.mxu0 0.0
    %1629 = vmatpush1.msra.mxu0 0.0
    %1630 = vmatprep.subr.mxu0 0.0
    %1631 = vmatpush1.msra.mxu0 0.0
    %1632 = vmatprep.subr.mxu0 0.0
    %1633 = vmatpush1.msra.mxu0 0.0
    %1634 = vmatprep.mubr.f32.mxu0 0.0
    %1635 = vmatmul.mubr.f32.gmra.mrb[0].mxu0 %v1213
    %v1636 = vpop.f32.mrb[0].mxu0
    %v1637 = vadd.f32 %v1566, %v1636
    %v1638 = vpop.f32.mrb[0].mxu0
    %v1639 = vadd.f32 %v1568, %v1638
    %1640 = vdwg.mxu0
    %1641 = vmatprep.subr.mxu0 %v38
    %1642 = vmatpush1.msra.mxu0 %v37
    %1643 = vmatprep.subr.mxu0 %v45
    %1644 = vmatpush1.msra.mxu0 %v44
    %1645 = vmatprep.subr.mxu0 %v52
    %1646 = vmatpush1.msra.mxu0 %v51
    %1647 = vmatprep.subr.mxu0 %v59
    %1648 = vmatpush1.msra.mxu0 %v58
    %1649 = vmatprep.subr.mxu0 %v66
    %1650 = vmatpush1.msra.mxu0 %v65
    %1651 = vmatprep.subr.mxu0 %v73
    %1652 = vmatpush1.msra.mxu0 %v72
    %1653 = vmatprep.subr.mxu0 %v80
    %1654 = vmatpush1.msra.mxu0 %v79
    %1655 = vmatprep.subr.mxu0 %v87
    %1656 = vmatpush1.msra.mxu0 %v86
    %1657 = vmatprep.subr.mxu0 %v94
    %1658 = vmatpush1.msra.mxu0 %v93
    %1659 = vmatprep.subr.mxu0 %v101
    %1660 = vmatpush1.msra.mxu0 %v100
    %1661 = vmatprep.subr.mxu0 %v108
    %1662 = vmatpush1.msra.mxu0 %v107
    %1663 = vmatprep.subr.mxu0 %v115
    %1664 = vmatpush1.msra.mxu0 %v114
    %1665 = vmatprep.subr.mxu0 %v122
    %1666 = vmatpush1.msra.mxu0 %v121
    %1667 = vmatprep.subr.mxu0 %v129
    %1668 = vmatpush1.msra.mxu0 %v128
    %1669 = vmatprep.subr.mxu0 %v136
    %1670 = vmatpush1.msra.mxu0 %v135
    %1671 = vmatprep.subr.mxu0 %v143
    %1672 = vmatpush1.msra.mxu0 %v142
    %1673 = vmatprep.subr.mxu0 %v150
    %1674 = vmatpush1.msra.mxu0 %v149
    %1675 = vmatprep.subr.mxu0 %v157
    %1676 = vmatpush1.msra.mxu0 %v156
    %1677 = vmatprep.subr.mxu0 %v164
    %1678 = vmatpush1.msra.mxu0 %v163
    %1679 = vmatprep.subr.mxu0 %v171
    %1680 = vmatpush1.msra.mxu0 %v170
    %1681 = vmatprep.subr.mxu0 %v178
    %1682 = vmatpush1.msra.mxu0 %v177
    %1683 = vmatprep.subr.mxu0 %v185
    %1684 = vmatpush1.msra.mxu0 %v184
    %1685 = vmatprep.subr.mxu0 %v192
    %1686 = vmatpush1.msra.mxu0 %v191
    %1687 = vmatprep.subr.mxu0 %v199
    %1688 = vmatpush1.msra.mxu0 %v198
    %1689 = vmatprep.subr.mxu0 %v206
    %1690 = vmatpush1.msra.mxu0 %v205
    %1691 = vmatprep.subr.mxu0 %v213
    %1692 = vmatpush1.msra.mxu0 %v212
    %1693 = vmatprep.subr.mxu0 %v220
    %1694 = vmatpush1.msra.mxu0 %v219
    %1695 = vmatprep.subr.mxu0 %v227
    %1696 = vmatpush1.msra.mxu0 %v226
    %1697 = vmatprep.subr.mxu0 %v234
    %1698 = vmatpush1.msra.mxu0 %v233
    %1699 = vmatprep.subr.mxu0 %v241
    %1700 = vmatpush1.msra.mxu0 %v240
    %1701 = vmatprep.subr.mxu0 %v248
    %1702 = vmatpush1.msra.mxu0 %v247
    %1703 = vmatprep.subr.mxu0 %v255
    %1704 = vmatpush1.msra.mxu0 %v254
    %1705 = vmatprep.mubr.f32.mxu0 %v25
    %1706 = vmatmul.mubr.f32.gmra.mrb[0].mxu0 %v24
    %v1707 = vpop.f32.mrb[0].mxu0
    %v1708 = vadd.f32 0.0, %v1707
    %v1709 = vpop.f32.mrb[0].mxu0
    %v1710 = vadd.f32 0.0, %v1709
    %1711 = vdwg.mxu0
    %1712 = vmatprep.subr.mxu0 %v262
    %1713 = vmatpush1.msra.mxu0 %v261
    %1714 = vmatprep.subr.mxu0 %v269
    %1715 = vmatpush1.msra.mxu0 %v268
    %1716 = vmatprep.subr.mxu0 %v276
    %1717 = vmatpush1.msra.mxu0 %v275
    %1718 = vmatprep.subr.mxu0 %v283
    %1719 = vmatpush1.msra.mxu0 %v282
    %1720 = vmatprep.subr.mxu0 %v290
    %1721 = vmatpush1.msra.mxu0 %v289
    %1722 = vmatprep.subr.mxu0 %v297
    %1723 = vmatpush1.msra.mxu0 %v296
    %1724 = vmatprep.subr.mxu0 %v304
    %1725 = vmatpush1.msra.mxu0 %v303
    %1726 = vmatprep.subr.mxu0 %v311
    %1727 = vmatpush1.msra.mxu0 %v310
    %1728 = vmatprep.subr.mxu0 %v318
    %1729 = vmatpush1.msra.mxu0 %v317
    %1730 = vmatprep.subr.mxu0 %v325
    %1731 = vmatpush1.msra.mxu0 %v324
    %1732 = vmatprep.subr.mxu0 %v332
    %1733 = vmatpush1.msra.mxu0 %v331
    %1734 = vmatprep.subr.mxu0 %v339
    %1735 = vmatpush1.msra.mxu0 %v338
    %1736 = vmatprep.subr.mxu0 %v346
    %1737 = vmatpush1.msra.mxu0 %v345
    %1738 = vmatprep.subr.mxu0 %v353
    %1739 = vmatpush1.msra.mxu0 %v352
    %1740 = vmatprep.subr.mxu0 %v360
    %1741 = vmatpush1.msra.mxu0 %v359
    %1742 = vmatprep.subr.mxu0 %v367
    %1743 = vmatpush1.msra.mxu0 %v366
    %1744 = vmatprep.subr.mxu0 %v374
    %1745 = vmatpush1.msra.mxu0 %v373
    %1746 = vmatprep.subr.mxu0 %v381
    %1747 = vmatpush1.msra.mxu0 %v380
    %1748 = vmatprep.subr.mxu0 %v388
    %1749 = vmatpush1.msra.mxu0 %v387
    %1750 = vmatprep.subr.mxu0 %v395
    %1751 = vmatpush1.msra.mxu0 %v394
    %1752 = vmatprep.subr.mxu0 %v402
    %1753 = vmatpush1.msra.mxu0 %v401
    %1754 = vmatprep.subr.mxu0 %v409
    %1755 = vmatpush1.msra.mxu0 %v408
    %1756 = vmatprep.subr.mxu0 %v416
    %1757 = vmatpush1.msra.mxu0 %v415
    %1758 = vmatprep.subr.mxu0 %v423
    %1759 = vmatpush1.msra.mxu0 %v422
    %1760 = vmatprep.subr.mxu0 %v430
    %1761 = vmatpush1.msra.mxu0 %v429
    %1762 = vmatprep.subr.mxu0 %v437
    %1763 = vmatpush1.msra.mxu0 %v436
    %1764 = vmatprep.subr.mxu0 %v444
    %1765 = vmatpush1.msra.mxu0 %v443
    %1766 = vmatprep.subr.mxu0 %v451
    %1767 = vmatpush1.msra.mxu0 %v450
    %1768 = vmatprep.subr.mxu0 %v458
    %1769 = vmatpush1.msra.mxu0 %v457
    %1770 = vmatprep.subr.mxu0 %v465
    %1771 = vmatpush1.msra.mxu0 %v464
    %1772 = vmatprep.subr.mxu0 %v472
    %1773 = vmatpush1.msra.mxu0 %v471
    %1774 = vmatprep.subr.mxu0 %v479
    %1775 = vmatpush1.msra.mxu0 %v478
    %1776 = vmatprep.mubr.f32.mxu0 %v27
    %1777 = vmatmul.mubr.f32.gmra.mrb[0].mxu0 %v26
    %v1778 = vpop.f32.mrb[0].mxu0
    %v1779 = vadd.f32 %v1708, %v1778
    %v1780 = vpop.f32.mrb[0].mxu0
    %v1781 = vadd.f32 %v1710, %v1780
    %1782 = vdwg.mxu0
    %1783 = vmatprep.subr.mxu0 %v486
    %1784 = vmatpush1.msra.mxu0 %v485
    %1785 = vmatprep.subr.mxu0 %v493
    %1786 = vmatpush1.msra.mxu0 %v492
    %1787 = vmatprep.subr.mxu0 %v500
    %1788 = vmatpush1.msra.mxu0 %v499
    %1789 = vmatprep.subr.mxu0 %v507
    %1790 = vmatpush1.msra.mxu0 %v506
    %1791 = vmatprep.subr.mxu0 %v514
    %1792 = vmatpush1.msra.mxu0 %v513
    %1793 = vmatprep.subr.mxu0 %v521
    %1794 = vmatpush1.msra.mxu0 %v520
    %1795 = vmatprep.subr.mxu0 %v528
    %1796 = vmatpush1.msra.mxu0 %v527
    %1797 = vmatprep.subr.mxu0 %v535
    %1798 = vmatpush1.msra.mxu0 %v534
    %1799 = vmatprep.subr.mxu0 %v542
    %1800 = vmatpush1.msra.mxu0 %v541
    %1801 = vmatprep.subr.mxu0 %v549
    %1802 = vmatpush1.msra.mxu0 %v548
    %1803 = vmatprep.subr.mxu0 %v556
    %1804 = vmatpush1.msra.mxu0 %v555
    %1805 = vmatprep.subr.mxu0 %v563
    %1806 = vmatpush1.msra.mxu0 %v562
    %1807 = vmatprep.subr.mxu0 %v570
    %1808 = vmatpush1.msra.mxu0 %v569
    %1809 = vmatprep.subr.mxu0 %v577
    %1810 = vmatpush1.msra.mxu0 %v576
    %1811 = vmatprep.subr.mxu0 %v584
    %1812 = vmatpush1.msra.mxu0 %v583
    %1813 = vmatprep.subr.mxu0 %v591
    %1814 = vmatpush1.msra.mxu0 %v590
    %1815 = vmatprep.subr.mxu0 %v598
    %1816 = vmatpush1.msra.mxu0 %v597
    %1817 = vmatprep.subr.mxu0 %v605
    %1818 = vmatpush1.msra.mxu0 %v604
    %1819 = vmatprep.subr.mxu0 %v612
    %1820 = vmatpush1.msra.mxu0 %v611
    %1821 = vmatprep.subr.mxu0 %v619
    %1822 = vmatpush1.msra.mxu0 %v618
    %1823 = vmatprep.subr.mxu0 %v626
    %1824 = vmatpush1.msra.mxu0 %v625
    %1825 = vmatprep.subr.mxu0 %v633
    %1826 = vmatpush1.msra.mxu0 %v632
    %1827 = vmatprep.subr.mxu0 %v640
    %1828 = vmatpush1.msra.mxu0 %v639
    %1829 = vmatprep.subr.mxu0 %v647
    %1830 = vmatpush1.msra.mxu0 %v646
    %1831 = vmatprep.subr.mxu0 %v654
    %1832 = vmatpush1.msra.mxu0 %v653
    %1833 = vmatprep.subr.mxu0 %v661
    %1834 = vmatpush1.msra.mxu0 %v660
    %1835 = vmatprep.subr.mxu0 %v668
    %1836 = vmatpush1.msra.mxu0 %v667
    %1837 = vmatprep.subr.mxu0 %v675
    %1838 = vmatpush1.msra.mxu0 %v674
    %1839 = vmatprep.subr.mxu0 %v682
    %1840 = vmatpush1.msra.mxu0 %v681
    %1841 = vmatprep.subr.mxu0 %v689
    %1842 = vmatpush1.msra.mxu0 %v688
    %1843 = vmatprep.subr.mxu0 %v696
    %1844 = vmatpush1.msra.mxu0 %v695
    %1845 = vmatprep.subr.mxu0 %v703
    %1846 = vmatpush1.msra.mxu0 %v702
    %1847 = vmatprep.mubr.f32.mxu0 %v29
    %1848 = vmatmul.mubr.f32.gmra.mrb[0].mxu0 %v28
    %v1849 = vpop.f32.mrb[0].mxu0
    %v1850 = vadd.f32 %v1779, %v1849
    %v1851 = vpop.f32.mrb[0].mxu0
    %v1852 = vadd.f32 %v1781, %v1851
    %1853 = vdwg.mxu0
    %1854 = vmatprep.subr.mxu0 %v710
    %1855 = vmatpush1.msra.mxu0 %v709
    %1856 = vmatprep.subr.mxu0 %v717
    %1857 = vmatpush1.msra.mxu0 %v716
    %1858 = vmatprep.subr.mxu0 %v724
    %1859 = vmatpush1.msra.mxu0 %v723
    %1860 = vmatprep.subr.mxu0 %v731
    %1861 = vmatpush1.msra.mxu0 %v730
    %1862 = vmatprep.subr.mxu0 %v738
    %1863 = vmatpush1.msra.mxu0 %v737
    %1864 = vmatprep.subr.mxu0 %v745
    %1865 = vmatpush1.msra.mxu0 %v744
    %1866 = vmatprep.subr.mxu0 %v752
    %1867 = vmatpush1.msra.mxu0 %v751
    %1868 = vmatprep.subr.mxu0 %v759
    %1869 = vmatpush1.msra.mxu0 %v758
    %1870 = vmatprep.subr.mxu0 %v766
    %1871 = vmatpush1.msra.mxu0 %v765
    %1872 = vmatprep.subr.mxu0 %v773
    %1873 = vmatpush1.msra.mxu0 %v772
    %1874 = vmatprep.subr.mxu0 %v780
    %1875 = vmatpush1.msra.mxu0 %v779
    %1876 = vmatprep.subr.mxu0 %v787
    %1877 = vmatpush1.msra.mxu0 %v786
    %1878 = vmatprep.subr.mxu0 %v794
    %1879 = vmatpush1.msra.mxu0 %v793
    %1880 = vmatprep.subr.mxu0 %v801
    %1881 = vmatpush1.msra.mxu0 %v800
    %1882 = vmatprep.subr.mxu0 %v808
    %1883 = vmatpush1.msra.mxu0 %v807
    %1884 = vmatprep.subr.mxu0 %v815
    %1885 = vmatpush1.msra.mxu0 %v814
    %1886 = vmatprep.subr.mxu0 %v822
    %1887 = vmatpush1.msra.mxu0 %v821
    %1888 = vmatprep.subr.mxu0 %v829
    %1889 = vmatpush1.msra.mxu0 %v828
    %1890 = vmatprep.subr.mxu0 %v836
    %1891 = vmatpush1.msra.mxu0 %v835
    %1892 = vmatprep.subr.mxu0 %v843
    %1893 = vmatpush1.msra.mxu0 %v842
    %1894 = vmatprep.subr.mxu0 %v850
    %1895 = vmatpush1.msra.mxu0 %v849
    %1896 = vmatprep.subr.mxu0 %v857
    %1897 = vmatpush1.msra.mxu0 %v856
    %1898 = vmatprep.subr.mxu0 %v864
    %1899 = vmatpush1.msra.mxu0 %v863
    %1900 = vmatprep.subr.mxu0 %v871
    %1901 = vmatpush1.msra.mxu0 %v870
    %1902 = vmatprep.subr.mxu0 %v878
    %1903 = vmatpush1.msra.mxu0 %v877
    %1904 = vmatprep.subr.mxu0 %v885
    %1905 = vmatpush1.msra.mxu0 %v884
    %1906 = vmatprep.subr.mxu0 %v892
    %1907 = vmatpush1.msra.mxu0 %v891
    %1908 = vmatprep.subr.mxu0 %v899
    %1909 = vmatpush1.msra.mxu0 %v898
    %1910 = vmatprep.subr.mxu0 %v906
    %1911 = vmatpush1.msra.mxu0 %v905
    %1912 = vmatprep.subr.mxu0 %v913
    %1913 = vmatpush1.msra.mxu0 %v912
    %1914 = vmatprep.subr.mxu0 %v920
    %1915 = vmatpush1.msra.mxu0 %v919
    %1916 = vmatprep.subr.mxu0 %v927
    %1917 = vmatpush1.msra.mxu0 %v926
    %1918 = vmatprep.mubr.f32.mxu0 %v31
    %1919 = vmatmul.mubr.f32.gmra.mrb[0].mxu0 %v30
    %v1920 = vpop.f32.mrb[0].mxu0
    %v1921 = vadd.f32 %v1850, %v1920
    %v1922 = vpop.f32.mrb[0].mxu0
    %v1923 = vadd.f32 %v1852, %v1922
    %1924 = vdwg.mxu0
    %1925 = vmatprep.subr.mxu0 %v934
    %1926 = vmatpush1.msra.mxu0 %v933
    %1927 = vmatprep.subr.mxu0 %v941
    %1928 = vmatpush1.msra.mxu0 %v940
    %1929 = vmatprep.subr.mxu0 %v948
    %1930 = vmatpush1.msra.mxu0 %v947
    %1931 = vmatprep.subr.mxu0 %v955
    %1932 = vmatpush1.msra.mxu0 %v954
    %1933 = vmatprep.subr.mxu0 %v962
    %1934 = vmatpush1.msra.mxu0 %v961
    %1935 = vmatprep.subr.mxu0 %v969
    %1936 = vmatpush1.msra.mxu0 %v968
    %1937 = vmatprep.subr.mxu0 %v976
    %1938 = vmatpush1.msra.mxu0 %v975
    %1939 = vmatprep.subr.mxu0 %v983
    %1940 = vmatpush1.msra.mxu0 %v982
    %1941 = vmatprep.subr.mxu0 %v990
    %1942 = vmatpush1.msra.mxu0 %v989
    %1943 = vmatprep.subr.mxu0 %v997
    %1944 = vmatpush1.msra.mxu0 %v996
    %1945 = vmatprep.subr.mxu0 %v1004
    %1946 = vmatpush1.msra.mxu0 %v1003
    %1947 = vmatprep.subr.mxu0 %v1011
    %1948 = vmatpush1.msra.mxu0 %v1010
    %1949 = vmatprep.subr.mxu0 %v1018
    %1950 = vmatpush1.msra.mxu0 %v1017
    %1951 = vmatprep.subr.mxu0 %v1025
    %1952 = vmatpush1.msra.mxu0 %v1024
    %1953 = vmatprep.subr.mxu0 %v1032
    %1954 = vmatpush1.msra.mxu0 %v1031
    %1955 = vmatprep.subr.mxu0 %v1039
    %1956 = vmatpush1.msra.mxu0 %v1038
    %1957 = vmatprep.subr.mxu0 %v1046
    %1958 = vmatpush1.msra.mxu0 %v1045
    %1959 = vmatprep.subr.mxu0 %v1053
    %1960 = vmatpush1.msra.mxu0 %v1052
    %1961 = vmatprep.subr.mxu0 %v1060
    %1962 = vmatpush1.msra.mxu0 %v1059
    %1963 = vmatprep.subr.mxu0 %v1067
    %1964 = vmatpush1.msra.mxu0 %v1066
    %1965 = vmatprep.subr.mxu0 %v1074
    %1966 = vmatpush1.msra.mxu0 %v1073
    %1967 = vmatprep.subr.mxu0 %v1081
    %1968 = vmatpush1.msra.mxu0 %v1080
    %1969 = vmatprep.subr.mxu0 %v1088
    %1970 = vmatpush1.msra.mxu0 %v1087
    %1971 = vmatprep.subr.mxu0 %v1095
    %1972 = vmatpush1.msra.mxu0 %v1094
    %1973 = vmatprep.subr.mxu0 %v1102
    %1974 = vmatpush1.msra.mxu0 %v1101
    %1975 = vmatprep.subr.mxu0 %v1109
    %1976 = vmatpush1.msra.mxu0 %v1108
    %1977 = vmatprep.subr.mxu0 %v1116
    %1978 = vmatpush1.msra.mxu0 %v1115
    %1979 = vmatprep.subr.mxu0 %v1123
    %1980 = vmatpush1.msra.mxu0 %v1122
    %1981 = vmatprep.subr.mxu0 %v1130
    %1982 = vmatpush1.msra.mxu0 %v1129
    %1983 = vmatprep.subr.mxu0 %v1137
    %1984 = vmatpush1.msra.mxu0 %v1136
    %1985 = vmatprep.subr.mxu0 %v1144
    %1986 = vmatpush1.msra.mxu0 %v1143
    %1987 = vmatprep.subr.mxu0 %v1151
    %1988 = vmatpush1.msra.mxu0 %v1150
    %1989 = vmatprep.mubr.f32.mxu0 %v33
    %1990 = vmatmul.mubr.f32.gmra.mrb[0].mxu0 %v32
    %v1991 = vpop.f32.mrb[0].mxu0
    %v1992 = vadd.f32 %v1921, %v1991
    %v1993 = vpop.f32.mrb[0].mxu0
    %v1994 = vadd.f32 %v1923, %v1993
    %1995 = vdwg.mxu0
    %1996 = vmatprep.subr.mxu0 %v1158
    %1997 = vmatpush1.msra.mxu0 %v1157
    %1998 = vmatprep.subr.mxu0 %v1165
    %1999 = vmatpush1.msra.mxu0 %v1164
    %2000 = vmatprep.subr.mxu0 %v1172
    %2001 = vmatpush1.msra.mxu0 %v1171
    %2002 = vmatprep.subr.mxu0 %v1179
    %2003 = vmatpush1.msra.mxu0 %v1178
    %2004 = vmatprep.subr.mxu0 %v1186
    %2005 = vmatpush1.msra.mxu0 %v1185
    %2006 = vmatprep.subr.mxu0 %v1193
    %2007 = vmatpush1.msra.mxu0 %v1192
    %2008 = vmatprep.subr.mxu0 %v1200
    %2009 = vmatpush1.msra.mxu0 %v1199
    %2010 = vmatprep.subr.mxu0 %v1207
    %2011 = vmatpush1.msra.mxu0 %v1206
    %2012 = vmatprep.subr.mxu0 0.0
    %2013 = vmatpush1.msra.mxu0 0.0
    %2014 = vmatprep.subr.mxu0 0.0
    %2015 = vmatpush1.msra.mxu0 0.0
    %2016 = vmatprep.subr.mxu0 0.0
    %2017 = vmatpush1.msra.mxu0 0.0
    %2018 = vmatprep.subr.mxu0 0.0
    %2019 = vmatpush1.msra.mxu0 0.0
    %2020 = vmatprep.subr.mxu0 0.0
    %2021 = vmatpush1.msra.mxu0 0.0
    %2022 = vmatprep.subr.mxu0 0.0
    %2023 = vmatpush1.msra.mxu0 0.0
    %2024 = vmatprep.subr.mxu0 0.0
    %2025 = vmatpush1.msra.mxu0 0.0
    %2026 = vmatprep.subr.mxu0 0.0
    %2027 = vmatpush1.msra.mxu0 0.0
    %2028 = vmatprep.subr.mxu0 0.0
    %2029 = vmatpush1.msra.mxu0 0.0
    %2030 = vmatprep.subr.mxu0 0.0
    %2031 = vmatpush1.msra.mxu0 0.0
    %2032 = vmatprep.subr.mxu0 0.0
    %2033 = vmatpush1.msra.mxu0 0.0
    %2034 = vmatprep.subr.mxu0 0.0
    %2035 = vmatpush1.msra.mxu0 0.0
    %2036 = vmatprep.subr.mxu0 0.0
    %2037 = vmatpush1.msra.mxu0 0.0
    %2038 = vmatprep.subr.mxu0 0.0
    %2039 = vmatpush1.msra.mxu0 0.0
    %2040 = vmatprep.subr.mxu0 0.0
    %2041 = vmatpush1.msra.mxu0 0.0
    %2042 = vmatprep.subr.mxu0 0.0
    %2043 = vmatpush1.msra.mxu0 0.0
    %2044 = vmatprep.subr.mxu0 0.0
    %2045 = vmatpush1.msra.mxu0 0.0
    %2046 = vmatprep.subr.mxu0 0.0
    %2047 = vmatpush1.msra.mxu0 0.0
    %2048 = vmatprep.subr.mxu0 0.0
    %2049 = vmatpush1.msra.mxu0 0.0
    %2050 = vmatprep.subr.mxu0 0.0
    %2051 = vmatpush1.msra.mxu0 0.0
    %2052 = vmatprep.subr.mxu0 0.0
    %2053 = vmatpush1.msra.mxu0 0.0
    %2054 = vmatprep.subr.mxu0 0.0
    %2055 = vmatpush1.msra.mxu0 0.0
    %2056 = vmatprep.subr.mxu0 0.0
    %2057 = vmatpush1.msra.mxu0 0.0
    %2058 = vmatprep.subr.mxu0 0.0
    %2059 = vmatpush1.msra.mxu0 0.0
    %2060 = vmatprep.mubr.f32.mxu0 0.0
    %2061 = vmatmul.mubr.f32.gmra.mrb[0].mxu0 %v1213
    %v2062 = vpop.f32.mrb[0].mxu0
    %v2063 = vadd.f32 %v1992, %v2062
    %v2064 = vpop.f32.mrb[0].mxu0
    %v2065 = vadd.f32 %v1994, %v2064
    %2066 = vdwg.mxu0
    %2067 = vmatprep.subr.mxu0 %v40
    %2068 = vmatpush1.msra.mxu0 %v39
    %2069 = vmatprep.subr.mxu0 %v47
    %2070 = vmatpush1.msra.mxu0 %v46
    %2071 = vmatprep.subr.mxu0 %v54
    %2072 = vmatpush1.msra.mxu0 %v53
    %2073 = vmatprep.subr.mxu0 %v61
    %2074 = vmatpush1.msra.mxu0 %v60
    %2075 = vmatprep.subr.mxu0 %v68
    %2076 = vmatpush1.msra.mxu0 %v67
    %2077 = vmatprep.subr.mxu0 %v75
    %2078 = vmatpush1.msra.mxu0 %v74
    %2079 = vmatprep.subr.mxu0 %v82
    %2080 = vmatpush1.msra.mxu0 %v81
    %2081 = vmatprep.subr.mxu0 %v89
    %2082 = vmatpush1.msra.mxu0 %v88
    %2083 = vmatprep.subr.mxu0 %v96
    %2084 = vmatpush1.msra.mxu0 %v95
    %2085 = vmatprep.subr.mxu0 %v103
    %2086 = vmatpush1.msra.mxu0 %v102
    %2087 = vmatprep.subr.mxu0 %v110
    %2088 = vmatpush1.msra.mxu0 %v109
    %2089 = vmatprep.subr.mxu0 %v117
    %2090 = vmatpush1.msra.mxu0 %v116
    %2091 = vmatprep.subr.mxu0 %v124
    %2092 = vmatpush1.msra.mxu0 %v123
    %2093 = vmatprep.subr.mxu0 %v131
    %2094 = vmatpush1.msra.mxu0 %v130
    %2095 = vmatprep.subr.mxu0 %v138
    %2096 = vmatpush1.msra.mxu0 %v137
    %2097 = vmatprep.subr.mxu0 %v145
    %2098 = vmatpush1.msra.mxu0 %v144
    %2099 = vmatprep.subr.mxu0 %v152
    %2100 = vmatpush1.msra.mxu0 %v151
    %2101 = vmatprep.subr.mxu0 %v159
    %2102 = vmatpush1.msra.mxu0 %v158
    %2103 = vmatprep.subr.mxu0 %v166
    %2104 = vmatpush1.msra.mxu0 %v165
    %2105 = vmatprep.subr.mxu0 %v173
    %2106 = vmatpush1.msra.mxu0 %v172
    %2107 = vmatprep.subr.mxu0 %v180
    %2108 = vmatpush1.msra.mxu0 %v179
    %2109 = vmatprep.subr.mxu0 %v187
    %2110 = vmatpush1.msra.mxu0 %v186
    %2111 = vmatprep.subr.mxu0 %v194
    %2112 = vmatpush1.msra.mxu0 %v193
    %2113 = vmatprep.subr.mxu0 %v201
    %2114 = vmatpush1.msra.mxu0 %v200
    %2115 = vmatprep.subr.mxu0 %v208
    %2116 = vmatpush1.msra.mxu0 %v207
    %2117 = vmatprep.subr.mxu0 %v215
    %2118 = vmatpush1.msra.mxu0 %v214
    %2119 = vmatprep.subr.mxu0 %v222
    %2120 = vmatpush1.msra.mxu0 %v221
    %2121 = vmatprep.subr.mxu0 %v229
    %2122 = vmatpush1.msra.mxu0 %v228
    %2123 = vmatprep.subr.mxu0 %v236
    %2124 = vmatpush1.msra.mxu0 %v235
    %2125 = vmatprep.subr.mxu0 %v243
    %2126 = vmatpush1.msra.mxu0 %v242
    %2127 = vmatprep.subr.mxu0 %v250
    %2128 = vmatpush1.msra.mxu0 %v249
    %2129 = vmatprep.subr.mxu0 %v257
    %2130 = vmatpush1.msra.mxu0 %v256
    %2131 = vmatprep.mubr.f32.mxu0 %v25
    %2132 = vmatmul.mubr.f32.gmra.mrb[0].mxu0 %v24
    %v2133 = vpop.f32.mrb[0].mxu0
    %v2134 = vadd.f32 0.0, %v2133
    %v2135 = vpop.f32.mrb[0].mxu0
    %v2136 = vadd.f32 0.0, %v2135
    %2137 = vdwg.mxu0
    %2138 = vmatprep.subr.mxu0 %v264
    %2139 = vmatpush1.msra.mxu0 %v263
    %2140 = vmatprep.subr.mxu0 %v271
    %2141 = vmatpush1.msra.mxu0 %v270
    %2142 = vmatprep.subr.mxu0 %v278
    %2143 = vmatpush1.msra.mxu0 %v277
    %2144 = vmatprep.subr.mxu0 %v285
    %2145 = vmatpush1.msra.mxu0 %v284
    %2146 = vmatprep.subr.mxu0 %v292
    %2147 = vmatpush1.msra.mxu0 %v291
    %2148 = vmatprep.subr.mxu0 %v299
    %2149 = vmatpush1.msra.mxu0 %v298
    %2150 = vmatprep.subr.mxu0 %v306
    %2151 = vmatpush1.msra.mxu0 %v305
    %2152 = vmatprep.subr.mxu0 %v313
    %2153 = vmatpush1.msra.mxu0 %v312
    %2154 = vmatprep.subr.mxu0 %v320
    %2155 = vmatpush1.msra.mxu0 %v319
    %2156 = vmatprep.subr.mxu0 %v327
    %2157 = vmatpush1.msra.mxu0 %v326
    %2158 = vmatprep.subr.mxu0 %v334
    %2159 = vmatpush1.msra.mxu0 %v333
    %2160 = vmatprep.subr.mxu0 %v341
    %2161 = vmatpush1.msra.mxu0 %v340
    %2162 = vmatprep.subr.mxu0 %v348
    %2163 = vmatpush1.msra.mxu0 %v347
    %2164 = vmatprep.subr.mxu0 %v355
    %2165 = vmatpush1.msra.mxu0 %v354
    %2166 = vmatprep.subr.mxu0 %v362
    %2167 = vmatpush1.msra.mxu0 %v361
    %2168 = vmatprep.subr.mxu0 %v369
    %2169 = vmatpush1.msra.mxu0 %v368
    %2170 = vmatprep.subr.mxu0 %v376
    %2171 = vmatpush1.msra.mxu0 %v375
    %2172 = vmatprep.subr.mxu0 %v383
    %2173 = vmatpush1.msra.mxu0 %v382
    %2174 = vmatprep.subr.mxu0 %v390
    %2175 = vmatpush1.msra.mxu0 %v389
    %2176 = vmatprep.subr.mxu0 %v397
    %2177 = vmatpush1.msra.mxu0 %v396
    %2178 = vmatprep.subr.mxu0 %v404
    %2179 = vmatpush1.msra.mxu0 %v403
    %2180 = vmatprep.subr.mxu0 %v411
    %2181 = vmatpush1.msra.mxu0 %v410
    %2182 = vmatprep.subr.mxu0 %v418
    %2183 = vmatpush1.msra.mxu0 %v417
    %2184 = vmatprep.subr.mxu0 %v425
    %2185 = vmatpush1.msra.mxu0 %v424
    %2186 = vmatprep.subr.mxu0 %v432
    %2187 = vmatpush1.msra.mxu0 %v431
    %2188 = vmatprep.subr.mxu0 %v439
    %2189 = vmatpush1.msra.mxu0 %v438
    %2190 = vmatprep.subr.mxu0 %v446
    %2191 = vmatpush1.msra.mxu0 %v445
    %2192 = vmatprep.subr.mxu0 %v453
    %2193 = vmatpush1.msra.mxu0 %v452
    %2194 = vmatprep.subr.mxu0 %v460
    %2195 = vmatpush1.msra.mxu0 %v459
    %2196 = vmatprep.subr.mxu0 %v467
    %2197 = vmatpush1.msra.mxu0 %v466
    %2198 = vmatprep.subr.mxu0 %v474
    %2199 = vmatpush1.msra.mxu0 %v473
    %2200 = vmatprep.subr.mxu0 %v481
    %2201 = vmatpush1.msra.mxu0 %v480
    %2202 = vmatprep.mubr.f32.mxu0 %v27
    %2203 = vmatmul.mubr.f32.gmra.mrb[0].mxu0 %v26
    %v2204 = vpop.f32.mrb[0].mxu0
    %v2205 = vadd.f32 %v2134, %v2204
    %v2206 = vpop.f32.mrb[0].mxu0
    %v2207 = vadd.f32 %v2136, %v2206
    %2208 = vdwg.mxu0
    %2209 = vmatprep.subr.mxu0 %v488
    %2210 = vmatpush1.msra.mxu0 %v487
    %2211 = vmatprep.subr.mxu0 %v495
    %2212 = vmatpush1.msra.mxu0 %v494
    %2213 = vmatprep.subr.mxu0 %v502
    %2214 = vmatpush1.msra.mxu0 %v501
    %2215 = vmatprep.subr.mxu0 %v509
    %2216 = vmatpush1.msra.mxu0 %v508
    %2217 = vmatprep.subr.mxu0 %v516
    %2218 = vmatpush1.msra.mxu0 %v515
    %2219 = vmatprep.subr.mxu0 %v523
    %2220 = vmatpush1.msra.mxu0 %v522
    %2221 = vmatprep.subr.mxu0 %v530
    %2222 = vmatpush1.msra.mxu0 %v529
    %2223 = vmatprep.subr.mxu0 %v537
    %2224 = vmatpush1.msra.mxu0 %v536
    %2225 = vmatprep.subr.mxu0 %v544
    %2226 = vmatpush1.msra.mxu0 %v543
    %2227 = vmatprep.subr.mxu0 %v551
    %2228 = vmatpush1.msra.mxu0 %v550
    %2229 = vmatprep.subr.mxu0 %v558
    %2230 = vmatpush1.msra.mxu0 %v557
    %2231 = vmatprep.subr.mxu0 %v565
    %2232 = vmatpush1.msra.mxu0 %v564
    %2233 = vmatprep.subr.mxu0 %v572
    %2234 = vmatpush1.msra.mxu0 %v571
    %2235 = vmatprep.subr.mxu0 %v579
    %2236 = vmatpush1.msra.mxu0 %v578
    %2237 = vmatprep.subr.mxu0 %v586
    %2238 = vmatpush1.msra.mxu0 %v585
    %2239 = vmatprep.subr.mxu0 %v593
    %2240 = vmatpush1.msra.mxu0 %v592
    %2241 = vmatprep.subr.mxu0 %v600
    %2242 = vmatpush1.msra.mxu0 %v599
    %2243 = vmatprep.subr.mxu0 %v607
    %2244 = vmatpush1.msra.mxu0 %v606
    %2245 = vmatprep.subr.mxu0 %v614
    %2246 = vmatpush1.msra.mxu0 %v613
    %2247 = vmatprep.subr.mxu0 %v621
    %2248 = vmatpush1.msra.mxu0 %v620
    %2249 = vmatprep.subr.mxu0 %v628
    %2250 = vmatpush1.msra.mxu0 %v627
    %2251 = vmatprep.subr.mxu0 %v635
    %2252 = vmatpush1.msra.mxu0 %v634
    %2253 = vmatprep.subr.mxu0 %v642
    %2254 = vmatpush1.msra.mxu0 %v641
    %2255 = vmatprep.subr.mxu0 %v649
    %2256 = vmatpush1.msra.mxu0 %v648
    %2257 = vmatprep.subr.mxu0 %v656
    %2258 = vmatpush1.msra.mxu0 %v655
    %2259 = vmatprep.subr.mxu0 %v663
    %2260 = vmatpush1.msra.mxu0 %v662
    %2261 = vmatprep.subr.mxu0 %v670
    %2262 = vmatpush1.msra.mxu0 %v669
    %2263 = vmatprep.subr.mxu0 %v677
    %2264 = vmatpush1.msra.mxu0 %v676
    %2265 = vmatprep.subr.mxu0 %v684
    %2266 = vmatpush1.msra.mxu0 %v683
    %2267 = vmatprep.subr.mxu0 %v691
    %2268 = vmatpush1.msra.mxu0 %v690
    %2269 = vmatprep.subr.mxu0 %v698
    %2270 = vmatpush1.msra.mxu0 %v697
    %2271 = vmatprep.subr.mxu0 %v705
    %2272 = vmatpush1.msra.mxu0 %v704
    %2273 = vmatprep.mubr.f32.mxu0 %v29
    %2274 = vmatmul.mubr.f32.gmra.mrb[0].mxu0 %v28
    %v2275 = vpop.f32.mrb[0].mxu0
    %v2276 = vadd.f32 %v2205, %v2275
    %v2277 = vpop.f32.mrb[0].mxu0
    %v2278 = vadd.f32 %v2207, %v2277
    %2279 = vdwg.mxu0
    %2280 = vmatprep.subr.mxu0 %v712
    %2281 = vmatpush1.msra.mxu0 %v711
    %2282 = vmatprep.subr.mxu0 %v719
    %2283 = vmatpush1.msra.mxu0 %v718
    %2284 = vmatprep.subr.mxu0 %v726
    %2285 = vmatpush1.msra.mxu0 %v725
    %2286 = vmatprep.subr.mxu0 %v733
    %2287 = vmatpush1.msra.mxu0 %v732
    %2288 = vmatprep.subr.mxu0 %v740
    %2289 = vmatpush1.msra.mxu0 %v739
    %2290 = vmatprep.subr.mxu0 %v747
    %2291 = vmatpush1.msra.mxu0 %v746
    %2292 = vmatprep.subr.mxu0 %v754
    %2293 = vmatpush1.msra.mxu0 %v753
    %2294 = vmatprep.subr.mxu0 %v761
    %2295 = vmatpush1.msra.mxu0 %v760
    %2296 = vmatprep.subr.mxu0 %v768
    %2297 = vmatpush1.msra.mxu0 %v767
    %2298 = vmatprep.subr.mxu0 %v775
    %2299 = vmatpush1.msra.mxu0 %v774
    %2300 = vmatprep.subr.mxu0 %v782
    %2301 = vmatpush1.msra.mxu0 %v781
    %2302 = vmatprep.subr.mxu0 %v789
    %2303 = vmatpush1.msra.mxu0 %v788
    %2304 = vmatprep.subr.mxu0 %v796
    %2305 = vmatpush1.msra.mxu0 %v795
    %2306 = vmatprep.subr.mxu0 %v803
    %2307 = vmatpush1.msra.mxu0 %v802
    %2308 = vmatprep.subr.mxu0 %v810
    %2309 = vmatpush1.msra.mxu0 %v809
    %2310 = vmatprep.subr.mxu0 %v817
    %2311 = vmatpush1.msra.mxu0 %v816
    %2312 = vmatprep.subr.mxu0 %v824
    %2313 = vmatpush1.msra.mxu0 %v823
    %2314 = vmatprep.subr.mxu0 %v831
    %2315 = vmatpush1.msra.mxu0 %v830
    %2316 = vmatprep.subr.mxu0 %v838
    %2317 = vmatpush1.msra.mxu0 %v837
    %2318 = vmatprep.subr.mxu0 %v845
    %2319 = vmatpush1.msra.mxu0 %v844
    %2320 = vmatprep.subr.mxu0 %v852
    %2321 = vmatpush1.msra.mxu0 %v851
    %2322 = vmatprep.subr.mxu0 %v859
    %2323 = vmatpush1.msra.mxu0 %v858
    %2324 = vmatprep.subr.mxu0 %v866
    %2325 = vmatpush1.msra.mxu0 %v865
    %2326 = vmatprep.subr.mxu0 %v873
    %2327 = vmatpush1.msra.mxu0 %v872
    %2328 = vmatprep.subr.mxu0 %v880
    %2329 = vmatpush1.msra.mxu0 %v879
    %2330 = vmatprep.subr.mxu0 %v887
    %2331 = vmatpush1.msra.mxu0 %v886
    %2332 = vmatprep.subr.mxu0 %v894
    %2333 = vmatpush1.msra.mxu0 %v893
    %2334 = vmatprep.subr.mxu0 %v901
    %2335 = vmatpush1.msra.mxu0 %v900
    %2336 = vmatprep.subr.mxu0 %v908
    %2337 = vmatpush1.msra.mxu0 %v907
    %2338 = vmatprep.subr.mxu0 %v915
    %2339 = vmatpush1.msra.mxu0 %v914
    %2340 = vmatprep.subr.mxu0 %v922
    %2341 = vmatpush1.msra.mxu0 %v921
    %2342 = vmatprep.subr.mxu0 %v929
    %2343 = vmatpush1.msra.mxu0 %v928
    %2344 = vmatprep.mubr.f32.mxu0 %v31
    %2345 = vmatmul.mubr.f32.gmra.mrb[0].mxu0 %v30
    %v2346 = vpop.f32.mrb[0].mxu0
    %v2347 = vadd.f32 %v2276, %v2346
    %v2348 = vpop.f32.mrb[0].mxu0
    %v2349 = vadd.f32 %v2278, %v2348
    %2350 = vdwg.mxu0
    %2351 = vmatprep.subr.mxu0 %v936
    %2352 = vmatpush1.msra.mxu0 %v935
    %2353 = vmatprep.subr.mxu0 %v943
    %2354 = vmatpush1.msra.mxu0 %v942
    %2355 = vmatprep.subr.mxu0 %v950
    %2356 = vmatpush1.msra.mxu0 %v949
    %2357 = vmatprep.subr.mxu0 %v957
    %2358 = vmatpush1.msra.mxu0 %v956
    %2359 = vmatprep.subr.mxu0 %v964
    %2360 = vmatpush1.msra.mxu0 %v963
    %2361 = vmatprep.subr.mxu0 %v971
    %2362 = vmatpush1.msra.mxu0 %v970
    %2363 = vmatprep.subr.mxu0 %v978
    %2364 = vmatpush1.msra.mxu0 %v977
    %2365 = vmatprep.subr.mxu0 %v985
    %2366 = vmatpush1.msra.mxu0 %v984
    %2367 = vmatprep.subr.mxu0 %v992
    %2368 = vmatpush1.msra.mxu0 %v991
    %2369 = vmatprep.subr.mxu0 %v999
    %2370 = vmatpush1.msra.mxu0 %v998
    %2371 = vmatprep.subr.mxu0 %v1006
    %2372 = vmatpush1.msra.mxu0 %v1005
    %2373 = vmatprep.subr.mxu0 %v1013
    %2374 = vmatpush1.msra.mxu0 %v1012
    %2375 = vmatprep.subr.mxu0 %v1020
    %2376 = vmatpush1.msra.mxu0 %v1019
    %2377 = vmatprep.subr.mxu0 %v1027
    %2378 = vmatpush1.msra.mxu0 %v1026
    %2379 = vmatprep.subr.mxu0 %v1034
    %2380 = vmatpush1.msra.mxu0 %v1033
    %2381 = vmatprep.subr.mxu0 %v1041
    %2382 = vmatpush1.msra.mxu0 %v1040
    %2383 = vmatprep.subr.mxu0 %v1048
    %2384 = vmatpush1.msra.mxu0 %v1047
    %2385 = vmatprep.subr.mxu0 %v1055
    %2386 = vmatpush1.msra.mxu0 %v1054
    %2387 = vmatprep.subr.mxu0 %v1062
    %2388 = vmatpush1.msra.mxu0 %v1061
    %2389 = vmatprep.subr.mxu0 %v1069
    %2390 = vmatpush1.msra.mxu0 %v1068
    %2391 = vmatprep.subr.mxu0 %v1076
    %2392 = vmatpush1.msra.mxu0 %v1075
    %2393 = vmatprep.subr.mxu0 %v1083
    %2394 = vmatpush1.msra.mxu0 %v1082
    %2395 = vmatprep.subr.mxu0 %v1090
    %2396 = vmatpush1.msra.mxu0 %v1089
    %2397 = vmatprep.subr.mxu0 %v1097
    %2398 = vmatpush1.msra.mxu0 %v1096
    %2399 = vmatprep.subr.mxu0 %v1104
    %2400 = vmatpush1.msra.mxu0 %v1103
    %2401 = vmatprep.subr.mxu0 %v1111
    %2402 = vmatpush1.msra.mxu0 %v1110
    %2403 = vmatprep.subr.mxu0 %v1118
    %2404 = vmatpush1.msra.mxu0 %v1117
    %2405 = vmatprep.subr.mxu0 %v1125
    %2406 = vmatpush1.msra.mxu0 %v1124
    %2407 = vmatprep.subr.mxu0 %v1132
    %2408 = vmatpush1.msra.mxu0 %v1131
    %2409 = vmatprep.subr.mxu0 %v1139
    %2410 = vmatpush1.msra.mxu0 %v1138
    %2411 = vmatprep.subr.mxu0 %v1146
    %2412 = vmatpush1.msra.mxu0 %v1145
    %2413 = vmatprep.subr.mxu0 %v1153
    %2414 = vmatpush1.msra.mxu0 %v1152
    %2415 = vmatprep.mubr.f32.mxu0 %v33
    %2416 = vmatmul.mubr.f32.gmra.mrb[0].mxu0 %v32
    %v2417 = vpop.f32.mrb[0].mxu0
    %v2418 = vadd.f32 %v2347, %v2417
    %v2419 = vpop.f32.mrb[0].mxu0
    %v2420 = vadd.f32 %v2349, %v2419
    %2421 = vdwg.mxu0
    %2422 = vmatprep.subr.mxu0 %v1160
    %2423 = vmatpush1.msra.mxu0 %v1159
    %2424 = vmatprep.subr.mxu0 %v1167
    %2425 = vmatpush1.msra.mxu0 %v1166
    %2426 = vmatprep.subr.mxu0 %v1174
    %2427 = vmatpush1.msra.mxu0 %v1173
    %2428 = vmatprep.subr.mxu0 %v1181
    %2429 = vmatpush1.msra.mxu0 %v1180
    %2430 = vmatprep.subr.mxu0 %v1188
    %2431 = vmatpush1.msra.mxu0 %v1187
    %2432 = vmatprep.subr.mxu0 %v1195
    %2433 = vmatpush1.msra.mxu0 %v1194
    %2434 = vmatprep.subr.mxu0 %v1202
    %2435 = vmatpush1.msra.mxu0 %v1201
    %2436 = vmatprep.subr.mxu0 %v1209
    %2437 = vmatpush1.msra.mxu0 %v1208
    %2438 = vmatprep.subr.mxu0 0.0
    %2439 = vmatpush1.msra.mxu0 0.0
    %2440 = vmatprep.subr.mxu0 0.0
    %2441 = vmatpush1.msra.mxu0 0.0
    %2442 = vmatprep.subr.mxu0 0.0
    %2443 = vmatpush1.msra.mxu0 0.0
    %2444 = vmatprep.subr.mxu0 0.0
    %2445 = vmatpush1.msra.mxu0 0.0
    %2446 = vmatprep.subr.mxu0 0.0
    %2447 = vmatpush1.msra.mxu0 0.0
    %2448 = vmatprep.subr.mxu0 0.0
    %2449 = vmatpush1.msra.mxu0 0.0
    %2450 = vmatprep.subr.mxu0 0.0
    %2451 = vmatpush1.msra.mxu0 0.0
    %2452 = vmatprep.subr.mxu0 0.0
    %2453 = vmatpush1.msra.mxu0 0.0
    %2454 = vmatprep.subr.mxu0 0.0
    %2455 = vmatpush1.msra.mxu0 0.0
    %2456 = vmatprep.subr.mxu0 0.0
    %2457 = vmatpush1.msra.mxu0 0.0
    %2458 = vmatprep.subr.mxu0 0.0
    %2459 = vmatpush1.msra.mxu0 0.0
    %2460 = vmatprep.subr.mxu0 0.0
    %2461 = vmatpush1.msra.mxu0 0.0
    %2462 = vmatprep.subr.mxu0 0.0
    %2463 = vmatpush1.msra.mxu0 0.0
    %2464 = vmatprep.subr.mxu0 0.0
    %2465 = vmatpush1.msra.mxu0 0.0
    %2466 = vmatprep.subr.mxu0 0.0
    %2467 = vmatpush1.msra.mxu0 0.0
    %2468 = vmatprep.subr.mxu0 0.0
    %2469 = vmatpush1.msra.mxu0 0.0
    %2470 = vmatprep.subr.mxu0 0.0
    %2471 = vmatpush1.msra.mxu0 0.0
    %2472 = vmatprep.subr.mxu0 0.0
    %2473 = vmatpush1.msra.mxu0 0.0
    %2474 = vmatprep.subr.mxu0 0.0
    %2475 = vmatpush1.msra.mxu0 0.0
    %2476 = vmatprep.subr.mxu0 0.0
    %2477 = vmatpush1.msra.mxu0 0.0
    %2478 = vmatprep.subr.mxu0 0.0
    %2479 = vmatpush1.msra.mxu0 0.0
    %2480 = vmatprep.subr.mxu0 0.0
    %2481 = vmatpush1.msra.mxu0 0.0
    %2482 = vmatprep.subr.mxu0 0.0
    %2483 = vmatpush1.msra.mxu0 0.0
    %2484 = vmatprep.subr.mxu0 0.0
    %2485 = vmatpush1.msra.mxu0 0.0
    %2486 = vmatprep.mubr.f32.mxu0 0.0
    %2487 = vmatmul.mubr.f32.gmra.mrb[0].mxu0 %v1213
    %v2488 = vpop.f32.mrb[0].mxu0
    %v2489 = vadd.f32 %v2418, %v2488
    %v2490 = vpop.f32.mrb[0].mxu0
    %v2491 = vadd.f32 %v2420, %v2490
    %2492 = vdwg.mxu0
    %2493 = vmatprep.subr.mxu0 0.0
    %2494 = vmatpush1.msra.mxu0 %v41
    %2495 = vmatprep.subr.mxu0 0.0
    %2496 = vmatpush1.msra.mxu0 %v48
    %2497 = vmatprep.subr.mxu0 0.0
    %2498 = vmatpush1.msra.mxu0 %v55
    %2499 = vmatprep.subr.mxu0 0.0
    %2500 = vmatpush1.msra.mxu0 %v62
    %2501 = vmatprep.subr.mxu0 0.0
    %2502 = vmatpush1.msra.mxu0 %v69
    %2503 = vmatprep.subr.mxu0 0.0
    %2504 = vmatpush1.msra.mxu0 %v76
    %2505 = vmatprep.subr.mxu0 0.0
    %2506 = vmatpush1.msra.mxu0 %v83
    %2507 = vmatprep.subr.mxu0 0.0
    %2508 = vmatpush1.msra.mxu0 %v90
    %2509 = vmatprep.subr.mxu0 0.0
    %2510 = vmatpush1.msra.mxu0 %v97
    %2511 = vmatprep.subr.mxu0 0.0
    %2512 = vmatpush1.msra.mxu0 %v104
    %2513 = vmatprep.subr.mxu0 0.0
    %2514 = vmatpush1.msra.mxu0 %v111
    %2515 = vmatprep.subr.mxu0 0.0
    %2516 = vmatpush1.msra.mxu0 %v118
    %2517 = vmatprep.subr.mxu0 0.0
    %2518 = vmatpush1.msra.mxu0 %v125
    %2519 = vmatprep.subr.mxu0 0.0
    %2520 = vmatpush1.msra.mxu0 %v132
    %2521 = vmatprep.subr.mxu0 0.0
    %2522 = vmatpush1.msra.mxu0 %v139
    %2523 = vmatprep.subr.mxu0 0.0
    %2524 = vmatpush1.msra.mxu0 %v146
    %2525 = vmatprep.subr.mxu0 0.0
    %2526 = vmatpush1.msra.mxu0 %v153
    %2527 = vmatprep.subr.mxu0 0.0
    %2528 = vmatpush1.msra.mxu0 %v160
    %2529 = vmatprep.subr.mxu0 0.0
    %2530 = vmatpush1.msra.mxu0 %v167
    %2531 = vmatprep.subr.mxu0 0.0
    %2532 = vmatpush1.msra.mxu0 %v174
    %2533 = vmatprep.subr.mxu0 0.0
    %2534 = vmatpush1.msra.mxu0 %v181
    %2535 = vmatprep.subr.mxu0 0.0
    %2536 = vmatpush1.msra.mxu0 %v188
    %2537 = vmatprep.subr.mxu0 0.0
    %2538 = vmatpush1.msra.mxu0 %v195
    %2539 = vmatprep.subr.mxu0 0.0
    %2540 = vmatpush1.msra.mxu0 %v202
    %2541 = vmatprep.subr.mxu0 0.0
    %2542 = vmatpush1.msra.mxu0 %v209
    %2543 = vmatprep.subr.mxu0 0.0
    %2544 = vmatpush1.msra.mxu0 %v216
    %2545 = vmatprep.subr.mxu0 0.0
    %2546 = vmatpush1.msra.mxu0 %v223
    %2547 = vmatprep.subr.mxu0 0.0
    %2548 = vmatpush1.msra.mxu0 %v230
    %2549 = vmatprep.subr.mxu0 0.0
    %2550 = vmatpush1.msra.mxu0 %v237
    %2551 = vmatprep.subr.mxu0 0.0
    %2552 = vmatpush1.msra.mxu0 %v244
    %2553 = vmatprep.subr.mxu0 0.0
    %2554 = vmatpush1.msra.mxu0 %v251
    %2555 = vmatprep.subr.mxu0 0.0
    %2556 = vmatpush1.msra.mxu0 %v258
    %2557 = vmatprep.mubr.f32.mxu0 %v25
    %2558 = vmatmul.mubr.f32.gmra.mrb[0].mxu0 %v24
    %v2559 = vpop.f32.mrb[0].mxu0
    %v2560 = vadd.f32 0.0, %v2559
    %v2561 = vpop.f32.mrb[0].mxu0
    %2562 = vdwg.mxu0
    %2563 = vmatprep.subr.mxu0 0.0
    %2564 = vmatpush1.msra.mxu0 %v265
    %2565 = vmatprep.subr.mxu0 0.0
    %2566 = vmatpush1.msra.mxu0 %v272
    %2567 = vmatprep.subr.mxu0 0.0
    %2568 = vmatpush1.msra.mxu0 %v279
    %2569 = vmatprep.subr.mxu0 0.0
    %2570 = vmatpush1.msra.mxu0 %v286
    %2571 = vmatprep.subr.mxu0 0.0
    %2572 = vmatpush1.msra.mxu0 %v293
    %2573 = vmatprep.subr.mxu0 0.0
    %2574 = vmatpush1.msra.mxu0 %v300
    %2575 = vmatprep.subr.mxu0 0.0
    %2576 = vmatpush1.msra.mxu0 %v307
    %2577 = vmatprep.subr.mxu0 0.0
    %2578 = vmatpush1.msra.mxu0 %v314
    %2579 = vmatprep.subr.mxu0 0.0
    %2580 = vmatpush1.msra.mxu0 %v321
    %2581 = vmatprep.subr.mxu0 0.0
    %2582 = vmatpush1.msra.mxu0 %v328
    %2583 = vmatprep.subr.mxu0 0.0
    %2584 = vmatpush1.msra.mxu0 %v335
    %2585 = vmatprep.subr.mxu0 0.0
    %2586 = vmatpush1.msra.mxu0 %v342
    %2587 = vmatprep.subr.mxu0 0.0
    %2588 = vmatpush1.msra.mxu0 %v349
    %2589 = vmatprep.subr.mxu0 0.0
    %2590 = vmatpush1.msra.mxu0 %v356
    %2591 = vmatprep.subr.mxu0 0.0
    %2592 = vmatpush1.msra.mxu0 %v363
    %2593 = vmatprep.subr.mxu0 0.0
    %2594 = vmatpush1.msra.mxu0 %v370
    %2595 = vmatprep.subr.mxu0 0.0
    %2596 = vmatpush1.msra.mxu0 %v377
    %2597 = vmatprep.subr.mxu0 0.0
    %2598 = vmatpush1.msra.mxu0 %v384
    %2599 = vmatprep.subr.mxu0 0.0
    %2600 = vmatpush1.msra.mxu0 %v391
    %2601 = vmatprep.subr.mxu0 0.0
    %2602 = vmatpush1.msra.mxu0 %v398
    %2603 = vmatprep.subr.mxu0 0.0
    %2604 = vmatpush1.msra.mxu0 %v405
    %2605 = vmatprep.subr.mxu0 0.0
    %2606 = vmatpush1.msra.mxu0 %v412
    %2607 = vmatprep.subr.mxu0 0.0
    %2608 = vmatpush1.msra.mxu0 %v419
    %2609 = vmatprep.subr.mxu0 0.0
    %2610 = vmatpush1.msra.mxu0 %v426
    %2611 = vmatprep.subr.mxu0 0.0
    %2612 = vmatpush1.msra.mxu0 %v433
    %2613 = vmatprep.subr.mxu0 0.0
    %2614 = vmatpush1.msra.mxu0 %v440
    %2615 = vmatprep.subr.mxu0 0.0
    %2616 = vmatpush1.msra.mxu0 %v447
    %2617 = vmatprep.subr.mxu0 0.0
    %2618 = vmatpush1.msra.mxu0 %v454
    %2619 = vmatprep.subr.mxu0 0.0
    %2620 = vmatpush1.msra.mxu0 %v461
    %2621 = vmatprep.subr.mxu0 0.0
    %2622 = vmatpush1.msra.mxu0 %v468
    %2623 = vmatprep.subr.mxu0 0.0
    %2624 = vmatpush1.msra.mxu0 %v475
    %2625 = vmatprep.subr.mxu0 0.0
    %2626 = vmatpush1.msra.mxu0 %v482
    %2627 = vmatprep.mubr.f32.mxu0 %v27
    %2628 = vmatmul.mubr.f32.gmra.mrb[0].mxu0 %v26
    %v2629 = vpop.f32.mrb[0].mxu0
    %v2630 = vadd.f32 %v2560, %v2629
    %v2631 = vpop.f32.mrb[0].mxu0
    %2632 = vdwg.mxu0
    %2633 = vmatprep.subr.mxu0 0.0
    %2634 = vmatpush1.msra.mxu0 %v489
    %2635 = vmatprep.subr.mxu0 0.0
    %2636 = vmatpush1.msra.mxu0 %v496
    %2637 = vmatprep.subr.mxu0 0.0
    %2638 = vmatpush1.msra.mxu0 %v503
    %2639 = vmatprep.subr.mxu0 0.0
    %2640 = vmatpush1.msra.mxu0 %v510
    %2641 = vmatprep.subr.mxu0 0.0
    %2642 = vmatpush1.msra.mxu0 %v517
    %2643 = vmatprep.subr.mxu0 0.0
    %2644 = vmatpush1.msra.mxu0 %v524
    %2645 = vmatprep.subr.mxu0 0.0
    %2646 = vmatpush1.msra.mxu0 %v531
    %2647 = vmatprep.subr.mxu0 0.0
    %2648 = vmatpush1.msra.mxu0 %v538
    %2649 = vmatprep.subr.mxu0 0.0
    %2650 = vmatpush1.msra.mxu0 %v545
    %2651 = vmatprep.subr.mxu0 0.0
    %2652 = vmatpush1.msra.mxu0 %v552
    %2653 = vmatprep.subr.mxu0 0.0
    %2654 = vmatpush1.msra.mxu0 %v559
    %2655 = vmatprep.subr.mxu0 0.0
    %2656 = vmatpush1.msra.mxu0 %v566
    %2657 = vmatprep.subr.mxu0 0.0
    %2658 = vmatpush1.msra.mxu0 %v573
    %2659 = vmatprep.subr.mxu0 0.0
    %2660 = vmatpush1.msra.mxu0 %v580
    %2661 = vmatprep.subr.mxu0 0.0
    %2662 = vmatpush1.msra.mxu0 %v587
    %2663 = vmatprep.subr.mxu0 0.0
    %2664 = vmatpush1.msra.mxu0 %v594
    %2665 = vmatprep.subr.mxu0 0.0
    %2666 = vmatpush1.msra.mxu0 %v601
    %2667 = vmatprep.subr.mxu0 0.0
    %2668 = vmatpush1.msra.mxu0 %v608
    %2669 = vmatprep.subr.mxu0 0.0
    %2670 = vmatpush1.msra.mxu0 %v615
    %2671 = vmatprep.subr.mxu0 0.0
    %2672 = vmatpush1.msra.mxu0 %v622
    %2673 = vmatprep.subr.mxu0 0.0
    %2674 = vmatpush1.msra.mxu0 %v629
    %2675 = vmatprep.subr.mxu0 0.0
    %2676 = vmatpush1.msra.mxu0 %v636
    %2677 = vmatprep.subr.mxu0 0.0
    %2678 = vmatpush1.msra.mxu0 %v643
    %2679 = vmatprep.subr.mxu0 0.0
    %2680 = vmatpush1.msra.mxu0 %v650
    %2681 = vmatprep.subr.mxu0 0.0
    %2682 = vmatpush1.msra.mxu0 %v657
    %2683 = vmatprep.subr.mxu0 0.0
    %2684 = vmatpush1.msra.mxu0 %v664
    %2685 = vmatprep.subr.mxu0 0.0
    %2686 = vmatpush1.msra.mxu0 %v671
    %2687 = vmatprep.subr.mxu0 0.0
    %2688 = vmatpush1.msra.mxu0 %v678
    %2689 = vmatprep.subr.mxu0 0.0
    %2690 = vmatpush1.msra.mxu0 %v685
    %2691 = vmatprep.subr.mxu0 0.0
    %2692 = vmatpush1.msra.mxu0 %v692
    %2693 = vmatprep.subr.mxu0 0.0
    %2694 = vmatpush1.msra.mxu0 %v699
    %2695 = vmatprep.subr.mxu0 0.0
    %2696 = vmatpush1.msra.mxu0 %v706
    %2697 = vmatprep.mubr.f32.mxu0 %v29
    %2698 = vmatmul.mubr.f32.gmra.mrb[0].mxu0 %v28
    %v2699 = vpop.f32.mrb[0].mxu0
    %v2700 = vadd.f32 %v2630, %v2699
    %v2701 = vpop.f32.mrb[0].mxu0
    %2702 = vdwg.mxu0
    %2703 = vmatprep.subr.mxu0 0.0
    %2704 = vmatpush1.msra.mxu0 %v713
    %2705 = vmatprep.subr.mxu0 0.0
    %2706 = vmatpush1.msra.mxu0 %v720
    %2707 = vmatprep.subr.mxu0 0.0
    %2708 = vmatpush1.msra.mxu0 %v727
    %2709 = vmatprep.subr.mxu0 0.0
    %2710 = vmatpush1.msra.mxu0 %v734
    %2711 = vmatprep.subr.mxu0 0.0
    %2712 = vmatpush1.msra.mxu0 %v741
    %2713 = vmatprep.subr.mxu0 0.0
    %2714 = vmatpush1.msra.mxu0 %v748
    %2715 = vmatprep.subr.mxu0 0.0
    %2716 = vmatpush1.msra.mxu0 %v755
    %2717 = vmatprep.subr.mxu0 0.0
    %2718 = vmatpush1.msra.mxu0 %v762
    %2719 = vmatprep.subr.mxu0 0.0
    %2720 = vmatpush1.msra.mxu0 %v769
    %2721 = vmatprep.subr.mxu0 0.0
    %2722 = vmatpush1.msra.mxu0 %v776
    %2723 = vmatprep.subr.mxu0 0.0
    %2724 = vmatpush1.msra.mxu0 %v783
    %2725 = vmatprep.subr.mxu0 0.0
    %2726 = vmatpush1.msra.mxu0 %v790
    %2727 = vmatprep.subr.mxu0 0.0
    %2728 = vmatpush1.msra.mxu0 %v797
    %2729 = vmatprep.subr.mxu0 0.0
    %2730 = vmatpush1.msra.mxu0 %v804
    %2731 = vmatprep.subr.mxu0 0.0
    %2732 = vmatpush1.msra.mxu0 %v811
    %2733 = vmatprep.subr.mxu0 0.0
    %2734 = vmatpush1.msra.mxu0 %v818
    %2735 = vmatprep.subr.mxu0 0.0
    %2736 = vmatpush1.msra.mxu0 %v825
    %2737 = vmatprep.subr.mxu0 0.0
    %2738 = vmatpush1.msra.mxu0 %v832
    %2739 = vmatprep.subr.mxu0 0.0
    %2740 = vmatpush1.msra.mxu0 %v839
    %2741 = vmatprep.subr.mxu0 0.0
    %2742 = vmatpush1.msra.mxu0 %v846
    %2743 = vmatprep.subr.mxu0 0.0
    %2744 = vmatpush1.msra.mxu0 %v853
    %2745 = vmatprep.subr.mxu0 0.0
    %2746 = vmatpush1.msra.mxu0 %v860
    %2747 = vmatprep.subr.mxu0 0.0
    %2748 = vmatpush1.msra.mxu0 %v867
    %2749 = vmatprep.subr.mxu0 0.0
    %2750 = vmatpush1.msra.mxu0 %v874
    %2751 = vmatprep.subr.mxu0 0.0
    %2752 = vmatpush1.msra.mxu0 %v881
    %2753 = vmatprep.subr.mxu0 0.0
    %2754 = vmatpush1.msra.mxu0 %v888
    %2755 = vmatprep.subr.mxu0 0.0
    %2756 = vmatpush1.msra.mxu0 %v895
    %2757 = vmatprep.subr.mxu0 0.0
    %2758 = vmatpush1.msra.mxu0 %v902
    %2759 = vmatprep.subr.mxu0 0.0
    %2760 = vmatpush1.msra.mxu0 %v909
    %2761 = vmatprep.subr.mxu0 0.0
    %2762 = vmatpush1.msra.mxu0 %v916
    %2763 = vmatprep.subr.mxu0 0.0
    %2764 = vmatpush1.msra.mxu0 %v923
    %2765 = vmatprep.subr.mxu0 0.0
    %2766 = vmatpush1.msra.mxu0 %v930
    %2767 = vmatprep.mubr.f32.mxu0 %v31
    %2768 = vmatmul.mubr.f32.gmra.mrb[0].mxu0 %v30
    %v2769 = vpop.f32.mrb[0].mxu0
    %v2770 = vadd.f32 %v2700, %v2769
    %v2771 = vpop.f32.mrb[0].mxu0
    %2772 = vdwg.mxu0
    %2773 = vmatprep.subr.mxu0 0.0
    %2774 = vmatpush1.msra.mxu0 %v937
    %2775 = vmatprep.subr.mxu0 0.0
    %2776 = vmatpush1.msra.mxu0 %v944
    %2777 = vmatprep.subr.mxu0 0.0
    %2778 = vmatpush1.msra.mxu0 %v951
    %2779 = vmatprep.subr.mxu0 0.0
    %2780 = vmatpush1.msra.mxu0 %v958
    %2781 = vmatprep.subr.mxu0 0.0
    %2782 = vmatpush1.msra.mxu0 %v965
    %2783 = vmatprep.subr.mxu0 0.0
    %2784 = vmatpush1.msra.mxu0 %v972
    %2785 = vmatprep.subr.mxu0 0.0
    %2786 = vmatpush1.msra.mxu0 %v979
    %2787 = vmatprep.subr.mxu0 0.0
    %2788 = vmatpush1.msra.mxu0 %v986
    %2789 = vmatprep.subr.mxu0 0.0
    %2790 = vmatpush1.msra.mxu0 %v993
    %2791 = vmatprep.subr.mxu0 0.0
    %2792 = vmatpush1.msra.mxu0 %v1000
    %2793 = vmatprep.subr.mxu0 0.0
    %2794 = vmatpush1.msra.mxu0 %v1007
    %2795 = vmatprep.subr.mxu0 0.0
    %2796 = vmatpush1.msra.mxu0 %v1014
    %2797 = vmatprep.subr.mxu0 0.0
    %2798 = vmatpush1.msra.mxu0 %v1021
    %2799 = vmatprep.subr.mxu0 0.0
    %2800 = vmatpush1.msra.mxu0 %v1028
    %2801 = vmatprep.subr.mxu0 0.0
    %2802 = vmatpush1.msra.mxu0 %v1035
    %2803 = vmatprep.subr.mxu0 0.0
    %2804 = vmatpush1.msra.mxu0 %v1042
    %2805 = vmatprep.subr.mxu0 0.0
    %2806 = vmatpush1.msra.mxu0 %v1049
    %2807 = vmatprep.subr.mxu0 0.0
    %2808 = vmatpush1.msra.mxu0 %v1056
    %2809 = vmatprep.subr.mxu0 0.0
    %2810 = vmatpush1.msra.mxu0 %v1063
    %2811 = vmatprep.subr.mxu0 0.0
    %2812 = vmatpush1.msra.mxu0 %v1070
    %2813 = vmatprep.subr.mxu0 0.0
    %2814 = vmatpush1.msra.mxu0 %v1077
    %2815 = vmatprep.subr.mxu0 0.0
    %2816 = vmatpush1.msra.mxu0 %v1084
    %2817 = vmatprep.subr.mxu0 0.0
    %2818 = vmatpush1.msra.mxu0 %v1091
    %2819 = vmatprep.subr.mxu0 0.0
    %2820 = vmatpush1.msra.mxu0 %v1098
    %2821 = vmatprep.subr.mxu0 0.0
    %2822 = vmatpush1.msra.mxu0 %v1105
    %2823 = vmatprep.subr.mxu0 0.0
    %2824 = vmatpush1.msra.mxu0 %v1112
    %2825 = vmatprep.subr.mxu0 0.0
    %2826 = vmatpush1.msra.mxu0 %v1119
    %2827 = vmatprep.subr.mxu0 0.0
    %2828 = vmatpush1.msra.mxu0 %v1126
    %2829 = vmatprep.subr.mxu0 0.0
    %2830 = vmatpush1.msra.mxu0 %v1133
    %2831 = vmatprep.subr.mxu0 0.0
    %2832 = vmatpush1.msra.mxu0 %v1140
    %2833 = vmatprep.subr.mxu0 0.0
    %2834 = vmatpush1.msra.mxu0 %v1147
    %2835 = vmatprep.subr.mxu0 0.0
    %2836 = vmatpush1.msra.mxu0 %v1154
    %2837 = vmatprep.mubr.f32.mxu0 %v33
    %2838 = vmatmul.mubr.f32.gmra.mrb[0].mxu0 %v32
    %v2839 = vpop.f32.mrb[0].mxu0
    %v2840 = vadd.f32 %v2770, %v2839
    %v2841 = vpop.f32.mrb[0].mxu0
    %2842 = vdwg.mxu0
    %2843 = vmatprep.subr.mxu0 0.0
    %2844 = vmatpush1.msra.mxu0 %v1161
    %2845 = vmatprep.subr.mxu0 0.0
    %2846 = vmatpush1.msra.mxu0 %v1168
    %2847 = vmatprep.subr.mxu0 0.0
    %2848 = vmatpush1.msra.mxu0 %v1175
    %2849 = vmatprep.subr.mxu0 0.0
    %2850 = vmatpush1.msra.mxu0 %v1182
    %2851 = vmatprep.subr.mxu0 0.0
    %2852 = vmatpush1.msra.mxu0 %v1189
    %2853 = vmatprep.subr.mxu0 0.0
    %2854 = vmatpush1.msra.mxu0 %v1196
    %2855 = vmatprep.subr.mxu0 0.0
    %2856 = vmatpush1.msra.mxu0 %v1203
    %2857 = vmatprep.subr.mxu0 0.0
    %2858 = vmatpush1.msra.mxu0 %v1210
    %2859 = vmatprep.subr.mxu0 0.0
    %2860 = vmatpush1.msra.mxu0 0.0
    %2861 = vmatprep.subr.mxu0 0.0
    %2862 = vmatpush1.msra.mxu0 0.0
    %2863 = vmatprep.subr.mxu0 0.0
    %2864 = vmatpush1.msra.mxu0 0.0
    %2865 = vmatprep.subr.mxu0 0.0
    %2866 = vmatpush1.msra.mxu0 0.0
    %2867 = vmatprep.subr.mxu0 0.0
    %2868 = vmatpush1.msra.mxu0 0.0
    %2869 = vmatprep.subr.mxu0 0.0
    %2870 = vmatpush1.msra.mxu0 0.0
    %2871 = vmatprep.subr.mxu0 0.0
    %2872 = vmatpush1.msra.mxu0 0.0
    %2873 = vmatprep.subr.mxu0 0.0
    %2874 = vmatpush1.msra.mxu0 0.0
    %2875 = vmatprep.subr.mxu0 0.0
    %2876 = vmatpush1.msra.mxu0 0.0
    %2877 = vmatprep.subr.mxu0 0.0
    %2878 = vmatpush1.msra.mxu0 0.0
    %2879 = vmatprep.subr.mxu0 0.0
    %2880 = vmatpush1.msra.mxu0 0.0
    %2881 = vmatprep.subr.mxu0 0.0
    %2882 = vmatpush1.msra.mxu0 0.0
    %2883 = vmatprep.subr.mxu0 0.0
    %2884 = vmatpush1.msra.mxu0 0.0
    %2885 = vmatprep.subr.mxu0 0.0
    %2886 = vmatpush1.msra.mxu0 0.0
    %2887 = vmatprep.subr.mxu0 0.0
    %2888 = vmatpush1.msra.mxu0 0.0
    %2889 = vmatprep.subr.mxu0 0.0
    %2890 = vmatpush1.msra.mxu0 0.0
    %2891 = vmatprep.subr.mxu0 0.0
    %2892 = vmatpush1.msra.mxu0 0.0
    %2893 = vmatprep.subr.mxu0 0.0
    %2894 = vmatpush1.msra.mxu0 0.0
    %2895 = vmatprep.subr.mxu0 0.0
    %2896 = vmatpush1.msra.mxu0 0.0
    %2897 = vmatprep.subr.mxu0 0.0
    %2898 = vmatpush1.msra.mxu0 0.0
    %2899 = vmatprep.subr.mxu0 0.0
    %2900 = vmatpush1.msra.mxu0 0.0
    %2901 = vmatprep.subr.mxu0 0.0
    %2902 = vmatpush1.msra.mxu0 0.0
    %2903 = vmatprep.subr.mxu0 0.0
    %2904 = vmatpush1.msra.mxu0 0.0
    %2905 = vmatprep.subr.mxu0 0.0
    %2906 = vmatpush1.msra.mxu0 0.0
    %2907 = vmatprep.mubr.f32.mxu0 0.0
    %2908 = vmatmul.mubr.f32.gmra.mrb[0].mxu0 %v1213
    %v2909 = vpop.f32.mrb[0].mxu0
    %v2910 = vadd.f32 %v2840, %v2909
    %v2911 = vpop.f32.mrb[0].mxu0
    %2912 = vdwg.mxu0
    %v2913 = vmax.f32 %v1637, 0.0
    %v2914 = vmax.f32 %v1639, 0.0
    %v2915 = vmax.f32 %v2063, 0.0
    %v2916 = vmax.f32 %v2065, 0.0
    %v2917 = vmax.f32 %v2489, 0.0
    %v2918 = vmax.f32 %v2491, 0.0
    %v2919 = vmax.f32 %v2910, 0.0
    %v2920 = vld [vmem:[%s2] sm:$0xff]
    %v2921 = vld [vmem:[%s2 + $0x8] sm:$0xff]
    %v2922 = vld [vmem:[%s2 + $0x10] sm:$0xff]
    %v2923 = vld [vmem:[%s2 + $0x18] sm:$0xff]
    %v2924 = vld [vmem:[%s2 + $0x20] sm:$0xff]
    %v2925 = vld [vmem:[%s2 + $0x28] sm:$0xff]
    %v2926 = vld [vmem:[%s2 + $0x30] sm:$0xff]
    %v2927 = vld [vmem:[%s2 + $0x38] sm:$0xff]
    %v2928 = vld [vmem:[%s2 + $0x40] sm:$0xff]
    %v2929 = vld [vmem:[%s2 + $0x48] sm:$0xff]
    %v2930 = vld [vmem:[%s2 + $0x50] sm:$0xff]
    %v2931 = vld [vmem:[%s2 + $0x58] sm:$0xff]
    %v2932 = vld [vmem:[%s2 + $0x60] sm:$0xff]
    %v2933 = vld [vmem:[%s2 + $0x68] sm:$0xff]
    %v2934 = vld [vmem:[%s2 + $0x70] sm:$0xff]
    %v2935 = vld [vmem:[%s2 + $0x78] sm:$0xff]
    %v2936 = vld [vmem:[%s2 + $0x80] sm:$0xff]
    %v2937 = vld [vmem:[%s2 + $0x88] sm:$0xff]
    %v2938 = vld [vmem:[%s2 + $0x90] sm:$0xff]
    %v2939 = vld [vmem:[%s2 + $0x98] sm:$0xff]
    %v2940 = vld [vmem:[%s2 + $0xa0] sm:$0xff]
    %v2941 = vld [vmem:[%s2 + $0xa8] sm:$0xff]
    %v2942 = vld [vmem:[%s2 + $0xb0] sm:$0xff]
    %v2943 = vld [vmem:[%s2 + $0xb8] sm:$0xff]
    %v2944 = vld [vmem:[%s2 + $0xc0] sm:$0xff]
    %v2945 = vld [vmem:[%s2 + $0xc8] sm:$0xff]
    %v2946 = vld [vmem:[%s2 + $0xd0] sm:$0xff]
    %v2947 = vld [vmem:[%s2 + $0xd8] sm:$0xff]
    %v2948 = vld [vmem:[%s2 + $0xe0] sm:$0xff]
    %v2949 = vld [vmem:[%s2 + $0xe8] sm:$0xff]
    %v2950 = vld [vmem:[%s2 + $0xf0] sm:$0xff]
    %v2951 = vld [vmem:[%s2 + $0xf8] sm:$0xff]
    %v2952 = vld [vmem:[%s2 + $0x100] sm:$0xff]
    %v2953 = vld [vmem:[%s2 + $0x108] sm:$0xff]
    %v2954 = vld [vmem:[%s2 + $0x110] sm:$0xff]
    %v2955 = vld [vmem:[%s2 + $0x118] sm:$0xff]
    %v2956 = vld [vmem:[%s2 + $0x120] sm:$0xff]
    %v2957 = vld [vmem:[%s2 + $0x128] sm:$0xff]
    %v2958 = vld [vmem:[%s2 + $0x130] sm:$0xff]
    %v2959 = vld [vmem:[%s2 + $0x138] sm:$0xff]
    %v2960 = vld [vmem:[%s2 + $0x140] sm:$0xff]
    %v2961 = vld [vmem:[%s2 + $0x148] sm:$0xff]
    %v2962 = vld [vmem:[%s2 + $0x150] sm:$0xff]
    %v2963 = vld [vmem:[%s2 + $0x158] sm:$0xff]
    %v2964 = vld [vmem:[%s2 + $0x160] sm:$0xff]
    %v2965 = vld [vmem:[%s2 + $0x168] sm:$0xff]
    %v2966 = vld [vmem:[%s2 + $0x170] sm:$0xff]
    %v2967 = vld [vmem:[%s2 + $0x178] sm:$0xff]
    %v2968 = vld [vmem:[%s2 + $0x180] sm:$0xff]
    %v2969 = vld [vmem:[%s2 + $0x188] sm:$0xff]
    %v2970 = vld [vmem:[%s2 + $0x190] sm:$0xff]
    %v2971 = vld [vmem:[%s2 + $0x198] sm:$0xff]
    %v2972 = vld [vmem:[%s2 + $0x1a0] sm:$0xff]
    %v2973 = vld [vmem:[%s2 + $0x1a8] sm:$0xff]
    %v2974 = vld [vmem:[%s2 + $0x1b0] sm:$0xff]
    %v2975 = vld [vmem:[%s2 + $0x1b8] sm:$0xff]
    %v2976 = vld [vmem:[%s2 + $0x1c0] sm:$0xff]
    %v2977 = vld [vmem:[%s2 + $0x1c8] sm:$0xff]
    %v2978 = vld [vmem:[%s2 + $0x1d0] sm:$0xff]
    %v2979 = vld [vmem:[%s2 + $0x1d8] sm:$0xff]
    %v2980 = vld [vmem:[%s2 + $0x1e0] sm:$0xff]
    %v2981 = vld [vmem:[%s2 + $0x1e8] sm:$0xff]
    %v2982 = vld [vmem:[%s2 + $0x1f0] sm:$0xff]
    %v2983 = vld [vmem:[%s2 + $0x1f8] sm:$0xff]
    %v2984 = vld [vmem:[%s2 + $0x200] sm:$0xff]
    %v2985 = vld [vmem:[%s2 + $0x208] sm:$0xff]
    %v2986 = vld [vmem:[%s2 + $0x210] sm:$0xff]
    %v2987 = vld [vmem:[%s2 + $0x218] sm:$0xff]
    %v2988 = vld [vmem:[%s2 + $0x220] sm:$0xff]
    %v2989 = vld [vmem:[%s2 + $0x228] sm:$0xff]
    %v2990 = vld [vmem:[%s2 + $0x230] sm:$0xff]
    %v2991 = vld [vmem:[%s2 + $0x238] sm:$0xff]
    %v2992 = vld [vmem:[%s2 + $0x240] sm:$0xff]
    %v2993 = vld [vmem:[%s2 + $0x248] sm:$0xff]
    %v2994 = vld [vmem:[%s2 + $0x250] sm:$0xff]
    %v2995 = vld [vmem:[%s2 + $0x258] sm:$0xff]
    %v2996 = vld [vmem:[%s2 + $0x260] sm:$0xff]
    %v2997 = vld [vmem:[%s2 + $0x268] sm:$0xff]
    %v2998 = vld [vmem:[%s2 + $0x270] sm:$0xff]
    %v2999 = vld [vmem:[%s2 + $0x278] sm:$0xff]
    %v3000 = vld [vmem:[%s2 + $0x280] sm:$0xff]
    %v3001 = vld [vmem:[%s2 + $0x288] sm:$0xff]
    %v3002 = vld [vmem:[%s2 + $0x290] sm:$0xff]
    %v3003 = vld [vmem:[%s2 + $0x298] sm:$0xff]
    %v3004 = vld [vmem:[%s2 + $0x2a0] sm:$0xff]
    %v3005 = vld [vmem:[%s2 + $0x2a8] sm:$0xff]
    %v3006 = vld [vmem:[%s2 + $0x2b0] sm:$0xff]
    %v3007 = vld [vmem:[%s2 + $0x2b8] sm:$0xff]
    %v3008 = vld [vmem:[%s2 + $0x2c0] sm:$0xff]
    %v3009 = vld [vmem:[%s2 + $0x2c8] sm:$0xff]
    %v3010 = vld [vmem:[%s2 + $0x2d0] sm:$0xff]
    %v3011 = vld [vmem:[%s2 + $0x2d8] sm:$0xff]
    %v3012 = vld [vmem:[%s2 + $0x2e0] sm:$0xff]
    %v3013 = vld [vmem:[%s2 + $0x2e8] sm:$0xff]
    %v3014 = vld [vmem:[%s2 + $0x2f0] sm:$0xff]
    %v3015 = vld [vmem:[%s2 + $0x2f8] sm:$0xff]
    %v3016 = vld [vmem:[%s2 + $0x300] sm:$0xff]
    %v3017 = vld [vmem:[%s2 + $0x308] sm:$0xff]
    %v3018 = vld [vmem:[%s2 + $0x310] sm:$0xff]
    %v3019 = vld [vmem:[%s2 + $0x318] sm:$0xff]
    %v3020 = vld [vmem:[%s2 + $0x320] sm:$0xff]
    %v3021 = vld [vmem:[%s2 + $0x328] sm:$0xff]
    %v3022 = vld [vmem:[%s2 + $0x330] sm:$0xff]
    %v3023 = vld [vmem:[%s2 + $0x338] sm:$0xff]
    %v3024 = vld [vmem:[%s2 + $0x340] sm:$0xff]
    %v3025 = vld [vmem:[%s2 + $0x348] sm:$0xff]
    %v3026 = vld [vmem:[%s2 + $0x350] sm:$0xff]
    %v3027 = vld [vmem:[%s2 + $0x358] sm:$0xff]
    %v3028 = vld [vmem:[%s2 + $0x360] sm:$0xff]
    %v3029 = vld [vmem:[%s2 + $0x368] sm:$0xff]
    %v3030 = vld [vmem:[%s2 + $0x370] sm:$0xff]
    %v3031 = vld [vmem:[%s2 + $0x378] sm:$0xff]
    %v3032 = vld [vmem:[%s2 + $0x380] sm:$0xff]
    %v3033 = vld [vmem:[%s2 + $0x388] sm:$0xff]
    %v3034 = vld [vmem:[%s2 + $0x390] sm:$0xff]
    %v3035 = vld [vmem:[%s2 + $0x398] sm:$0xff]
    %v3036 = vld [vmem:[%s2 + $0x3a0] sm:$0xff]
    %v3037 = vld [vmem:[%s2 + $0x3a8] sm:$0xff]
    %v3038 = vld [vmem:[%s2 + $0x3b0] sm:$0xff]
    %v3039 = vld [vmem:[%s2 + $0x3b8] sm:$0xff]
    %v3040 = vld [vmem:[%s2 + $0x3c0] sm:$0xff]
    %v3041 = vld [vmem:[%s2 + $0x3c8] sm:$0xff]
    %v3042 = vld [vmem:[%s2 + $0x3d0] sm:$0xff]
    %v3043 = vld [vmem:[%s2 + $0x3d8] sm:$0xff]
    %v3044 = vld [vmem:[%s2 + $0x3e0] sm:$0xff]
    %v3045 = vld [vmem:[%s2 + $0x3e8] sm:$0xff]
    %v3046 = vld [vmem:[%s2 + $0x3f0] sm:$0xff]
    %v3047 = vld [vmem:[%s2 + $0x3f8] sm:$0xff]
    %v3048 = vld [vmem:[%s2 + $0x400] sm:$0xff]
    %v3049 = vld [vmem:[%s2 + $0x408] sm:$0xff]
    %v3050 = vld [vmem:[%s2 + $0x410] sm:$0xff]
    %v3051 = vld [vmem:[%s2 + $0x418] sm:$0xff]
    %v3052 = vld [vmem:[%s2 + $0x420] sm:$0xff]
    %v3053 = vld [vmem:[%s2 + $0x428] sm:$0xff]
    %v3054 = vld [vmem:[%s2 + $0x430] sm:$0xff]
    %v3055 = vld [vmem:[%s2 + $0x438] sm:$0xff]
    %v3056 = vld [vmem:[%s2 + $0x440] sm:$0xff]
    %v3057 = vld [vmem:[%s2 + $0x448] sm:$0xff]
    %v3058 = vld [vmem:[%s2 + $0x450] sm:$0xff]
    %v3059 = vld [vmem:[%s2 + $0x458] sm:$0xff]
    %v3060 = vld [vmem:[%s2 + $0x460] sm:$0xff]
    %v3061 = vld [vmem:[%s2 + $0x468] sm:$0xff]
    %v3062 = vld [vmem:[%s2 + $0x470] sm:$0xff]
    %v3063 = vld [vmem:[%s2 + $0x478] sm:$0xff]
    %v3064 = vld [vmem:[%s2 + $0x480] sm:$0xff]
    %v3065 = vld [vmem:[%s2 + $0x488] sm:$0xff]
    %v3066 = vld [vmem:[%s2 + $0x490] sm:$0xff]
    %v3067 = vld [vmem:[%s2 + $0x498] sm:$0xff]
    %v3068 = vld [vmem:[%s2 + $0x4a0] sm:$0xff]
    %v3069 = vld [vmem:[%s2 + $0x4a8] sm:$0xff]
    %v3070 = vld [vmem:[%s2 + $0x4b0] sm:$0xff]
    %v3071 = vld [vmem:[%s2 + $0x4b8] sm:$0xff]
    %v3072 = vld [vmem:[%s2 + $0x4c0] sm:$0xff]
    %v3073 = vld [vmem:[%s2 + $0x4c8] sm:$0xff]
    %v3074 = vld [vmem:[%s2 + $0x4d0] sm:$0xff]
    %v3075 = vld [vmem:[%s2 + $0x4d8] sm:$0xff]
    %v3076 = vld [vmem:[%s2 + $0x4e0] sm:$0xff]
    %v3077 = vld [vmem:[%s2 + $0x4e8] sm:$0xff]
    %v3078 = vld [vmem:[%s2 + $0x4f0] sm:$0xff]
    %v3079 = vld [vmem:[%s2 + $0x4f8] sm:$0xff]
    %v3080 = vld [vmem:[%s2 + $0x500] sm:$0xff]
    %v3081 = vld [vmem:[%s2 + $0x508] sm:$0xff]
    %v3082 = vld [vmem:[%s2 + $0x510] sm:$0xff]
    %v3083 = vld [vmem:[%s2 + $0x518] sm:$0xff]
    %v3084 = vld [vmem:[%s2 + $0x520] sm:$0xff]
    %v3085 = vld [vmem:[%s2 + $0x528] sm:$0xff]
    %v3086 = vld [vmem:[%s2 + $0x530] sm:$0xff]
    %v3087 = vld [vmem:[%s2 + $0x538] sm:$0xff]
    %v3088 = vld [vmem:[%s2 + $0x540] sm:$0xff]
    %v3089 = vld [vmem:[%s2 + $0x548] sm:$0xff]
    %v3090 = vld [vmem:[%s2 + $0x550] sm:$0xff]
    %v3091 = vld [vmem:[%s2 + $0x558] sm:$0xff]
    %v3092 = vld [vmem:[%s2 + $0x560] sm:$0xff]
    %v3093 = vld [vmem:[%s2 + $0x568] sm:$0xff]
    %v3094 = vld [vmem:[%s2 + $0x570] sm:$0xff]
    %v3095 = vld [vmem:[%s2 + $0x578] sm:$0xff]
    %v3096 = vld [vmem:[%s2 + $0x580] sm:$0xff]
    %v3097 = vld [vmem:[%s2 + $0x588] sm:$0xff]
    %v3098 = vld [vmem:[%s2 + $0x590] sm:$0xff]
    %v3099 = vld [vmem:[%s2 + $0x598] sm:$0xff]
    %v3100 = vld [vmem:[%s2 + $0x5a0] sm:$0xff]
    %v3101 = vld [vmem:[%s2 + $0x5a8] sm:$0xff]
    %v3102 = vld [vmem:[%s2 + $0x5b0] sm:$0xff]
    %v3103 = vld [vmem:[%s2 + $0x5b8] sm:$0xff]
    %v3104 = vld [vmem:[%s2 + $0x5c0] sm:$0xff]
    %v3105 = vld [vmem:[%s2 + $0x5c8] sm:$0xff]
    %v3106 = vld [vmem:[%s2 + $0x5d0] sm:$0xff]
    %v3107 = vld [vmem:[%s2 + $0x5d8] sm:$0xff]
    %v3108 = vld [vmem:[%s2 + $0x5e0] sm:$0xff]
    %v3109 = vld [vmem:[%s2 + $0x5e8] sm:$0xff]
    %v3110 = vld [vmem:[%s2 + $0x5f0] sm:$0xff]
    %v3111 = vld [vmem:[%s2 + $0x5f8] sm:$0xff]
    %v3112 = vld [vmem:[%s2 + $0x600] sm:$0xff]
    %v3113 = vld [vmem:[%s2 + $0x608] sm:$0xff]
    %v3114 = vld [vmem:[%s2 + $0x610] sm:$0xff]
    %v3115 = vld [vmem:[%s2 + $0x618] sm:$0xff]
    %v3116 = vld [vmem:[%s2 + $0x620] sm:$0xff]
    %v3117 = vld [vmem:[%s2 + $0x628] sm:$0xff]
    %v3118 = vld [vmem:[%s2 + $0x630] sm:$0xff]
    %v3119 = vld [vmem:[%s2 + $0x638] sm:$0xff]
    %v3120 = vld [vmem:[%s2 + $0x640] sm:$0xff]
    %v3121 = vld [vmem:[%s2 + $0x648] sm:$0xff]
    %v3122 = vld [vmem:[%s2 + $0x650] sm:$0xff]
    %v3123 = vld [vmem:[%s2 + $0x658] sm:$0xff]
    %v3124 = vld [vmem:[%s2 + $0x660] sm:$0xff]
    %v3125 = vld [vmem:[%s2 + $0x668] sm:$0xff]
    %v3126 = vld [vmem:[%s2 + $0x670] sm:$0xff]
    %v3127 = vld [vmem:[%s2 + $0x678] sm:$0xff]
    %v3128 = vld [vmem:[%s2 + $0x680] sm:$0xff]
    %v3129 = vld [vmem:[%s2 + $0x688] sm:$0xff]
    %v3130 = vld [vmem:[%s2 + $0x690] sm:$0xff]
    %v3131 = vld [vmem:[%s2 + $0x698] sm:$0xff]
    %v3132 = vld [vmem:[%s2 + $0x6a0] sm:$0xff]
    %v3133 = vld [vmem:[%s2 + $0x6a8] sm:$0xff]
    %v3134 = vld [vmem:[%s2 + $0x6b0] sm:$0xff]
    %v3135 = vld [vmem:[%s2 + $0x6b8] sm:$0xff]
    %v3136 = vld [vmem:[%s2 + $0x6c0] sm:$0xff]
    %v3137 = vld [vmem:[%s2 + $0x6c8] sm:$0xff]
    %v3138 = vld [vmem:[%s2 + $0x6d0] sm:$0xff]
    %v3139 = vld [vmem:[%s2 + $0x6d8] sm:$0xff]
    %v3140 = vld [vmem:[%s2 + $0x6e0] sm:$0xff]
    %v3141 = vld [vmem:[%s2 + $0x6e8] sm:$0xff]
    %v3142 = vld [vmem:[%s2 + $0x6f0] sm:$0xff]
    %v3143 = vld [vmem:[%s2 + $0x6f8] sm:$0xff]
    %v3144 = vld [vmem:[%s2 + $0x700] sm:$0xff]
    %v3145 = vld [vmem:[%s2 + $0x708] sm:$0xff]
    %v3146 = vld [vmem:[%s2 + $0x710] sm:$0xff]
    %v3147 = vld [vmem:[%s2 + $0x718] sm:$0xff]
    %v3148 = vld [vmem:[%s2 + $0x720] sm:$0xff]
    %v3149 = vld [vmem:[%s2 + $0x728] sm:$0xff]
    %v3150 = vld [vmem:[%s2 + $0x730] sm:$0xff]
    %v3151 = vld [vmem:[%s2 + $0x738] sm:$0xff]
    %v3152 = vld [vmem:[%s2 + $0x740] sm:$0xff]
    %v3153 = vld [vmem:[%s2 + $0x748] sm:$0xff]
    %v3154 = vld [vmem:[%s2 + $0x750] sm:$0xff]
    %v3155 = vld [vmem:[%s2 + $0x758] sm:$0xff]
    %v3156 = vld [vmem:[%s2 + $0x760] sm:$0xff]
    %v3157 = vld [vmem:[%s2 + $0x768] sm:$0xff]
    %v3158 = vld [vmem:[%s2 + $0x770] sm:$0xff]
    %v3159 = vld [vmem:[%s2 + $0x778] sm:$0xff]
    %v3160 = vld [vmem:[%s2 + $0x780] sm:$0xff]
    %v3161 = vld [vmem:[%s2 + $0x788] sm:$0xff]
    %v3162 = vld [vmem:[%s2 + $0x790] sm:$0xff]
    %v3163 = vld [vmem:[%s2 + $0x798] sm:$0xff]
    %v3164 = vld [vmem:[%s2 + $0x7a0] sm:$0xff]
    %v3165 = vld [vmem:[%s2 + $0x7a8] sm:$0xff]
    %v3166 = vld [vmem:[%s2 + $0x7b0] sm:$0xff]
    %v3167 = vld [vmem:[%s2 + $0x7b8] sm:$0xff]
    %v3168 = vld [vmem:[%s2 + $0x7c0] sm:$0xff]
    %v3169 = vld [vmem:[%s2 + $0x7c8] sm:$0xff]
    %v3170 = vld [vmem:[%s2 + $0x7d0] sm:$0xff]
    %v3171 = vld [vmem:[%s2 + $0x7d8] sm:$0xff]
    %v3172 = vld [vmem:[%s2 + $0x7e0] sm:$0xff]
    %v3173 = vld [vmem:[%s2 + $0x7e8] sm:$0xff]
    %v3174 = vld [vmem:[%s2 + $0x7f0] sm:$0xff]
    %v3175 = vld [vmem:[%s2 + $0x7f8] sm:$0xff]
    %v3176 = vld [vmem:[%s2 + $0x800] sm:$0xff]
    %v3177 = vld [vmem:[%s2 + $0x808] sm:$0xff]
    %v3178 = vld [vmem:[%s2 + $0x810] sm:$0xff]
    %v3179 = vld [vmem:[%s2 + $0x818] sm:$0xff]
    %v3180 = vld [vmem:[%s2 + $0x820] sm:$0xff]
    %v3181 = vld [vmem:[%s2 + $0x828] sm:$0xff]
    %v3182 = vld [vmem:[%s2 + $0x830] sm:$0xff]
    %v3183 = vld [vmem:[%s2 + $0x838] sm:$0xff]
    %v3184 = vld [vmem:[%s2 + $0x840] sm:$0xff]
    %v3185 = vld [vmem:[%s2 + $0x848] sm:$0xff]
    %v3186 = vld [vmem:[%s2 + $0x850] sm:$0xff]
    %v3187 = vld [vmem:[%s2 + $0x858] sm:$0xff]
    %v3188 = vld [vmem:[%s2 + $0x860] sm:$0xff]
    %v3189 = vld [vmem:[%s2 + $0x868] sm:$0xff]
    %v3190 = vld [vmem:[%s2 + $0x870] sm:$0xff]
    %v3191 = vld [vmem:[%s2 + $0x878] sm:$0xff]
    %v3192 = vld [vmem:[%s2 + $0x880] sm:$0xff]
    %v3193 = vld [vmem:[%s2 + $0x888] sm:$0xff]
    %v3194 = vld [vmem:[%s2 + $0x890] sm:$0xff]
    %v3195 = vld [vmem:[%s2 + $0x898] sm:$0xff]
    %v3196 = vld [vmem:[%s2 + $0x8a0] sm:$0xff]
    %v3197 = vld [vmem:[%s2 + $0x8a8] sm:$0xff]
    %v3198 = vld [vmem:[%s2 + $0x8b0] sm:$0xff]
    %v3199 = vld [vmem:[%s2 + $0x8b8] sm:$0xff]
    %v3200 = vld [vmem:[%s2 + $0x8c0] sm:$0xff]
    %v3201 = vld [vmem:[%s2 + $0x8c8] sm:$0xff]
    %v3202 = vld [vmem:[%s2 + $0x8d0] sm:$0xff]
    %v3203 = vld [vmem:[%s2 + $0x8d8] sm:$0xff]
    %v3204 = vld [vmem:[%s2 + $0x8e0] sm:$0xff]
    %v3205 = vld [vmem:[%s2 + $0x8e8] sm:$0xff]
    %v3206 = vld [vmem:[%s2 + $0x8f0] sm:$0xff]
    %v3207 = vld [vmem:[%s2 + $0x8f8] sm:$0xff]
    %v3208 = vld [vmem:[%s2 + $0x900] sm:$0xff]
    %v3209 = vld [vmem:[%s2 + $0x908] sm:$0xff]
    %v3210 = vld [vmem:[%s2 + $0x910] sm:$0xff]
    %v3211 = vld [vmem:[%s2 + $0x918] sm:$0xff]
    %v3212 = vld [vmem:[%s2 + $0x920] sm:$0xff]
    %v3213 = vld [vmem:[%s2 + $0x928] sm:$0xff]
    %v3214 = vld [vmem:[%s2 + $0x930] sm:$0xff]
    %v3215 = vld [vmem:[%s2 + $0x938] sm:$0xff]
    %v3216 = vld [vmem:[%s2 + $0x940] sm:$0xff]
    %v3217 = vld [vmem:[%s2 + $0x948] sm:$0xff]
    %v3218 = vld [vmem:[%s2 + $0x950] sm:$0xff]
    %v3219 = vld [vmem:[%s2 + $0x958] sm:$0xff]
    %v3220 = vld [vmem:[%s2 + $0x960] sm:$0xff]
    %v3221 = vld [vmem:[%s2 + $0x968] sm:$0xff]
    %v3222 = vld [vmem:[%s2 + $0x970] sm:$0xff]
    %v3223 = vld [vmem:[%s2 + $0x978] sm:$0xff]
    %v3224 = vld [vmem:[%s2 + $0x980] sm:$0xff]
    %v3225 = vld [vmem:[%s2 + $0x988] sm:$0xff]
    %v3226 = vld [vmem:[%s2 + $0x990] sm:$0xff]
    %v3227 = vld [vmem:[%s2 + $0x998] sm:$0xff]
    %v3228 = vld [vmem:[%s2 + $0x9a0] sm:$0xff]
    %v3229 = vld [vmem:[%s2 + $0x9a8] sm:$0xff]
    %v3230 = vld [vmem:[%s2 + $0x9b0] sm:$0xff]
    %v3231 = vld [vmem:[%s2 + $0x9b8] sm:$0xff]
    %v3232 = vld [vmem:[%s2 + $0x9c0] sm:$0xff]
    %v3233 = vld [vmem:[%s2 + $0x9c8] sm:$0xff]
    %v3234 = vld [vmem:[%s2 + $0x9d0] sm:$0xff]
    %v3235 = vld [vmem:[%s2 + $0x9d8] sm:$0xff]
    %v3236 = vld [vmem:[%s2 + $0x9e0] sm:$0xff]
    %v3237 = vld [vmem:[%s2 + $0x9e8] sm:$0xff]
    %v3238 = vld [vmem:[%s2 + $0x9f0] sm:$0xff]
    %v3239 = vld [vmem:[%s2 + $0x9f8] sm:$0xff]
    %v3240 = vld [vmem:[%s2 + $0xa00] sm:$0xff]
    %v3241 = vld [vmem:[%s2 + $0xa08] sm:$0xff]
    %v3242 = vld [vmem:[%s2 + $0xa10] sm:$0xff]
    %v3243 = vld [vmem:[%s2 + $0xa18] sm:$0xff]
    %v3244 = vld [vmem:[%s2 + $0xa20] sm:$0xff]
    %v3245 = vld [vmem:[%s2 + $0xa28] sm:$0xff]
    %v3246 = vld [vmem:[%s2 + $0xa30] sm:$0xff]
    %v3247 = vld [vmem:[%s2 + $0xa38] sm:$0xff]
    %v3248 = vld [vmem:[%s2 + $0xa40] sm:$0xff]
    %v3249 = vld [vmem:[%s2 + $0xa48] sm:$0xff]
    %v3250 = vld [vmem:[%s2 + $0xa50] sm:$0xff]
    %v3251 = vld [vmem:[%s2 + $0xa58] sm:$0xff]
    %v3252 = vld [vmem:[%s2 + $0xa60] sm:$0xff]
    %v3253 = vld [vmem:[%s2 + $0xa68] sm:$0xff]
    %v3254 = vld [vmem:[%s2 + $0xa70] sm:$0xff]
    %v3255 = vld [vmem:[%s2 + $0xa78] sm:$0xff]
    %v3256 = vld [vmem:[%s2 + $0xa80] sm:$0xff]
    %v3257 = vld [vmem:[%s2 + $0xa88] sm:$0xff]
    %v3258 = vld [vmem:[%s2 + $0xa90] sm:$0xff]
    %v3259 = vld [vmem:[%s2 + $0xa98] sm:$0xff]
    %v3260 = vld [vmem:[%s2 + $0xaa0] sm:$0xff]
    %v3261 = vld [vmem:[%s2 + $0xaa8] sm:$0xff]
    %v3262 = vld [vmem:[%s2 + $0xab0] sm:$0xff]
    %v3263 = vld [vmem:[%s2 + $0xab8] sm:$0xff]
    %v3264 = vld [vmem:[%s2 + $0xac0] sm:$0xff]
    %v3265 = vld [vmem:[%s2 + $0xac8] sm:$0xff]
    %v3266 = vld [vmem:[%s2 + $0xad0] sm:$0xff]
    %v3267 = vld [vmem:[%s2 + $0xad8] sm:$0xff]
    %v3268 = vld [vmem:[%s2 + $0xae0] sm:$0xff]
    %v3269 = vld [vmem:[%s2 + $0xae8] sm:$0xff]
    %v3270 = vld [vmem:[%s2 + $0xaf0] sm:$0xff]
    %v3271 = vld [vmem:[%s2 + $0xaf8] sm:$0xff]
    %v3272 = vld [vmem:[%s2 + $0xb00] sm:$0xff]
    %v3273 = vld [vmem:[%s2 + $0xb08] sm:$0xff]
    %v3274 = vld [vmem:[%s2 + $0xb10] sm:$0xff]
    %v3275 = vld [vmem:[%s2 + $0xb18] sm:$0xff]
    %v3276 = vld [vmem:[%s2 + $0xb20] sm:$0xff]
    %v3277 = vld [vmem:[%s2 + $0xb28] sm:$0xff]
    %v3278 = vld [vmem:[%s2 + $0xb30] sm:$0xff]
    %v3279 = vld [vmem:[%s2 + $0xb38] sm:$0xff]
    %v3280 = vld [vmem:[%s2 + $0xb40] sm:$0xff]
    %v3281 = vld [vmem:[%s2 + $0xb48] sm:$0xff]
    %v3282 = vld [vmem:[%s2 + $0xb50] sm:$0xff]
    %v3283 = vld [vmem:[%s2 + $0xb58] sm:$0xff]
    %v3284 = vld [vmem:[%s2 + $0xb60] sm:$0xff]
    %v3285 = vld [vmem:[%s2 + $0xb68] sm:$0xff]
    %v3286 = vld [vmem:[%s2 + $0xb70] sm:$0xff]
    %v3287 = vld [vmem:[%s2 + $0xb78] sm:$0xff]
    %v3288 = vld [vmem:[%s2 + $0xb80] sm:$0xff]
    %v3289 = vld [vmem:[%s2 + $0xb88] sm:$0xff]
    %v3290 = vld [vmem:[%s2 + $0xb90] sm:$0xff]
    %v3291 = vld [vmem:[%s2 + $0xb98] sm:$0xff]
    %v3292 = vld [vmem:[%s2 + $0xba0] sm:$0xff]
    %v3293 = vld [vmem:[%s2 + $0xba8] sm:$0xff]
    %v3294 = vld [vmem:[%s2 + $0xbb0] sm:$0xff]
    %v3295 = vld [vmem:[%s2 + $0xbb8] sm:$0xff]
    %v3296 = vld [vmem:[%s2 + $0xbc0] sm:$0xff]
    %v3297 = vld [vmem:[%s2 + $0xbc8] sm:$0xff]
    %v3298 = vld [vmem:[%s2 + $0xbd0] sm:$0xff]
    %v3299 = vld [vmem:[%s2 + $0xbd8] sm:$0xff]
    %v3300 = vld [vmem:[%s2 + $0xbe0] sm:$0xff]
    %v3301 = vld [vmem:[%s2 + $0xbe8] sm:$0xff]
    %v3302 = vld [vmem:[%s2 + $0xbf0] sm:$0xff]
    %v3303 = vld [vmem:[%s2 + $0xbf8] sm:$0xff]
    %v3304 = vld [vmem:[%s2 + $0xc00] sm:$0xff]
    %v3305 = vld [vmem:[%s2 + $0xc08] sm:$0xff]
    %v3306 = vld [vmem:[%s2 + $0xc10] sm:$0xff]
    %v3307 = vld [vmem:[%s2 + $0xc18] sm:$0xff]
    %v3308 = vld [vmem:[%s2 + $0xc20] sm:$0xff]
    %v3309 = vld [vmem:[%s2 + $0xc28] sm:$0xff]
    %v3310 = vld [vmem:[%s2 + $0xc30] sm:$0xff]
    %v3311 = vld [vmem:[%s2 + $0xc38] sm:$0xff]
    %v3312 = vld [vmem:[%s2 + $0xc40] sm:$0xff]
    %v3313 = vld [vmem:[%s2 + $0xc48] sm:$0xff]
    %v3314 = vld [vmem:[%s2 + $0xc50] sm:$0xff]
    %v3315 = vld [vmem:[%s2 + $0xc58] sm:$0xff]
    %v3316 = vld [vmem:[%s2 + $0xc60] sm:$0xff]
    %v3317 = vld [vmem:[%s2 + $0xc68] sm:$0xff]
    %v3318 = vld [vmem:[%s2 + $0xc70] sm:$0xff]
    %v3319 = vld [vmem:[%s2 + $0xc78] sm:$0xff]
    %vm3320 = vcmask 261120
    %v3322 = vsel %vm3320, %v2919, 0
    %3324 = vmatprep.subr.mxu0 %v2921
    %3325 = vmatpush1.msra.mxu0 %v2920
    %3326 = vmatprep.subr.mxu0 %v2925
    %3327 = vmatpush1.msra.mxu0 %v2924
    %3328 = vmatprep.subr.mxu0 %v2929
    %3329 = vmatpush1.msra.mxu0 %v2928
    %3330 = vmatprep.subr.mxu0 %v2933
    %3331 = vmatpush1.msra.mxu0 %v2932
    %3332 = vmatprep.subr.mxu0 %v2937
    %3333 = vmatpush1.msra.mxu0 %v2936
    %3334 = vmatprep.subr.mxu0 %v2941
    %3335 = vmatpush1.msra.mxu0 %v2940
    %3336 = vmatprep.subr.mxu0 %v2945
    %3337 = vmatpush1.msra.mxu0 %v2944
    %3338 = vmatprep.subr.mxu0 %v2949
    %3339 = vmatpush1.msra.mxu0 %v2948
    %3340 = vmatprep.subr.mxu0 %v2953
    %3341 = vmatpush1.msra.mxu0 %v2952
    %3342 = vmatprep.subr.mxu0 %v2957
    %3343 = vmatpush1.msra.mxu0 %v2956
    %3344 = vmatprep.subr.mxu0 %v2961
    %3345 = vmatpush1.msra.mxu0 %v2960
    %3346 = vmatprep.subr.mxu0 %v2965
    %3347 = vmatpush1.msra.mxu0 %v2964
    %3348 = vmatprep.subr.mxu0 %v2969
    %3349 = vmatpush1.msra.mxu0 %v2968
    %3350 = vmatprep.subr.mxu0 %v2973
    %3351 = vmatpush1.msra.mxu0 %v2972
    %3352 = vmatprep.subr.mxu0 %v2977
    %3353 = vmatpush1.msra.mxu0 %v2976
    %3354 = vmatprep.subr.mxu0 %v2981
    %3355 = vmatpush1.msra.mxu0 %v2980
    %3356 = vmatprep.subr.mxu0 %v2985
    %3357 = vmatpush1.msra.mxu0 %v2984
    %3358 = vmatprep.subr.mxu0 %v2989
    %3359 = vmatpush1.msra.mxu0 %v2988
    %3360 = vmatprep.subr.mxu0 %v2993
    %3361 = vmatpush1.msra.mxu0 %v2992
    %3362 = vmatprep.subr.mxu0 %v2997
    %3363 = vmatpush1.msra.mxu0 %v2996
    %3364 = vmatprep.subr.mxu0 %v3001
    %3365 = vmatpush1.msra.mxu0 %v3000
    %3366 = vmatprep.subr.mxu0 %v3005
    %3367 = vmatpush1.msra.mxu0 %v3004
    %3368 = vmatprep.subr.mxu0 %v3009
    %3369 = vmatpush1.msra.mxu0 %v3008
    %3370 = vmatprep.subr.mxu0 %v3013
    %3371 = vmatpush1.msra.mxu0 %v3012
    %3372 = vmatprep.subr.mxu0 %v3017
    %3373 = vmatpush1.msra.mxu0 %v3016
    %3374 = vmatprep.subr.mxu0 %v3021
    %3375 = vmatpush1.msra.mxu0 %v3020
    %3376 = vmatprep.subr.mxu0 %v3025
    %3377 = vmatpush1.msra.mxu0 %v3024
    %3378 = vmatprep.subr.mxu0 %v3029
    %3379 = vmatpush1.msra.mxu0 %v3028
    %3380 = vmatprep.subr.mxu0 %v3033
    %3381 = vmatpush1.msra.mxu0 %v3032
    %3382 = vmatprep.subr.mxu0 %v3037
    %3383 = vmatpush1.msra.mxu0 %v3036
    %3384 = vmatprep.subr.mxu0 %v3041
    %3385 = vmatpush1.msra.mxu0 %v3040
    %3386 = vmatprep.subr.mxu0 %v3045
    %3387 = vmatpush1.msra.mxu0 %v3044
    %3388 = vmatprep.mubr.f32.mxu0 %v2914
    %3389 = vmatmul.mubr.f32.gmra.mrb[0].mxu0 %v2913
    %v3390 = vpop.f32.mrb[0].mxu0
    %v3391 = vadd.f32 0.0, %v3390
    %v3392 = vpop.f32.mrb[0].mxu0
    %v3393 = vadd.f32 0.0, %v3392
    %3394 = vdwg.mxu0
    %3395 = vmatprep.subr.mxu0 %v3049
    %3396 = vmatpush1.msra.mxu0 %v3048
    %3397 = vmatprep.subr.mxu0 %v3053
    %3398 = vmatpush1.msra.mxu0 %v3052
    %3399 = vmatprep.subr.mxu0 %v3057
    %3400 = vmatpush1.msra.mxu0 %v3056
    %3401 = vmatprep.subr.mxu0 %v3061
    %3402 = vmatpush1.msra.mxu0 %v3060
    %3403 = vmatprep.subr.mxu0 %v3065
    %3404 = vmatpush1.msra.mxu0 %v3064
    %3405 = vmatprep.subr.mxu0 %v3069
    %3406 = vmatpush1.msra.mxu0 %v3068
    %3407 = vmatprep.subr.mxu0 %v3073
    %3408 = vmatpush1.msra.mxu0 %v3072
    %3409 = vmatprep.subr.mxu0 %v3077
    %3410 = vmatpush1.msra.mxu0 %v3076
    %3411 = vmatprep.subr.mxu0 %v3081
    %3412 = vmatpush1.msra.mxu0 %v3080
    %3413 = vmatprep.subr.mxu0 %v3085
    %3414 = vmatpush1.msra.mxu0 %v3084
    %3415 = vmatprep.subr.mxu0 %v3089
    %3416 = vmatpush1.msra.mxu0 %v3088
    %3417 = vmatprep.subr.mxu0 %v3093
    %3418 = vmatpush1.msra.mxu0 %v3092
    %3419 = vmatprep.subr.mxu0 %v3097
    %3420 = vmatpush1.msra.mxu0 %v3096
    %3421 = vmatprep.subr.mxu0 %v3101
    %3422 = vmatpush1.msra.mxu0 %v3100
    %3423 = vmatprep.subr.mxu0 %v3105
    %3424 = vmatpush1.msra.mxu0 %v3104
    %3425 = vmatprep.subr.mxu0 %v3109
    %3426 = vmatpush1.msra.mxu0 %v3108
    %3427 = vmatprep.subr.mxu0 %v3113
    %3428 = vmatpush1.msra.mxu0 %v3112
    %3429 = vmatprep.subr.mxu0 %v3117
    %3430 = vmatpush1.msra.mxu0 %v3116
    %3431 = vmatprep.subr.mxu0 %v3121
    %3432 = vmatpush1.msra.mxu0 %v3120
    %3433 = vmatprep.subr.mxu0 %v3125
    %3434 = vmatpush1.msra.mxu0 %v3124
    %3435 = vmatprep.subr.mxu0 %v3129
    %3436 = vmatpush1.msra.mxu0 %v3128
    %3437 = vmatprep.subr.mxu0 %v3133
    %3438 = vmatpush1.msra.mxu0 %v3132
    %3439 = vmatprep.subr.mxu0 %v3137
    %3440 = vmatpush1.msra.mxu0 %v3136
    %3441 = vmatprep.subr.mxu0 %v3141
    %3442 = vmatpush1.msra.mxu0 %v3140
    %3443 = vmatprep.subr.mxu0 %v3145
    %3444 = vmatpush1.msra.mxu0 %v3144
    %3445 = vmatprep.subr.mxu0 %v3149
    %3446 = vmatpush1.msra.mxu0 %v3148
    %3447 = vmatprep.subr.mxu0 %v3153
    %3448 = vmatpush1.msra.mxu0 %v3152
    %3449 = vmatprep.subr.mxu0 %v3157
    %3450 = vmatpush1.msra.mxu0 %v3156
    %3451 = vmatprep.subr.mxu0 %v3161
    %3452 = vmatpush1.msra.mxu0 %v3160
    %3453 = vmatprep.subr.mxu0 %v3165
    %3454 = vmatpush1.msra.mxu0 %v3164
    %3455 = vmatprep.subr.mxu0 %v3169
    %3456 = vmatpush1.msra.mxu0 %v3168
    %3457 = vmatprep.subr.mxu0 %v3173
    %3458 = vmatpush1.msra.mxu0 %v3172
    %3459 = vmatprep.mubr.f32.mxu0 %v2916
    %3460 = vmatmul.mubr.f32.gmra.mrb[0].mxu0 %v2915
    %v3461 = vpop.f32.mrb[0].mxu0
    %v3462 = vadd.f32 %v3391, %v3461
    %v3463 = vpop.f32.mrb[0].mxu0
    %v3464 = vadd.f32 %v3393, %v3463
    %3465 = vdwg.mxu0
    %3466 = vmatprep.subr.mxu0 %v3177
    %3467 = vmatpush1.msra.mxu0 %v3176
    %3468 = vmatprep.subr.mxu0 %v3181
    %3469 = vmatpush1.msra.mxu0 %v3180
    %3470 = vmatprep.subr.mxu0 %v3185
    %3471 = vmatpush1.msra.mxu0 %v3184
    %3472 = vmatprep.subr.mxu0 %v3189
    %3473 = vmatpush1.msra.mxu0 %v3188
    %3474 = vmatprep.subr.mxu0 %v3193
    %3475 = vmatpush1.msra.mxu0 %v3192
    %3476 = vmatprep.subr.mxu0 %v3197
    %3477 = vmatpush1.msra.mxu0 %v3196
    %3478 = vmatprep.subr.mxu0 %v3201
    %3479 = vmatpush1.msra.mxu0 %v3200
    %3480 = vmatprep.subr.mxu0 %v3205
    %3481 = vmatpush1.msra.mxu0 %v3204
    %3482 = vmatprep.subr.mxu0 %v3209
    %3483 = vmatpush1.msra.mxu0 %v3208
    %3484 = vmatprep.subr.mxu0 %v3213
    %3485 = vmatpush1.msra.mxu0 %v3212
    %3486 = vmatprep.subr.mxu0 %v3217
    %3487 = vmatpush1.msra.mxu0 %v3216
    %3488 = vmatprep.subr.mxu0 %v3221
    %3489 = vmatpush1.msra.mxu0 %v3220
    %3490 = vmatprep.subr.mxu0 %v3225
    %3491 = vmatpush1.msra.mxu0 %v3224
    %3492 = vmatprep.subr.mxu0 %v3229
    %3493 = vmatpush1.msra.mxu0 %v3228
    %3494 = vmatprep.subr.mxu0 %v3233
    %3495 = vmatpush1.msra.mxu0 %v3232
    %3496 = vmatprep.subr.mxu0 %v3237
    %3497 = vmatpush1.msra.mxu0 %v3236
    %3498 = vmatprep.subr.mxu0 %v3241
    %3499 = vmatpush1.msra.mxu0 %v3240
    %3500 = vmatprep.subr.mxu0 %v3245
    %3501 = vmatpush1.msra.mxu0 %v3244
    %3502 = vmatprep.subr.mxu0 %v3249
    %3503 = vmatpush1.msra.mxu0 %v3248
    %3504 = vmatprep.subr.mxu0 %v3253
    %3505 = vmatpush1.msra.mxu0 %v3252
    %3506 = vmatprep.subr.mxu0 %v3257
    %3507 = vmatpush1.msra.mxu0 %v3256
    %3508 = vmatprep.subr.mxu0 %v3261
    %3509 = vmatpush1.msra.mxu0 %v3260
    %3510 = vmatprep.subr.mxu0 %v3265
    %3511 = vmatpush1.msra.mxu0 %v3264
    %3512 = vmatprep.subr.mxu0 %v3269
    %3513 = vmatpush1.msra.mxu0 %v3268
    %3514 = vmatprep.subr.mxu0 %v3273
    %3515 = vmatpush1.msra.mxu0 %v3272
    %3516 = vmatprep.subr.mxu0 %v3277
    %3517 = vmatpush1.msra.mxu0 %v3276
    %3518 = vmatprep.subr.mxu0 %v3281
    %3519 = vmatpush1.msra.mxu0 %v3280
    %3520 = vmatprep.subr.mxu0 %v3285
    %3521 = vmatpush1.msra.mxu0 %v3284
    %3522 = vmatprep.subr.mxu0 %v3289
    %3523 = vmatpush1.msra.mxu0 %v3288
    %3524 = vmatprep.subr.mxu0 %v3293
    %3525 = vmatpush1.msra.mxu0 %v3292
    %3526 = vmatprep.subr.mxu0 %v3297
    %3527 = vmatpush1.msra.mxu0 %v3296
    %3528 = vmatprep.subr.mxu0 %v3301
    %3529 = vmatpush1.msra.mxu0 %v3300
    %3530 = vmatprep.mubr.f32.mxu0 %v2918
    %3531 = vmatmul.mubr.f32.gmra.mrb[0].mxu0 %v2917
    %v3532 = vpop.f32.mrb[0].mxu0
    %v3533 = vadd.f32 %v3462, %v3532
    %v3534 = vpop.f32.mrb[0].mxu0
    %v3535 = vadd.f32 %v3464, %v3534
    %3536 = vdwg.mxu0
    %3537 = vmatprep.subr.mxu0 %v3305
    %3538 = vmatpush1.msra.mxu0 %v3304
    %3539 = vmatprep.subr.mxu0 %v3309
    %3540 = vmatpush1.msra.mxu0 %v3308
    %3541 = vmatprep.subr.mxu0 %v3313
    %3542 = vmatpush1.msra.mxu0 %v3312
    %3543 = vmatprep.subr.mxu0 %v3317
    %3544 = vmatpush1.msra.mxu0 %v3316
    %3545 = vmatprep.subr.mxu0 0.0
    %3546 = vmatpush1.msra.mxu0 0.0
    %3547 = vmatprep.subr.mxu0 0.0
    %3548 = vmatpush1.msra.mxu0 0.0
    %3549 = vmatprep.subr.mxu0 0.0
    %3550 = vmatpush1.msra.mxu0 0.0
    %3551 = vmatprep.subr.mxu0 0.0
    %3552 = vmatpush1.msra.mxu0 0.0
    %3553 = vmatprep.subr.mxu0 0.0
    %3554 = vmatpush1.msra.mxu0 0.0
    %3555 = vmatprep.subr.mxu0 0.0
    %3556 = vmatpush1.msra.mxu0 0.0
    %3557 = vmatprep.subr.mxu0 0.0
    %3558 = vmatpush1.msra.mxu0 0.0
    %3559 = vmatprep.subr.mxu0 0.0
    %3560 = vmatpush1.msra.mxu0 0.0
    %3561 = vmatprep.subr.mxu0 0.0
    %3562 = vmatpush1.msra.mxu0 0.0
    %3563 = vmatprep.subr.mxu0 0.0
    %3564 = vmatpush1.msra.mxu0 0.0
    %3565 = vmatprep.subr.mxu0 0.0
    %3566 = vmatpush1.msra.mxu0 0.0
    %3567 = vmatprep.subr.mxu0 0.0
    %3568 = vmatpush1.msra.mxu0 0.0
    %3569 = vmatprep.subr.mxu0 0.0
    %3570 = vmatpush1.msra.mxu0 0.0
    %3571 = vmatprep.subr.mxu0 0.0
    %3572 = vmatpush1.msra.mxu0 0.0
    %3573 = vmatprep.subr.mxu0 0.0
    %3574 = vmatpush1.msra.mxu0 0.0
    %3575 = vmatprep.subr.mxu0 0.0
    %3576 = vmatpush1.msra.mxu0 0.0
    %3577 = vmatprep.subr.mxu0 0.0
    %3578 = vmatpush1.msra.mxu0 0.0
    %3579 = vmatprep.subr.mxu0 0.0
    %3580 = vmatpush1.msra.mxu0 0.0
    %3581 = vmatprep.subr.mxu0 0.0
    %3582 = vmatpush1.msra.mxu0 0.0
    %3583 = vmatprep.subr.mxu0 0.0
    %3584 = vmatpush1.msra.mxu0 0.0
    %3585 = vmatprep.subr.mxu0 0.0
    %3586 = vmatpush1.msra.mxu0 0.0
    %3587 = vmatprep.subr.mxu0 0.0
    %3588 = vmatpush1.msra.mxu0 0.0
    %3589 = vmatprep.subr.mxu0 0.0
    %3590 = vmatpush1.msra.mxu0 0.0
    %3591 = vmatprep.subr.mxu0 0.0
    %3592 = vmatpush1.msra.mxu0 0.0
    %3593 = vmatprep.subr.mxu0 0.0
    %3594 = vmatpush1.msra.mxu0 0.0
    %3595 = vmatprep.subr.mxu0 0.0
    %3596 = vmatpush1.msra.mxu0 0.0
    %3597 = vmatprep.subr.mxu0 0.0
    %3598 = vmatpush1.msra.mxu0 0.0
    %3599 = vmatprep.subr.mxu0 0.0
    %3600 = vmatpush1.msra.mxu0 0.0
    %3601 = vmatprep.mubr.f32.mxu0 0.0
    %3602 = vmatmul.mubr.f32.gmra.mrb[0].mxu0 %v3322
    %v3603 = vpop.f32.mrb[0].mxu0
    %v3604 = vadd.f32 %v3533, %v3603
    %v3605 = vpop.f32.mrb[0].mxu0
    %v3606 = vadd.f32 %v3535, %v3605
    %3607 = vdwg.mxu0
    %3608 = vmatprep.subr.mxu0 %v2923
    %3609 = vmatpush1.msra.mxu0 %v2922
    %3610 = vmatprep.subr.mxu0 %v2927
    %3611 = vmatpush1.msra.mxu0 %v2926
    %3612 = vmatprep.subr.mxu0 %v2931
    %3613 = vmatpush1.msra.mxu0 %v2930
    %3614 = vmatprep.subr.mxu0 %v2935
    %3615 = vmatpush1.msra.mxu0 %v2934
    %3616 = vmatprep.subr.mxu0 %v2939
    %3617 = vmatpush1.msra.mxu0 %v2938
    %3618 = vmatprep.subr.mxu0 %v2943
    %3619 = vmatpush1.msra.mxu0 %v2942
    %3620 = vmatprep.subr.mxu0 %v2947
    %3621 = vmatpush1.msra.mxu0 %v2946
    %3622 = vmatprep.subr.mxu0 %v2951
    %3623 = vmatpush1.msra.mxu0 %v2950
    %3624 = vmatprep.subr.mxu0 %v2955
    %3625 = vmatpush1.msra.mxu0 %v2954
    %3626 = vmatprep.subr.mxu0 %v2959
    %3627 = vmatpush1.msra.mxu0 %v2958
    %3628 = vmatprep.subr.mxu0 %v2963
    %3629 = vmatpush1.msra.mxu0 %v2962
    %3630 = vmatprep.subr.mxu0 %v2967
    %3631 = vmatpush1.msra.mxu0 %v2966
    %3632 = vmatprep.subr.mxu0 %v2971
    %3633 = vmatpush1.msra.mxu0 %v2970
    %3634 = vmatprep.subr.mxu0 %v2975
    %3635 = vmatpush1.msra.mxu0 %v2974
    %3636 = vmatprep.subr.mxu0 %v2979
    %3637 = vmatpush1.msra.mxu0 %v2978
    %3638 = vmatprep.subr.mxu0 %v2983
    %3639 = vmatpush1.msra.mxu0 %v2982
    %3640 = vmatprep.subr.mxu0 %v2987
    %3641 = vmatpush1.msra.mxu0 %v2986
    %3642 = vmatprep.subr.mxu0 %v2991
    %3643 = vmatpush1.msra.mxu0 %v2990
    %3644 = vmatprep.subr.mxu0 %v2995
    %3645 = vmatpush1.msra.mxu0 %v2994
    %3646 = vmatprep.subr.mxu0 %v2999
    %3647 = vmatpush1.msra.mxu0 %v2998
    %3648 = vmatprep.subr.mxu0 %v3003
    %3649 = vmatpush1.msra.mxu0 %v3002
    %3650 = vmatprep.subr.mxu0 %v3007
    %3651 = vmatpush1.msra.mxu0 %v3006
    %3652 = vmatprep.subr.mxu0 %v3011
    %3653 = vmatpush1.msra.mxu0 %v3010
    %3654 = vmatprep.subr.mxu0 %v3015
    %3655 = vmatpush1.msra.mxu0 %v3014
    %3656 = vmatprep.subr.mxu0 %v3019
    %3657 = vmatpush1.msra.mxu0 %v3018
    %3658 = vmatprep.subr.mxu0 %v3023
    %3659 = vmatpush1.msra.mxu0 %v3022
    %3660 = vmatprep.subr.mxu0 %v3027
    %3661 = vmatpush1.msra.mxu0 %v3026
    %3662 = vmatprep.subr.mxu0 %v3031
    %3663 = vmatpush1.msra.mxu0 %v3030
    %3664 = vmatprep.subr.mxu0 %v3035
    %3665 = vmatpush1.msra.mxu0 %v3034
    %3666 = vmatprep.subr.mxu0 %v3039
    %3667 = vmatpush1.msra.mxu0 %v3038
    %3668 = vmatprep.subr.mxu0 %v3043
    %3669 = vmatpush1.msra.mxu0 %v3042
    %3670 = vmatprep.subr.mxu0 %v3047
    %3671 = vmatpush1.msra.mxu0 %v3046
    %3672 = vmatprep.mubr.f32.mxu0 %v2914
    %3673 = vmatmul.mubr.f32.gmra.mrb[0].mxu0 %v2913
    %v3674 = vpop.f32.mrb[0].mxu0
    %v3675 = vadd.f32 0.0, %v3674
    %v3676 = vpop.f32.mrb[0].mxu0
    %v3677 = vadd.f32 0.0, %v3676
    %3678 = vdwg.mxu0
    %3679 = vmatprep.subr.mxu0 %v3051
    %3680 = vmatpush1.msra.mxu0 %v3050
    %3681 = vmatprep.subr.mxu0 %v3055
    %3682 = vmatpush1.msra.mxu0 %v3054
    %3683 = vmatprep.subr.mxu0 %v3059
    %3684 = vmatpush1.msra.mxu0 %v3058
    %3685 = vmatprep.subr.mxu0 %v3063
    %3686 = vmatpush1.msra.mxu0 %v3062
    %3687 = vmatprep.subr.mxu0 %v3067
    %3688 = vmatpush1.msra.mxu0 %v3066
    %3689 = vmatprep.subr.mxu0 %v3071
    %3690 = vmatpush1.msra.mxu0 %v3070
    %3691 = vmatprep.subr.mxu0 %v3075
    %3692 = vmatpush1.msra.mxu0 %v3074
    %3693 = vmatprep.subr.mxu0 %v3079
    %3694 = vmatpush1.msra.mxu0 %v3078
    %3695 = vmatprep.subr.mxu0 %v3083
    %3696 = vmatpush1.msra.mxu0 %v3082
    %3697 = vmatprep.subr.mxu0 %v3087
    %3698 = vmatpush1.msra.mxu0 %v3086
    %3699 = vmatprep.subr.mxu0 %v3091
    %3700 = vmatpush1.msra.mxu0 %v3090
    %3701 = vmatprep.subr.mxu0 %v3095
    %3702 = vmatpush1.msra.mxu0 %v3094
    %3703 = vmatprep.subr.mxu0 %v3099
    %3704 = vmatpush1.msra.mxu0 %v3098
    %3705 = vmatprep.subr.mxu0 %v3103
    %3706 = vmatpush1.msra.mxu0 %v3102
    %3707 = vmatprep.subr.mxu0 %v3107
    %3708 = vmatpush1.msra.mxu0 %v3106
    %3709 = vmatprep.subr.mxu0 %v3111
    %3710 = vmatpush1.msra.mxu0 %v3110
    %3711 = vmatprep.subr.mxu0 %v3115
    %3712 = vmatpush1.msra.mxu0 %v3114
    %3713 = vmatprep.subr.mxu0 %v3119
    %3714 = vmatpush1.msra.mxu0 %v3118
    %3715 = vmatprep.subr.mxu0 %v3123
    %3716 = vmatpush1.msra.mxu0 %v3122
    %3717 = vmatprep.subr.mxu0 %v3127
    %3718 = vmatpush1.msra.mxu0 %v3126
    %3719 = vmatprep.subr.mxu0 %v3131
    %3720 = vmatpush1.msra.mxu0 %v3130
    %3721 = vmatprep.subr.mxu0 %v3135
    %3722 = vmatpush1.msra.mxu0 %v3134
    %3723 = vmatprep.subr.mxu0 %v3139
    %3724 = vmatpush1.msra.mxu0 %v3138
    %3725 = vmatprep.subr.mxu0 %v3143
    %3726 = vmatpush1.msra.mxu0 %v3142
    %3727 = vmatprep.subr.mxu0 %v3147
    %3728 = vmatpush1.msra.mxu0 %v3146
    %3729 = vmatprep.subr.mxu0 %v3151
    %3730 = vmatpush1.msra.mxu0 %v3150
    %3731 = vmatprep.subr.mxu0 %v3155
    %3732 = vmatpush1.msra.mxu0 %v3154
    %3733 = vmatprep.subr.mxu0 %v3159
    %3734 = vmatpush1.msra.mxu0 %v3158
    %3735 = vmatprep.subr.mxu0 %v3163
    %3736 = vmatpush1.msra.mxu0 %v3162
    %3737 = vmatprep.subr.mxu0 %v3167
    %3738 = vmatpush1.msra.mxu0 %v3166
    %3739 = vmatprep.subr.mxu0 %v3171
    %3740 = vmatpush1.msra.mxu0 %v3170
    %3741 = vmatprep.subr.mxu0 %v3175
    %3742 = vmatpush1.msra.mxu0 %v3174
    %3743 = vmatprep.mubr.f32.mxu0 %v2916
    %3744 = vmatmul.mubr.f32.gmra.mrb[0].mxu0 %v2915
    %v3745 = vpop.f32.mrb[0].mxu0
    %v3746 = vadd.f32 %v3675, %v3745
    %v3747 = vpop.f32.mrb[0].mxu0
    %v3748 = vadd.f32 %v3677, %v3747
    %3749 = vdwg.mxu0
    %3750 = vmatprep.subr.mxu0 %v3179
    %3751 = vmatpush1.msra.mxu0 %v3178
    %3752 = vmatprep.subr.mxu0 %v3183
    %3753 = vmatpush1.msra.mxu0 %v3182
    %3754 = vmatprep.subr.mxu0 %v3187
    %3755 = vmatpush1.msra.mxu0 %v3186
    %3756 = vmatprep.subr.mxu0 %v3191
    %3757 = vmatpush1.msra.mxu0 %v3190
    %3758 = vmatprep.subr.mxu0 %v3195
    %3759 = vmatpush1.msra.mxu0 %v3194
    %3760 = vmatprep.subr.mxu0 %v3199
    %3761 = vmatpush1.msra.mxu0 %v3198
    %3762 = vmatprep.subr.mxu0 %v3203
    %3763 = vmatpush1.msra.mxu0 %v3202
    %3764 = vmatprep.subr.mxu0 %v3207
    %3765 = vmatpush1.msra.mxu0 %v3206
    %3766 = vmatprep.subr.mxu0 %v3211
    %3767 = vmatpush1.msra.mxu0 %v3210
    %3768 = vmatprep.subr.mxu0 %v3215
    %3769 = vmatpush1.msra.mxu0 %v3214
    %3770 = vmatprep.subr.mxu0 %v3219
    %3771 = vmatpush1.msra.mxu0 %v3218
    %3772 = vmatprep.subr.mxu0 %v3223
    %3773 = vmatpush1.msra.mxu0 %v3222
    %3774 = vmatprep.subr.mxu0 %v3227
    %3775 = vmatpush1.msra.mxu0 %v3226
    %3776 = vmatprep.subr.mxu0 %v3231
    %3777 = vmatpush1.msra.mxu0 %v3230
    %3778 = vmatprep.subr.mxu0 %v3235
    %3779 = vmatpush1.msra.mxu0 %v3234
    %3780 = vmatprep.subr.mxu0 %v3239
    %3781 = vmatpush1.msra.mxu0 %v3238
    %3782 = vmatprep.subr.mxu0 %v3243
    %3783 = vmatpush1.msra.mxu0 %v3242
    %3784 = vmatprep.subr.mxu0 %v3247
    %3785 = vmatpush1.msra.mxu0 %v3246
    %3786 = vmatprep.subr.mxu0 %v3251
    %3787 = vmatpush1.msra.mxu0 %v3250
    %3788 = vmatprep.subr.mxu0 %v3255
    %3789 = vmatpush1.msra.mxu0 %v3254
    %3790 = vmatprep.subr.mxu0 %v3259
    %3791 = vmatpush1.msra.mxu0 %v3258
    %3792 = vmatprep.subr.mxu0 %v3263
    %3793 = vmatpush1.msra.mxu0 %v3262
    %3794 = vmatprep.subr.mxu0 %v3267
    %3795 = vmatpush1.msra.mxu0 %v3266
    %3796 = vmatprep.subr.mxu0 %v3271
    %3797 = vmatpush1.msra.mxu0 %v3270
    %3798 = vmatprep.subr.mxu0 %v3275
    %3799 = vmatpush1.msra.mxu0 %v3274
    %3800 = vmatprep.subr.mxu0 %v3279
    %3801 = vmatpush1.msra.mxu0 %v3278
    %3802 = vmatprep.subr.mxu0 %v3283
    %3803 = vmatpush1.msra.mxu0 %v3282
    %3804 = vmatprep.subr.mxu0 %v3287
    %3805 = vmatpush1.msra.mxu0 %v3286
    %3806 = vmatprep.subr.mxu0 %v3291
    %3807 = vmatpush1.msra.mxu0 %v3290
    %3808 = vmatprep.subr.mxu0 %v3295
    %3809 = vmatpush1.msra.mxu0 %v3294
    %3810 = vmatprep.subr.mxu0 %v3299
    %3811 = vmatpush1.msra.mxu0 %v3298
    %3812 = vmatprep.subr.mxu0 %v3303
    %3813 = vmatpush1.msra.mxu0 %v3302
    %3814 = vmatprep.mubr.f32.mxu0 %v2918
    %3815 = vmatmul.mubr.f32.gmra.mrb[0].mxu0 %v2917
    %v3816 = vpop.f32.mrb[0].mxu0
    %v3817 = vadd.f32 %v3746, %v3816
    %v3818 = vpop.f32.mrb[0].mxu0
    %v3819 = vadd.f32 %v3748, %v3818
    %3820 = vdwg.mxu0
    %3821 = vmatprep.subr.mxu0 %v3307
    %3822 = vmatpush1.msra.mxu0 %v3306
    %3823 = vmatprep.subr.mxu0 %v3311
    %3824 = vmatpush1.msra.mxu0 %v3310
    %3825 = vmatprep.subr.mxu0 %v3315
    %3826 = vmatpush1.msra.mxu0 %v3314
    %3827 = vmatprep.subr.mxu0 %v3319
    %3828 = vmatpush1.msra.mxu0 %v3318
    %3829 = vmatprep.subr.mxu0 0.0
    %3830 = vmatpush1.msra.mxu0 0.0
    %3831 = vmatprep.subr.mxu0 0.0
    %3832 = vmatpush1.msra.mxu0 0.0
    %3833 = vmatprep.subr.mxu0 0.0
    %3834 = vmatpush1.msra.mxu0 0.0
    %3835 = vmatprep.subr.mxu0 0.0
    %3836 = vmatpush1.msra.mxu0 0.0
    %3837 = vmatprep.subr.mxu0 0.0
    %3838 = vmatpush1.msra.mxu0 0.0
    %3839 = vmatprep.subr.mxu0 0.0
    %3840 = vmatpush1.msra.mxu0 0.0
    %3841 = vmatprep.subr.mxu0 0.0
    %3842 = vmatpush1.msra.mxu0 0.0
    %3843 = vmatprep.subr.mxu0 0.0
    %3844 = vmatpush1.msra.mxu0 0.0
    %3845 = vmatprep.subr.mxu0 0.0
    %3846 = vmatpush1.msra.mxu0 0.0
    %3847 = vmatprep.subr.mxu0 0.0
    %3848 = vmatpush1.msra.mxu0 0.0
    %3849 = vmatprep.subr.mxu0 0.0
    %3850 = vmatpush1.msra.mxu0 0.0
    %3851 = vmatprep.subr.mxu0 0.0
    %3852 = vmatpush1.msra.mxu0 0.0
    %3853 = vmatprep.subr.mxu0 0.0
    %3854 = vmatpush1.msra.mxu0 0.0
    %3855 = vmatprep.subr.mxu0 0.0
    %3856 = vmatpush1.msra.mxu0 0.0
    %3857 = vmatprep.subr.mxu0 0.0
    %3858 = vmatpush1.msra.mxu0 0.0
    %3859 = vmatprep.subr.mxu0 0.0
    %3860 = vmatpush1.msra.mxu0 0.0
    %3861 = vmatprep.subr.mxu0 0.0
    %3862 = vmatpush1.msra.mxu0 0.0
    %3863 = vmatprep.subr.mxu0 0.0
    %3864 = vmatpush1.msra.mxu0 0.0
    %3865 = vmatprep.subr.mxu0 0.0
    %3866 = vmatpush1.msra.mxu0 0.0
    %3867 = vmatprep.subr.mxu0 0.0
    %3868 = vmatpush1.msra.mxu0 0.0
    %3869 = vmatprep.subr.mxu0 0.0
    %3870 = vmatpush1.msra.mxu0 0.0
    %3871 = vmatprep.subr.mxu0 0.0
    %3872 = vmatpush1.msra.mxu0 0.0
    %3873 = vmatprep.subr.mxu0 0.0
    %3874 = vmatpush1.msra.mxu0 0.0
    %3875 = vmatprep.subr.mxu0 0.0
    %3876 = vmatpush1.msra.mxu0 0.0
    %3877 = vmatprep.subr.mxu0 0.0
    %3878 = vmatpush1.msra.mxu0 0.0
    %3879 = vmatprep.subr.mxu0 0.0
    %3880 = vmatpush1.msra.mxu0 0.0
    %3881 = vmatprep.subr.mxu0 0.0
    %3882 = vmatpush1.msra.mxu0 0.0
    %3883 = vmatprep.subr.mxu0 0.0
    %3884 = vmatpush1.msra.mxu0 0.0
    %3885 = vmatprep.mubr.f32.mxu0 0.0
    %3886 = vmatmul.mubr.f32.gmra.mrb[0].mxu0 %v3322
    %v3887 = vpop.f32.mrb[0].mxu0
    %v3888 = vadd.f32 %v3817, %v3887
    %v3889 = vpop.f32.mrb[0].mxu0
    %v3890 = vadd.f32 %v3819, %v3889
    %3891 = vdwg.mxu0
    %v3892 = vmax.f32 %v3604, 0.0
    %v3893 = vmax.f32 %v3606, 0.0
    %v3894 = vmax.f32 %v3888, 0.0
    %v3895 = vmax.f32 %v3890, 0.0
    %v3896 = vld [vmem:[%s3] sm:$0xff]
    %v3897 = vld [vmem:[%s3 + $0x8] sm:$0xff]
    %v3898 = vld [vmem:[%s3 + $0x10] sm:$0xff]
    %v3899 = vld [vmem:[%s3 + $0x18] sm:$0xff]
    %v3900 = vld [vmem:[%s3 + $0x20] sm:$0xff]
    %v3901 = vld [vmem:[%s3 + $0x28] sm:$0xff]
    %v3902 = vld [vmem:[%s3 + $0x30] sm:$0xff]
    %v3903 = vld [vmem:[%s3 + $0x38] sm:$0xff]
    %v3904 = vld [vmem:[%s3 + $0x40] sm:$0xff]
    %v3905 = vld [vmem:[%s3 + $0x48] sm:$0xff]
    %v3906 = vld [vmem:[%s3 + $0x50] sm:$0xff]
    %v3907 = vld [vmem:[%s3 + $0x58] sm:$0xff]
    %v3908 = vld [vmem:[%s3 + $0x60] sm:$0xff]
    %v3909 = vld [vmem:[%s3 + $0x68] sm:$0xff]
    %v3910 = vld [vmem:[%s3 + $0x70] sm:$0xff]
    %v3911 = vld [vmem:[%s3 + $0x78] sm:$0xff]
    %v3912 = vld [vmem:[%s3 + $0x80] sm:$0xff]
    %v3913 = vld [vmem:[%s3 + $0x88] sm:$0xff]
    %v3914 = vld [vmem:[%s3 + $0x90] sm:$0xff]
    %v3915 = vld [vmem:[%s3 + $0x98] sm:$0xff]
    %v3916 = vld [vmem:[%s3 + $0xa0] sm:$0xff]
    %v3917 = vld [vmem:[%s3 + $0xa8] sm:$0xff]
    %v3918 = vld [vmem:[%s3 + $0xb0] sm:$0xff]
    %v3919 = vld [vmem:[%s3 + $0xb8] sm:$0xff]
    %v3920 = vld [vmem:[%s3 + $0xc0] sm:$0xff]
    %v3921 = vld [vmem:[%s3 + $0xc8] sm:$0xff]
    %v3922 = vld [vmem:[%s3 + $0xd0] sm:$0xff]
    %v3923 = vld [vmem:[%s3 + $0xd8] sm:$0xff]
    %v3924 = vld [vmem:[%s3 + $0xe0] sm:$0xff]
    %v3925 = vld [vmem:[%s3 + $0xe8] sm:$0xff]
    %v3926 = vld [vmem:[%s3 + $0xf0] sm:$0xff]
    %v3927 = vld [vmem:[%s3 + $0xf8] sm:$0xff]
    %v3928 = vld [vmem:[%s3 + $0x100] sm:$0xff]
    %v3929 = vld [vmem:[%s3 + $0x108] sm:$0xff]
    %v3930 = vld [vmem:[%s3 + $0x110] sm:$0xff]
    %v3931 = vld [vmem:[%s3 + $0x118] sm:$0xff]
    %v3932 = vld [vmem:[%s3 + $0x120] sm:$0xff]
    %v3933 = vld [vmem:[%s3 + $0x128] sm:$0xff]
    %v3934 = vld [vmem:[%s3 + $0x130] sm:$0xff]
    %v3935 = vld [vmem:[%s3 + $0x138] sm:$0xff]
    %v3936 = vld [vmem:[%s3 + $0x140] sm:$0xff]
    %v3937 = vld [vmem:[%s3 + $0x148] sm:$0xff]
    %v3938 = vld [vmem:[%s3 + $0x150] sm:$0xff]
    %v3939 = vld [vmem:[%s3 + $0x158] sm:$0xff]
    %v3940 = vld [vmem:[%s3 + $0x160] sm:$0xff]
    %v3941 = vld [vmem:[%s3 + $0x168] sm:$0xff]
    %v3942 = vld [vmem:[%s3 + $0x170] sm:$0xff]
    %v3943 = vld [vmem:[%s3 + $0x178] sm:$0xff]
    %v3944 = vld [vmem:[%s3 + $0x180] sm:$0xff]
    %v3945 = vld [vmem:[%s3 + $0x188] sm:$0xff]
    %v3946 = vld [vmem:[%s3 + $0x190] sm:$0xff]
    %v3947 = vld [vmem:[%s3 + $0x198] sm:$0xff]
    %v3948 = vld [vmem:[%s3 + $0x1a0] sm:$0xff]
    %v3949 = vld [vmem:[%s3 + $0x1a8] sm:$0xff]
    %v3950 = vld [vmem:[%s3 + $0x1b0] sm:$0xff]
    %v3951 = vld [vmem:[%s3 + $0x1b8] sm:$0xff]
    %v3952 = vld [vmem:[%s3 + $0x1c0] sm:$0xff]
    %v3953 = vld [vmem:[%s3 + $0x1c8] sm:$0xff]
    %v3954 = vld [vmem:[%s3 + $0x1d0] sm:$0xff]
    %v3955 = vld [vmem:[%s3 + $0x1d8] sm:$0xff]
    %v3956 = vld [vmem:[%s3 + $0x1e0] sm:$0xff]
    %v3957 = vld [vmem:[%s3 + $0x1e8] sm:$0xff]
    %v3958 = vld [vmem:[%s3 + $0x1f0] sm:$0xff]
    %v3959 = vld [vmem:[%s3 + $0x1f8] sm:$0xff]
    %v3960 = vld [vmem:[%s3 + $0x200] sm:$0xff]
    %v3961 = vld [vmem:[%s3 + $0x208] sm:$0xff]
    %v3962 = vld [vmem:[%s3 + $0x210] sm:$0xff]
    %v3963 = vld [vmem:[%s3 + $0x218] sm:$0xff]
    %v3964 = vld [vmem:[%s3 + $0x220] sm:$0xff]
    %v3965 = vld [vmem:[%s3 + $0x228] sm:$0xff]
    %v3966 = vld [vmem:[%s3 + $0x230] sm:$0xff]
    %v3967 = vld [vmem:[%s3 + $0x238] sm:$0xff]
    %v3968 = vld [vmem:[%s3 + $0x240] sm:$0xff]
    %v3969 = vld [vmem:[%s3 + $0x248] sm:$0xff]
    %v3970 = vld [vmem:[%s3 + $0x250] sm:$0xff]
    %v3971 = vld [vmem:[%s3 + $0x258] sm:$0xff]
    %v3972 = vld [vmem:[%s3 + $0x260] sm:$0xff]
    %v3973 = vld [vmem:[%s3 + $0x268] sm:$0xff]
    %v3974 = vld [vmem:[%s3 + $0x270] sm:$0xff]
    %v3975 = vld [vmem:[%s3 + $0x278] sm:$0xff]
    %v3976 = vld [vmem:[%s3 + $0x280] sm:$0xff]
    %v3977 = vld [vmem:[%s3 + $0x288] sm:$0xff]
    %v3978 = vld [vmem:[%s3 + $0x290] sm:$0xff]
    %v3979 = vld [vmem:[%s3 + $0x298] sm:$0xff]
    %v3980 = vld [vmem:[%s3 + $0x2a0] sm:$0xff]
    %v3981 = vld [vmem:[%s3 + $0x2a8] sm:$0xff]
    %v3982 = vld [vmem:[%s3 + $0x2b0] sm:$0xff]
    %v3983 = vld [vmem:[%s3 + $0x2b8] sm:$0xff]
    %v3984 = vld [vmem:[%s3 + $0x2c0] sm:$0xff]
    %v3985 = vld [vmem:[%s3 + $0x2c8] sm:$0xff]
    %v3986 = vld [vmem:[%s3 + $0x2d0] sm:$0xff]
    %v3987 = vld [vmem:[%s3 + $0x2d8] sm:$0xff]
    %v3988 = vld [vmem:[%s3 + $0x2e0] sm:$0xff]
    %v3989 = vld [vmem:[%s3 + $0x2e8] sm:$0xff]
    %v3990 = vld [vmem:[%s3 + $0x2f0] sm:$0xff]
    %v3991 = vld [vmem:[%s3 + $0x2f8] sm:$0xff]
    %v3992 = vld [vmem:[%s3 + $0x300] sm:$0xff]
    %v3993 = vld [vmem:[%s3 + $0x308] sm:$0xff]
    %v3994 = vld [vmem:[%s3 + $0x310] sm:$0xff]
    %v3995 = vld [vmem:[%s3 + $0x318] sm:$0xff]
    %v3996 = vld [vmem:[%s3 + $0x320] sm:$0xff]
    %v3997 = vld [vmem:[%s3 + $0x328] sm:$0xff]
    %v3998 = vld [vmem:[%s3 + $0x330] sm:$0xff]
    %v3999 = vld [vmem:[%s3 + $0x338] sm:$0xff]
    %v4000 = vld [vmem:[%s3 + $0x340] sm:$0xff]
    %v4001 = vld [vmem:[%s3 + $0x348] sm:$0xff]
    %v4002 = vld [vmem:[%s3 + $0x350] sm:$0xff]
    %v4003 = vld [vmem:[%s3 + $0x358] sm:$0xff]
    %v4004 = vld [vmem:[%s3 + $0x360] sm:$0xff]
    %v4005 = vld [vmem:[%s3 + $0x368] sm:$0xff]
    %v4006 = vld [vmem:[%s3 + $0x370] sm:$0xff]
    %v4007 = vld [vmem:[%s3 + $0x378] sm:$0xff]
    %v4008 = vld [vmem:[%s3 + $0x380] sm:$0xff]
    %v4009 = vld [vmem:[%s3 + $0x388] sm:$0xff]
    %v4010 = vld [vmem:[%s3 + $0x390] sm:$0xff]
    %v4011 = vld [vmem:[%s3 + $0x398] sm:$0xff]
    %v4012 = vld [vmem:[%s3 + $0x3a0] sm:$0xff]
    %v4013 = vld [vmem:[%s3 + $0x3a8] sm:$0xff]
    %v4014 = vld [vmem:[%s3 + $0x3b0] sm:$0xff]
    %v4015 = vld [vmem:[%s3 + $0x3b8] sm:$0xff]
    %v4016 = vld [vmem:[%s3 + $0x3c0] sm:$0xff]
    %v4017 = vld [vmem:[%s3 + $0x3c8] sm:$0xff]
    %v4018 = vld [vmem:[%s3 + $0x3d0] sm:$0xff]
    %v4019 = vld [vmem:[%s3 + $0x3d8] sm:$0xff]
    %v4020 = vld [vmem:[%s3 + $0x3e0] sm:$0xff]
    %v4021 = vld [vmem:[%s3 + $0x3e8] sm:$0xff]
    %v4022 = vld [vmem:[%s3 + $0x3f0] sm:$0xff]
    %v4023 = vld [vmem:[%s3 + $0x3f8] sm:$0xff]
    %4024 = vmatprep.subr.mxu0 %v3897
    %4025 = vmatpush1.msra.mxu0 %v3896
    %4026 = vmatprep.subr.mxu0 %v3899
    %4027 = vmatpush1.msra.mxu0 %v3898
    %4028 = vmatprep.subr.mxu0 %v3901
    %4029 = vmatpush1.msra.mxu0 %v3900
    %4030 = vmatprep.subr.mxu0 %v3903
    %4031 = vmatpush1.msra.mxu0 %v3902
    %4032 = vmatprep.subr.mxu0 %v3905
    %4033 = vmatpush1.msra.mxu0 %v3904
    %4034 = vmatprep.subr.mxu0 %v3907
    %4035 = vmatpush1.msra.mxu0 %v3906
    %4036 = vmatprep.subr.mxu0 %v3909
    %4037 = vmatpush1.msra.mxu0 %v3908
    %4038 = vmatprep.subr.mxu0 %v3911
    %4039 = vmatpush1.msra.mxu0 %v3910
    %4040 = vmatprep.subr.mxu0 %v3913
    %4041 = vmatpush1.msra.mxu0 %v3912
    %4042 = vmatprep.subr.mxu0 %v3915
    %4043 = vmatpush1.msra.mxu0 %v3914
    %4044 = vmatprep.subr.mxu0 %v3917
    %4045 = vmatpush1.msra.mxu0 %v3916
    %4046 = vmatprep.subr.mxu0 %v3919
    %4047 = vmatpush1.msra.mxu0 %v3918
    %4048 = vmatprep.subr.mxu0 %v3921
    %4049 = vmatpush1.msra.mxu0 %v3920
    %4050 = vmatprep.subr.mxu0 %v3923
    %4051 = vmatpush1.msra.mxu0 %v3922
    %4052 = vmatprep.subr.mxu0 %v3925
    %4053 = vmatpush1.msra.mxu0 %v3924
    %4054 = vmatprep.subr.mxu0 %v3927
    %4055 = vmatpush1.msra.mxu0 %v3926
    %4056 = vmatprep.subr.mxu0 %v3929
    %4057 = vmatpush1.msra.mxu0 %v3928
    %4058 = vmatprep.subr.mxu0 %v3931
    %4059 = vmatpush1.msra.mxu0 %v3930
    %4060 = vmatprep.subr.mxu0 %v3933
    %4061 = vmatpush1.msra.mxu0 %v3932
    %4062 = vmatprep.subr.mxu0 %v3935
    %4063 = vmatpush1.msra.mxu0 %v3934
    %4064 = vmatprep.subr.mxu0 %v3937
    %4065 = vmatpush1.msra.mxu0 %v3936
    %4066 = vmatprep.subr.mxu0 %v3939
    %4067 = vmatpush1.msra.mxu0 %v3938
    %4068 = vmatprep.subr.mxu0 %v3941
    %4069 = vmatpush1.msra.mxu0 %v3940
    %4070 = vmatprep.subr.mxu0 %v3943
    %4071 = vmatpush1.msra.mxu0 %v3942
    %4072 = vmatprep.subr.mxu0 %v3945
    %4073 = vmatpush1.msra.mxu0 %v3944
    %4074 = vmatprep.subr.mxu0 %v3947
    %4075 = vmatpush1.msra.mxu0 %v3946
    %4076 = vmatprep.subr.mxu0 %v3949
    %4077 = vmatpush1.msra.mxu0 %v3948
    %4078 = vmatprep.subr.mxu0 %v3951
    %4079 = vmatpush1.msra.mxu0 %v3950
    %4080 = vmatprep.subr.mxu0 %v3953
    %4081 = vmatpush1.msra.mxu0 %v3952
    %4082 = vmatprep.subr.mxu0 %v3955
    %4083 = vmatpush1.msra.mxu0 %v3954
    %4084 = vmatprep.subr.mxu0 %v3957
    %4085 = vmatpush1.msra.mxu0 %v3956
    %4086 = vmatprep.subr.mxu0 %v3959
    %4087 = vmatpush1.msra.mxu0 %v3958
    %4088 = vmatprep.mubr.f32.mxu0 %v3893
    %4089 = vmatmul.mubr.f32.gmra.mrb[0].mxu0 %v3892
    %v4090 = vpop.f32.mrb[0].mxu0
    %v4091 = vadd.f32 0.0, %v4090
    %v4092 = vpop.f32.mrb[0].mxu0
    %v4093 = vadd.f32 0.0, %v4092
    %4094 = vdwg.mxu0
    %4095 = vmatprep.subr.mxu0 %v3961
    %4096 = vmatpush1.msra.mxu0 %v3960
    %4097 = vmatprep.subr.mxu0 %v3963
    %4098 = vmatpush1.msra.mxu0 %v3962
    %4099 = vmatprep.subr.mxu0 %v3965
    %4100 = vmatpush1.msra.mxu0 %v3964
    %4101 = vmatprep.subr.mxu0 %v3967
    %4102 = vmatpush1.msra.mxu0 %v3966
    %4103 = vmatprep.subr.mxu0 %v3969
    %4104 = vmatpush1.msra.mxu0 %v3968
    %4105 = vmatprep.subr.mxu0 %v3971
    %4106 = vmatpush1.msra.mxu0 %v3970
    %4107 = vmatprep.subr.mxu0 %v3973
    %4108 = vmatpush1.msra.mxu0 %v3972
    %4109 = vmatprep.subr.mxu0 %v3975
    %4110 = vmatpush1.msra.mxu0 %v3974
    %4111 = vmatprep.subr.mxu0 %v3977
    %4112 = vmatpush1.msra.mxu0 %v3976
    %4113 = vmatprep.subr.mxu0 %v3979
    %4114 = vmatpush1.msra.mxu0 %v3978
    %4115 = vmatprep.subr.mxu0 %v3981
    %4116 = vmatpush1.msra.mxu0 %v3980
    %4117 = vmatprep.subr.mxu0 %v3983
    %4118 = vmatpush1.msra.mxu0 %v3982
    %4119 = vmatprep.subr.mxu0 %v3985
    %4120 = vmatpush1.msra.mxu0 %v3984
    %4121 = vmatprep.subr.mxu0 %v3987
    %4122 = vmatpush1.msra.mxu0 %v3986
    %4123 = vmatprep.subr.mxu0 %v3989
    %4124 = vmatpush1.msra.mxu0 %v3988
    %4125 = vmatprep.subr.mxu0 %v3991
    %4126 = vmatpush1.msra.mxu0 %v3990
    %4127 = vmatprep.subr.mxu0 %v3993
    %4128 = vmatpush1.msra.mxu0 %v3992
    %4129 = vmatprep.subr.mxu0 %v3995
    %4130 = vmatpush1.msra.mxu0 %v3994
    %4131 = vmatprep.subr.mxu0 %v3997
    %4132 = vmatpush1.msra.mxu0 %v3996
    %4133 = vmatprep.subr.mxu0 %v3999
    %4134 = vmatpush1.msra.mxu0 %v3998
    %4135 = vmatprep.subr.mxu0 %v4001
    %4136 = vmatpush1.msra.mxu0 %v4000
    %4137 = vmatprep.subr.mxu0 %v4003
    %4138 = vmatpush1.msra.mxu0 %v4002
    %4139 = vmatprep.subr.mxu0 %v4005
    %4140 = vmatpush1.msra.mxu0 %v4004
    %4141 = vmatprep.subr.mxu0 %v4007
    %4142 = vmatpush1.msra.mxu0 %v4006
    %4143 = vmatprep.subr.mxu0 %v4009
    %4144 = vmatpush1.msra.mxu0 %v4008
    %4145 = vmatprep.subr.mxu0 %v4011
    %4146 = vmatpush1.msra.mxu0 %v4010
    %4147 = vmatprep.subr.mxu0 %v4013
    %4148 = vmatpush1.msra.mxu0 %v4012
    %4149 = vmatprep.subr.mxu0 %v4015
    %4150 = vmatpush1.msra.mxu0 %v4014
    %4151 = vmatprep.subr.mxu0 %v4017
    %4152 = vmatpush1.msra.mxu0 %v4016
    %4153 = vmatprep.subr.mxu0 %v4019
    %4154 = vmatpush1.msra.mxu0 %v4018
    %4155 = vmatprep.subr.mxu0 %v4021
    %4156 = vmatpush1.msra.mxu0 %v4020
    %4157 = vmatprep.subr.mxu0 %v4023
    %4158 = vmatpush1.msra.mxu0 %v4022
    %4159 = vmatprep.mubr.f32.mxu0 %v3895
    %4160 = vmatmul.mubr.f32.gmra.mrb[0].mxu0 %v3894
    %v4161 = vpop.f32.mrb[0].mxu0
    %v4162 = vadd.f32 %v4091, %v4161
    %v4163 = vpop.f32.mrb[0].mxu0
    %v4164 = vadd.f32 %v4093, %v4163
    %4165 = vdwg.mxu0
    %v4166 = vmax.f32 %v4162, 0.0
    %v4167 = vmax.f32 %v4164, 0.0
    %v4168 = vld [vmem:[%s4] sm:$0xff]
    %v4169 = vld [vmem:[%s4 + $0x8] sm:$0xff]
    %v4170 = vld [vmem:[%s4 + $0x10] sm:$0xff]
    %v4171 = vld [vmem:[%s4 + $0x18] sm:$0xff]
    %v4172 = vld [vmem:[%s4 + $0x20] sm:$0xff]
    %v4173 = vld [vmem:[%s4 + $0x28] sm:$0xff]
    %v4174 = vld [vmem:[%s4 + $0x30] sm:$0xff]
    %v4175 = vld [vmem:[%s4 + $0x38] sm:$0xff]
    %v4176 = vld [vmem:[%s4 + $0x40] sm:$0xff]
    %v4177 = vld [vmem:[%s4 + $0x48] sm:$0xff]
    %v4178 = vld [vmem:[%s4 + $0x50] sm:$0xff]
    %v4179 = vld [vmem:[%s4 + $0x58] sm:$0xff]
    %v4180 = vld [vmem:[%s4 + $0x60] sm:$0xff]
    %v4181 = vld [vmem:[%s4 + $0x68] sm:$0xff]
    %v4182 = vld [vmem:[%s4 + $0x70] sm:$0xff]
    %v4183 = vld [vmem:[%s4 + $0x78] sm:$0xff]
    %v4184 = vld [vmem:[%s4 + $0x80] sm:$0xff]
    %v4185 = vld [vmem:[%s4 + $0x88] sm:$0xff]
    %v4186 = vld [vmem:[%s4 + $0x90] sm:$0xff]
    %v4187 = vld [vmem:[%s4 + $0x98] sm:$0xff]
    %v4188 = vld [vmem:[%s4 + $0xa0] sm:$0xff]
    %v4189 = vld [vmem:[%s4 + $0xa8] sm:$0xff]
    %v4190 = vld [vmem:[%s4 + $0xb0] sm:$0xff]
    %v4191 = vld [vmem:[%s4 + $0xb8] sm:$0xff]
    %v4192 = vld [vmem:[%s4 + $0xc0] sm:$0xff]
    %v4193 = vld [vmem:[%s4 + $0xc8] sm:$0xff]
    %v4194 = vld [vmem:[%s4 + $0xd0] sm:$0xff]
    %v4195 = vld [vmem:[%s4 + $0xd8] sm:$0xff]
    %v4196 = vld [vmem:[%s4 + $0xe0] sm:$0xff]
    %v4197 = vld [vmem:[%s4 + $0xe8] sm:$0xff]
    %v4198 = vld [vmem:[%s4 + $0xf0] sm:$0xff]
    %v4199 = vld [vmem:[%s4 + $0xf8] sm:$0xff]
    %4200 = vmatprep.subr.mxu0 0.0
    %4201 = vmatpush1.msra.mxu0 %v4168
    %4202 = vmatprep.subr.mxu0 0.0
    %4203 = vmatpush1.msra.mxu0 %v4169
    %4204 = vmatprep.subr.mxu0 0.0
    %4205 = vmatpush1.msra.mxu0 %v4170
    %4206 = vmatprep.subr.mxu0 0.0
    %4207 = vmatpush1.msra.mxu0 %v4171
    %4208 = vmatprep.subr.mxu0 0.0
    %4209 = vmatpush1.msra.mxu0 %v4172
    %4210 = vmatprep.subr.mxu0 0.0
    %4211 = vmatpush1.msra.mxu0 %v4173
    %4212 = vmatprep.subr.mxu0 0.0
    %4213 = vmatpush1.msra.mxu0 %v4174
    %4214 = vmatprep.subr.mxu0 0.0
    %4215 = vmatpush1.msra.mxu0 %v4175
    %4216 = vmatprep.subr.mxu0 0.0
    %4217 = vmatpush1.msra.mxu0 %v4176
    %4218 = vmatprep.subr.mxu0 0.0
    %4219 = vmatpush1.msra.mxu0 %v4177
    %4220 = vmatprep.subr.mxu0 0.0
    %4221 = vmatpush1.msra.mxu0 %v4178
    %4222 = vmatprep.subr.mxu0 0.0
    %4223 = vmatpush1.msra.mxu0 %v4179
    %4224 = vmatprep.subr.mxu0 0.0
    %4225 = vmatpush1.msra.mxu0 %v4180
    %4226 = vmatprep.subr.mxu0 0.0
    %4227 = vmatpush1.msra.mxu0 %v4181
    %4228 = vmatprep.subr.mxu0 0.0
    %4229 = vmatpush1.msra.mxu0 %v4182
    %4230 = vmatprep.subr.mxu0 0.0
    %4231 = vmatpush1.msra.mxu0 %v4183
    %4232 = vmatprep.subr.mxu0 0.0
    %4233 = vmatpush1.msra.mxu0 %v4184
    %4234 = vmatprep.subr.mxu0 0.0
    %4235 = vmatpush1.msra.mxu0 %v4185
    %4236 = vmatprep.subr.mxu0 0.0
    %4237 = vmatpush1.msra.mxu0 %v4186
    %4238 = vmatprep.subr.mxu0 0.0
    %4239 = vmatpush1.msra.mxu0 %v4187
    %4240 = vmatprep.subr.mxu0 0.0
    %4241 = vmatpush1.msra.mxu0 %v4188
    %4242 = vmatprep.subr.mxu0 0.0
    %4243 = vmatpush1.msra.mxu0 %v4189
    %4244 = vmatprep.subr.mxu0 0.0
    %4245 = vmatpush1.msra.mxu0 %v4190
    %4246 = vmatprep.subr.mxu0 0.0
    %4247 = vmatpush1.msra.mxu0 %v4191
    %4248 = vmatprep.subr.mxu0 0.0
    %4249 = vmatpush1.msra.mxu0 %v4192
    %4250 = vmatprep.subr.mxu0 0.0
    %4251 = vmatpush1.msra.mxu0 %v4193
    %4252 = vmatprep.subr.mxu0 0.0
    %4253 = vmatpush1.msra.mxu0 %v4194
    %4254 = vmatprep.subr.mxu0 0.0
    %4255 = vmatpush1.msra.mxu0 %v4195
    %4256 = vmatprep.subr.mxu0 0.0
    %4257 = vmatpush1.msra.mxu0 %v4196
    %4258 = vmatprep.subr.mxu0 0.0
    %4259 = vmatpush1.msra.mxu0 %v4197
    %4260 = vmatprep.subr.mxu0 0.0
    %4261 = vmatpush1.msra.mxu0 %v4198
    %4262 = vmatprep.subr.mxu0 0.0
    %4263 = vmatpush1.msra.mxu0 %v4199
    %4264 = vmatprep.mubr.f32.mxu0 %v4167
    %4265 = vmatmul.mubr.f32.gmra.mrb[0].mxu0 %v4166
    %v4266 = vpop.f32.mrb[0].mxu0
    %v4267 = vadd.f32 0.0, %v4266
    %v4268 = vpop.f32.mrb[0].mxu0
    %4269 = vdwg.mxu0
    %v4270 = vmax.f32 %v4267, 0.0
    %v4271 = vld [vmem:[%s5] sm:$0xff]
    %v4272 = vld [vmem:[%s5 + $0x8] sm:$0xff]
    %v4273 = vld [vmem:[%s5 + $0x10] sm:$0xff]
    %v4274 = vld [vmem:[%s5 + $0x18] sm:$0xff]
    %v4275 = vld [vmem:[%s5 + $0x20] sm:$0xff]
    %v4276 = vld [vmem:[%s5 + $0x28] sm:$0xff]
    %v4277 = vld [vmem:[%s5 + $0x30] sm:$0xff]
    %v4278 = vld [vmem:[%s5 + $0x38] sm:$0xff]
    %v4280 = vsel %vm1211, %v4270, 0
    %4282 = vmatprep.subr.mxu0 0.0
    %4283 = vmatpush1.msra.mxu0 %v4271
    %4284 = vmatprep.subr.mxu0 0.0
    %4285 = vmatpush1.msra.mxu0 %v4272
    %4286 = vmatprep.subr.mxu0 0.0
    %4287 = vmatpush1.msra.mxu0 %v4273
    %4288 = vmatprep.subr.mxu0 0.0
    %4289 = vmatpush1.msra.mxu0 %v4274
    %4290 = vmatprep.subr.mxu0 0.0
    %4291 = vmatpush1.msra.mxu0 %v4275
    %4292 = vmatprep.subr.mxu0 0.0
    %4293 = vmatpush1.msra.mxu0 %v4276
    %4294 = vmatprep.subr.mxu0 0.0
    %4295 = vmatpush1.msra.mxu0 %v4277
    %4296 = vmatprep.subr.mxu0 0.0
    %4297 = vmatpush1.msra.mxu0 %v4278
    %4298 = vmatprep.subr.mxu0 0.0
    %4299 = vmatpush1.msra.mxu0 0.0
    %4300 = vmatprep.subr.mxu0 0.0
    %4301 = vmatpush1.msra.mxu0 0.0
    %4302 = vmatprep.subr.mxu0 0.0
    %4303 = vmatpush1.msra.mxu0 0.0
    %4304 = vmatprep.subr.mxu0 0.0
    %4305 = vmatpush1.msra.mxu0 0.0
    %4306 = vmatprep.subr.mxu0 0.0
    %4307 = vmatpush1.msra.mxu0 0.0
    %4308 = vmatprep.subr.mxu0 0.0
    %4309 = vmatpush1.msra.mxu0 0.0
    %4310 = vmatprep.subr.mxu0 0.0
    %4311 = vmatpush1.msra.mxu0 0.0
    %4312 = vmatprep.subr.mxu0 0.0
    %4313 = vmatpush1.msra.mxu0 0.0
    %4314 = vmatprep.subr.mxu0 0.0
    %4315 = vmatpush1.msra.mxu0 0.0
    %4316 = vmatprep.subr.mxu0 0.0
    %4317 = vmatpush1.msra.mxu0 0.0
    %4318 = vmatprep.subr.mxu0 0.0
    %4319 = vmatpush1.msra.mxu0 0.0
    %4320 = vmatprep.subr.mxu0 0.0
    %4321 = vmatpush1.msra.mxu0 0.0
    %4322 = vmatprep.subr.mxu0 0.0
    %4323 = vmatpush1.msra.mxu0 0.0
    %4324 = vmatprep.subr.mxu0 0.0
    %4325 = vmatpush1.msra.mxu0 0.0
    %4326 = vmatprep.subr.mxu0 0.0
    %4327 = vmatpush1.msra.mxu0 0.0
    %4328 = vmatprep.subr.mxu0 0.0
    %4329 = vmatpush1.msra.mxu0 0.0
    %4330 = vmatprep.subr.mxu0 0.0
    %4331 = vmatpush1.msra.mxu0 0.0
    %4332 = vmatprep.subr.mxu0 0.0
    %4333 = vmatpush1.msra.mxu0 0.0
    %4334 = vmatprep.subr.mxu0 0.0
    %4335 = vmatpush1.msra.mxu0 0.0
    %4336 = vmatprep.subr.mxu0 0.0
    %4337 = vmatpush1.msra.mxu0 0.0
    %4338 = vmatprep.subr.mxu0 0.0
    %4339 = vmatpush1.msra.mxu0 0.0
    %4340 = vmatprep.subr.mxu0 0.0
    %4341 = vmatpush1.msra.mxu0 0.0
    %4342 = vmatprep.subr.mxu0 0.0
    %4343 = vmatpush1.msra.mxu0 0.0
    %4344 = vmatprep.subr.mxu0 0.0
    %4345 = vmatpush1.msra.mxu0 0.0
    %4346 = vmatprep.mubr.f32.mxu0 0.0
    %4347 = vmatmul.mubr.f32.gmra.mrb[0].mxu0 %v4280
    %v4348 = vpop.f32.mrb[0].mxu0
    %v4349 = vadd.f32 0.0, %v4348
    %v4350 = vpop.f32.mrb[0].mxu0
    %4351 = vdwg.mxu0
    %v4352 = vmax.f32 %v4349, 0.0
    %vm4353 = vcmask 80896
    %v4354 = vsel %vm4353, %v4352, -inf
    %4355 = vmax.xlane.f32.xlu0 %v4354
    %v4356 = vpop.xlane.xlu0 %4355
    %v4357 = vsub.f32 %v4352, %v4356
    %v4358 = vmul.f32 %v4357, 1.442695
    %v4359 = vpow.pop %v4358
    %v4360 = vsel %vm4353, %v4359, 0.0
    %4361 = vadd.xlane.f32.xlu0 %v4360
    %v4362 = vpop.xlane.xlu0 %4361
    %v4363 = vlog2.pop %v4362
    %v4364 = vmul.f32 %v4363, 0.6931472
    %v4365 = vsub.f32 %v4357, %v4364
    %4366 = vst.msk [vmem:[#allocation2] sm:$0xff] %vm4353, %v4365
    // Predicated region
    $region26: #{large_forward.1} parent=1 // pred_check
      _
    $region27: #{large_forward.1} parent=1 // pred_check_branch
      %4368 = sbr.rel (0) target = $region29
    $region28: #{large_forward.1} parent=1 // pred_region
      %s4370 = ssub.s32 128, 128
      %4371 = vsyncadd [#allocation3], %s4370
      %s4373 = sshll.u32 [#allocation2], 4
      %s4374 = int_to_ptr.vmem [resolvable:$true] %s4373
      %4376 = dma.vmem_to_hbm [thread:$0]  %s4374, 128, %s6, [#allocation3]
    $region29: #{large_forward.1} parent=1 // pred_fallthru
      _
    // Predicated region
    $region30: #{large_forward.1} parent=1 // pred_check
      _
    $region31: #{large_forward.1} parent=1 // pred_check_branch
      %4378 = sbr.rel (0) target = $region33
    $region32: #{large_forward.1} parent=1 // pred_region
      %4379 = dma.done [#allocation3], 128
    $region33: #{large_forward.1} parent=1 // pred_fallthru
      _
    %4380 = vsyncpa [#allocation3], 1

</llo_original>
